<compile_context>
chip_gen: v7x
topology: tpu7x:2x2x1
jax: 0.10.0
libtpu: 0.0.40
codegen_flags: <defaults>
</compile_context>

<pallas_src>
import jax
import jax.numpy as jnp
import numpy as np
from jax.experimental import pallas as pl

SELU_ALPHA = 1.6732632423543772
SELU_SCALE = 1.0507009873554805
BN_EPS = 1e-5


def _selu(x):
    neg = SELU_ALPHA * (jnp.exp(jnp.minimum(x, 0.0)) - 1.0)
    return SELU_SCALE * jnp.where(x > 0, x, neg)


# ----------------------------------------------------------------------------
# Fused kernel: the whole forward pass in one invocation (no grid).
# Inputs: x2d, then (sel, w_taps, bias) triples for
#   [initial, (conv1, conv2, downsample) * n_blocks, embedding], then fc_w, fc_b.
# Outputs: log_probs, embedding.
# ----------------------------------------------------------------------------
def _make_fused_kernel(n_blocks):
    n_tap_layers = 1 + 3 * n_blocks + 1   # initial + 3 per block + embedding

    def kernel(*refs):
        assert len(refs) == 1 + 3 * n_tap_layers + 2 + 2
        x_ref = refs[0]
        tap_refs = refs[1:1 + 3 * n_tap_layers]
        fcw_ref = refs[1 + 3 * n_tap_layers]
        fcb_ref = refs[2 + 3 * n_tap_layers]
        logp_ref = refs[3 + 3 * n_tap_layers]
        emb_ref = refs[4 + 3 * n_tap_layers]

        def tap_layer(x, li, activate, residual=None):
            sel_ref, w_ref, b_ref = tap_refs[3 * li:3 * li + 3]
            ktaps = sel_ref.shape[0]
            acc = None
            for k in range(ktaps):         # static unroll, <= 4 taps
                # (N*Ho, N*Hin) @ (N*Hin, Win*Cin) -> row selection (stride/pad folded)
                rows = jnp.dot(sel_ref[k], x, preferred_element_type=jnp.float32)
                # (N*Ho, Win*Cin) @ (Win*Cin, Wo*Cout) -> conv tap (BN scale folded)
                t = jnp.dot(rows, w_ref[k], preferred_element_type=jnp.float32)
                acc = t if acc is None else acc + t
            y = acc + b_ref[...]           # folded BN bias (+ conv bias)
            if residual is not None:
                y = y + residual
            return _selu(y) if activate else y

        act = tap_layer(x_ref[...], 0, True)                   # initial conv+BN+SELU
        li = 1
        for _ in range(n_blocks):
            y = tap_layer(act, li, True)                       # conv1 (stride s)
            y = tap_layer(y, li + 1, True)                     # conv2 (stride 1)
            act = tap_layer(act, li + 2, True, residual=y)     # down + add + SELU
            li += 3
        emb = tap_layer(act, li, False)                        # NCHW flatten + Linear

        logits = jnp.dot(emb, fcw_ref[...],
                         preferred_element_type=jnp.float32) + fcb_ref[...]
        m = jnp.max(logits, axis=-1, keepdims=True)
        lse = jnp.log(jnp.sum(jnp.exp(logits - m), axis=-1, keepdims=True)) + m
        logp_ref[...] = (logits - lse).astype(logp_ref.dtype)
        emb_ref[...] = emb.astype(emb_ref.dtype)

    return kernel


# ----------------------------------------------------------------------------
# Host-side folding of Conv+BN / flatten+Linear into (Sel, W_taps, bias) form.
# ----------------------------------------------------------------------------
def _pack_conv(p, *, N, H_in, K, stride, pad):
    """One Conv+BN (inference) -> K-tap matmul operands on the (N*H, W*C) layout."""
    w = np.asarray(p["w"], np.float32)                 # (K, K, Cin, Cout) HWIO
    scale = np.asarray(p["scale"], np.float32)         # (Cout,)
    bias = np.asarray(p["bias"], np.float32)           # (Cout,)
    Cin, Cout = w.shape[2], w.shape[3]
    W_in = H_in                                        # square feature maps
    Ho = (H_in + 2 * pad - K) // stride + 1
    Wo = Ho
    w = w * scale[None, None, None, :]                 # fold BN scale into weights

    sel = np.zeros((K, N * Ho, N * H_in), np.float32)
    wt = np.zeros((K, W_in * Cin, Wo * Cout), np.float32)
    for ky in range(K):
        for i in range(Ho):
            r = i * stride + ky - pad                  # input row (row pad folded)
            if 0 <= r < H_in:
                for n in range(N):
                    sel[ky, n * Ho + i, n * H_in + r] = 1.0
        for kx in range(K):
            for j in range(Wo):
                c = j * stride + kx - pad              # input col (col pad folded)
                if 0 <= c < W_in:
                    wt[ky, c * Cin:(c + 1) * Cin, j * Cout:(j + 1) * Cout] = w[ky, kx]
    bias_row = np.tile(bias.reshape(1, Cout), (1, Wo))  # (1, Wo*Cout)
    return [jnp.asarray(sel), jnp.asarray(wt), jnp.asarray(bias_row)], Ho, Cout


def _pack_embedding(emb_w, emb_b, *, N, Ho, C):
    """Fold torch's NCHW-order flatten + embedding Linear into the tap pattern."""
    ew = np.asarray(emb_w, np.float32)                 # (C*Ho*Wo, E), NCHW flat order
    E = ew.shape[1]
    Wo = Ho
    assert ew.shape[0] == C * Ho * Wo, "embedding in_features mismatch with conv output"
    # wt[h, w*C + c, :] = ew[c*Ho*Wo + h*Wo + w, :]
    wt = ew.reshape(C, Ho, Wo, E).transpose(1, 2, 0, 3).reshape(Ho, Wo * C, E)
    sel = np.zeros((Ho, N, N * Ho), np.float32)
    for h in range(Ho):
        for n in range(N):
            sel[h, n, n * Ho + h] = 1.0
    bias_row = np.asarray(emb_b, np.float32).reshape(1, E)
    return [jnp.asarray(sel), jnp.asarray(np.ascontiguousarray(wt)), jnp.asarray(bias_row)]


def _pack_operands(params, *, N, img_h, in_features):
    ops = []
    tri, H, C = _pack_conv(params["initial"], N=N, H_in=img_h, K=3, stride=1, pad=1)
    ops += tri
    for blk in params["blocks"]:
        k, s, p = blk["kernel"], blk["stride"], blk["pad"]
        tri, H1, C1 = _pack_conv(blk["conv1"], N=N, H_in=H, K=k, stride=s, pad=p)
        ops += tri
        tri, H2, C2 = _pack_conv(blk["conv2"], N=N, H_in=H1, K=k, stride=1, pad=p)
        ops += tri
        tri, Hd, Cd = _pack_conv(blk["down"], N=N, H_in=H, K=1, stride=s, pad=0)
        ops += tri
        assert (H2, C2) == (Hd, Cd), "residual / downsample shape mismatch"
        H, C = H2, C2
    ops += _pack_embedding(params["emb_w"], params["emb_b"], N=N, Ho=H, C=C)
    ops += [jnp.asarray(params["fc_w"], jnp.float32),
            jnp.asarray(params["fc_b"], jnp.float32).reshape(1, -1)]
    return ops


# ----------------------------------------------------------------------------
# Parameters (deterministic, synthetic). BN running stats + conv bias folded.
# ----------------------------------------------------------------------------
def _conv_bn_params(key, K, Cin, Cout):
    kw, kb, kg, kbe, km, kv = jax.random.split(key, 6)
    w = jax.random.normal(kw, (K, K, Cin, Cout), jnp.float32) / np.sqrt(K * K * Cin)
    conv_b = 0.1 * jax.random.normal(kb, (Cout,), jnp.float32)
    gamma = 1.0 + 0.1 * jax.random.normal(kg, (Cout,), jnp.float32)
    beta = 0.1 * jax.random.normal(kbe, (Cout,), jnp.float32)
    rmean = 0.1 * jax.random.normal(km, (Cout,), jnp.float32)
    rvar = 1.0 + 0.1 * jax.random.uniform(kv, (Cout,), jnp.float32)
    scale = gamma / jnp.sqrt(rvar + BN_EPS)
    bias = beta + (conv_b - rmean) * scale
    return {"w": w, "scale": scale, "bias": bias}


def init_params(key, in_features=4, initial_channels=8, blocks=(1, 1),
                strides=(2, 2), padding=(1, 1), kernels=(3, 3),
                embedding_dim=32, num_classes=6, img_h=16):
    # torch's reshaped_dim uses round(); require exact divisibility so it cannot mismatch.
    assert img_h % (2 ** len(blocks)) == 0, "img_h must be divisible by total stride"
    keys = iter(jax.random.split(key, 2 + 3 * len(blocks)))
    params = {"initial": _conv_bn_params(next(keys), 3, in_features, initial_channels)}
    ch = initial_channels
    blks = []
    for b, s, p, k in zip(blocks, strides, padding, kernels):
        assert b == 1  # TODO(synk): repeated (identity-residual) blocks per layer not wired up
        blks.append({
            "conv1": _conv_bn_params(next(keys), k, ch, ch * 2),
            "conv2": _conv_bn_params(next(keys), k, ch * 2, ch * 2),
            "down": _conv_bn_params(next(keys), 1, ch, ch * 2),
            "stride": s, "pad": p, "kernel": k,
        })
        ch *= 2
    params["blocks"] = blks
    reshaped_dim = round(float(img_h) / 2 ** len(blocks)) ** 2 * (initial_channels * 2 ** len(blocks))
    k1, k2, k3, k4 = jax.random.split(next(keys), 4)
    # Linear weights stored transposed (in, out) vs torch's (out, in); emb_w rows follow
    # torch's NCHW flatten index order (c*H*W + h*W + w).
    params["emb_w"] = jax.random.normal(k1, (reshaped_dim, embedding_dim), jnp.float32) / np.sqrt(reshaped_dim)
    params["emb_b"] = 0.1 * jax.random.normal(k2, (embedding_dim,), jnp.float32)
    params["fc_w"] = jax.random.normal(k3, (embedding_dim, num_classes), jnp.float32) / np.sqrt(embedding_dim)
    params["fc_b"] = 0.1 * jax.random.normal(k4, (num_classes,), jnp.float32)
    return params


# ----------------------------------------------------------------------------
# Forward-pass builder (packs operands once, jits the single pallas_call).
# ----------------------------------------------------------------------------
def make_forward(params, *, batch, img_h, in_features):
    operands = _pack_operands(params, N=batch, img_h=img_h, in_features=in_features)
    kernel = _make_fused_kernel(len(params["blocks"]))
    num_classes = params["fc_w"].shape[1]
    emb_dim = params["emb_w"].shape[1]
    out_shape = (jax.ShapeDtypeStruct((batch, num_classes), jnp.float32),
                 jax.ShapeDtypeStruct((batch, emb_dim), jnp.float32))

    @jax.jit
    def fwd(imgs_nchw):
        N, C, H, W = imgs_nchw.shape
        # NCHW -> batch-stacked 2-D layout (N*H, W*C); channels on the lane axis.
        x2d = jnp.transpose(imgs_nchw, (0, 2, 3, 1)).reshape(N * H, W * C)
        return pl.pallas_call(kernel, out_shape=out_shape)(x2d, *operands)

    return fwd


# ----------------------------------------------------------------------------
# Pure-JAX (XLA) reference of the same forward pass, for validation.
# ----------------------------------------------------------------------------
def reference_forward(params, imgs_nchw):
    x = jnp.transpose(imgs_nchw, (0, 2, 3, 1))        # NCHW -> NHWC

    def conv_bn(x, p, stride, pad, activate):
        y = jax.lax.conv_general_dilated(
            x, p["w"], window_strides=(stride, stride),
            padding=[(pad, pad), (pad, pad)],
            dimension_numbers=("NHWC", "HWIO", "NHWC"),
            precision=jax.lax.Precision.HIGHEST)
        y = y * p["scale"].reshape(1, 1, 1, -1) + p["bias"].reshape(1, 1, 1, -1)
        return _selu(y) if activate else y

    out = conv_bn(x, params["initial"], 1, 1, True)
    for blk in params["blocks"]:
        y = conv_bn(out, blk["conv1"], blk["stride"], blk["pad"], True)
        y = conv_bn(y, blk["conv2"], 1, blk["pad"], True)
        d = conv_bn(out, blk["down"], blk["stride"], 0, False)
        out = _selu(d + y)
    N = out.shape[0]
    flat = jnp.transpose(out, (0, 3, 1, 2)).reshape(N, -1)   # NCHW-order flatten
    emb = flat @ params["emb_w"] + params["emb_b"].reshape(1, -1)
    logits = emb @ params["fc_w"] + params["fc_b"].reshape(1, -1)
    return jax.nn.log_softmax(logits, axis=1), emb


if __name__ == "__main__":
    key = jax.random.PRNGKey(0)
    pkey, xkey = jax.random.split(key)
    # Small config consistent with the module: in_features=4, initial_channels=8,
    # blocks=[1,1], strides=[2,2], img_h=16, embedding_dim=32, num_classes=6.
    params = init_params(pkey)
    x = jax.random.normal(xkey, (2, 4, 16, 16), jnp.float32)   # NCHW input

    fwd = make_forward(params, batch=2, img_h=16, in_features=4)
    log_probs, embedding = fwd(x)
    jax.block_until_ready((log_probs, embedding))

    assert log_probs.shape == (2, 6) and embedding.shape == (2, 32)
    assert bool(jnp.allclose(jnp.exp(log_probs).sum(axis=1), 1.0, atol=1e-4))

    # Cross-check against the pure-JAX reference (loose tolerance: matmul
    # precision differs between the MXU paths and the XLA reference).
    logp_ref, emb_ref = reference_forward(params, x)
    assert bool(jnp.allclose(embedding, emb_ref, atol=5e-2, rtol=5e-2)), "embedding mismatch"
    assert bool(jnp.allclose(jnp.exp(log_probs), jnp.exp(logp_ref), atol=2e-2)), "log_softmax mismatch"

    print("KERNEL_OK")
</pallas_src>

<mosaic_0001>
module attributes {stable_mosaic.version = 11 : i64} {
  func.func @kernel(%arg0: memref<32x64xf32, #tpu.memory_space<vmem>>, %arg1: memref<3x32x32xf32, #tpu.memory_space<vmem>>, %arg2: memref<3x64x128xf32, #tpu.memory_space<vmem>>, %arg3: memref<1x128xf32, #tpu.memory_space<vmem>>, %arg4: memref<3x16x32xf32, #tpu.memory_space<vmem>>, %arg5: memref<3x128x128xf32, #tpu.memory_space<vmem>>, %arg6: memref<1x128xf32, #tpu.memory_space<vmem>>, %arg7: memref<3x16x16xf32, #tpu.memory_space<vmem>>, %arg8: memref<3x128x128xf32, #tpu.memory_space<vmem>>, %arg9: memref<1x128xf32, #tpu.memory_space<vmem>>, %arg10: memref<1x16x32xf32, #tpu.memory_space<vmem>>, %arg11: memref<1x128x128xf32, #tpu.memory_space<vmem>>, %arg12: memref<1x128xf32, #tpu.memory_space<vmem>>, %arg13: memref<3x8x16xf32, #tpu.memory_space<vmem>>, %arg14: memref<3x128x128xf32, #tpu.memory_space<vmem>>, %arg15: memref<1x128xf32, #tpu.memory_space<vmem>>, %arg16: memref<3x8x8xf32, #tpu.memory_space<vmem>>, %arg17: memref<3x128x128xf32, #tpu.memory_space<vmem>>, %arg18: memref<1x128xf32, #tpu.memory_space<vmem>>, %arg19: memref<1x8x16xf32, #tpu.memory_space<vmem>>, %arg20: memref<1x128x128xf32, #tpu.memory_space<vmem>>, %arg21: memref<1x128xf32, #tpu.memory_space<vmem>>, %arg22: memref<4x2x8xf32, #tpu.memory_space<vmem>>, %arg23: memref<4x128x32xf32, #tpu.memory_space<vmem>>, %arg24: memref<1x32xf32, #tpu.memory_space<vmem>>, %arg25: memref<32x6xf32, #tpu.memory_space<vmem>>, %arg26: memref<1x6xf32, #tpu.memory_space<vmem>>, %arg27: memref<2x6xf32, #tpu.memory_space<vmem>>, %arg28: memref<2x32xf32, #tpu.memory_space<vmem>>) attributes {dimension_semantics = [], scalar_prefetch = 0 : i64, scratch_operands = 0 : i64, tpu.core_type = #tpu.core_type<tc>} {
    %c0 = arith.constant 0 : index
    %c0_0 = arith.constant 0 : index
    %0 = vector.load %arg0[%c0, %c0_0] : memref<32x64xf32, #tpu.memory_space<vmem>>, vector<32x64xf32>
    %c0_1 = arith.constant 0 : index
    %c0_2 = arith.constant 0 : index
    %c0_3 = arith.constant 0 : index
    %1 = vector.load %arg1[%c0_1, %c0_2, %c0_3] : memref<3x32x32xf32, #tpu.memory_space<vmem>>, vector<1x32x32xf32>
    %2 = vector.shape_cast %1 : vector<1x32x32xf32> to vector<32x32xf32>
    %cst = arith.constant dense<0.000000e+00> : vector<32x64xf32>
    %3 = tpu.matmul %2, %0, %cst {dimension_numbers = #tpu.dot_dimension_numbers<[1], [0], [0], [1], [0, 0, 1, 1], [], []>} : vector<32x32xf32>, vector<32x64xf32>, vector<32x64xf32> -> vector<32x64xf32>
    %c0_4 = arith.constant 0 : index
    %c0_5 = arith.constant 0 : index
    %c0_6 = arith.constant 0 : index
    %4 = vector.load %arg2[%c0_4, %c0_5, %c0_6] : memref<3x64x128xf32, #tpu.memory_space<vmem>>, vector<1x64x128xf32>
    %5 = vector.shape_cast %4 : vector<1x64x128xf32> to vector<64x128xf32>
    %cst_7 = arith.constant dense<0.000000e+00> : vector<32x128xf32>
    %6 = tpu.matmul %3, %5, %cst_7 {dimension_numbers = #tpu.dot_dimension_numbers<[1], [0], [0], [1], [0, 0, 1, 1], [], []>} : vector<32x64xf32>, vector<64x128xf32>, vector<32x128xf32> -> vector<32x128xf32>
    %c1 = arith.constant 1 : index
    %c0_8 = arith.constant 0 : index
    %c0_9 = arith.constant 0 : index
    %7 = vector.load %arg1[%c1, %c0_8, %c0_9] : memref<3x32x32xf32, #tpu.memory_space<vmem>>, vector<1x32x32xf32>
    %8 = vector.shape_cast %7 : vector<1x32x32xf32> to vector<32x32xf32>
    %cst_10 = arith.constant dense<0.000000e+00> : vector<32x64xf32>
    %9 = tpu.matmul %8, %0, %cst_10 {dimension_numbers = #tpu.dot_dimension_numbers<[1], [0], [0], [1], [0, 0, 1, 1], [], []>} : vector<32x32xf32>, vector<32x64xf32>, vector<32x64xf32> -> vector<32x64xf32>
    %c1_11 = arith.constant 1 : index
    %c0_12 = arith.constant 0 : index
    %c0_13 = arith.constant 0 : index
    %10 = vector.load %arg2[%c1_11, %c0_12, %c0_13] : memref<3x64x128xf32, #tpu.memory_space<vmem>>, vector<1x64x128xf32>
    %11 = vector.shape_cast %10 : vector<1x64x128xf32> to vector<64x128xf32>
    %cst_14 = arith.constant dense<0.000000e+00> : vector<32x128xf32>
    %12 = tpu.matmul %9, %11, %cst_14 {dimension_numbers = #tpu.dot_dimension_numbers<[1], [0], [0], [1], [0, 0, 1, 1], [], []>} : vector<32x64xf32>, vector<64x128xf32>, vector<32x128xf32> -> vector<32x128xf32>
    %13 = arith.addf %6, %12 : vector<32x128xf32>
    %c2 = arith.constant 2 : index
    %c0_15 = arith.constant 0 : index
    %c0_16 = arith.constant 0 : index
    %14 = vector.load %arg1[%c2, %c0_15, %c0_16] : memref<3x32x32xf32, #tpu.memory_space<vmem>>, vector<1x32x32xf32>
    %15 = vector.shape_cast %14 : vector<1x32x32xf32> to vector<32x32xf32>
    %cst_17 = arith.constant dense<0.000000e+00> : vector<32x64xf32>
    %16 = tpu.matmul %15, %0, %cst_17 {dimension_numbers = #tpu.dot_dimension_numbers<[1], [0], [0], [1], [0, 0, 1, 1], [], []>} : vector<32x32xf32>, vector<32x64xf32>, vector<32x64xf32> -> vector<32x64xf32>
    %c2_18 = arith.constant 2 : index
    %c0_19 = arith.constant 0 : index
    %c0_20 = arith.constant 0 : index
    %17 = vector.load %arg2[%c2_18, %c0_19, %c0_20] : memref<3x64x128xf32, #tpu.memory_space<vmem>>, vector<1x64x128xf32>
    %18 = vector.shape_cast %17 : vector<1x64x128xf32> to vector<64x128xf32>
    %cst_21 = arith.constant dense<0.000000e+00> : vector<32x128xf32>
    %19 = tpu.matmul %16, %18, %cst_21 {dimension_numbers = #tpu.dot_dimension_numbers<[1], [0], [0], [1], [0, 0, 1, 1], [], []>} : vector<32x64xf32>, vector<64x128xf32>, vector<32x128xf32> -> vector<32x128xf32>
    %20 = arith.addf %13, %19 : vector<32x128xf32>
    %c0_22 = arith.constant 0 : index
    %c0_23 = arith.constant 0 : index
    %21 = vector.load %arg3[%c0_22, %c0_23] : memref<1x128xf32, #tpu.memory_space<vmem>>, vector<1x128xf32>
    %22 = vector.broadcast %21 : vector<1x128xf32> to vector<32x128xf32>
    %23 = arith.addf %20, %22 : vector<32x128xf32>
    %cst_24 = arith.constant 0.000000e+00 : f32
    %24 = vector.broadcast %cst_24 : f32 to vector<32x128xf32>
    %25 = arith.minimumf %23, %24 : vector<32x128xf32>
    %26 = math.exp %25 : vector<32x128xf32>
    %cst_25 = arith.constant 1.000000e+00 : f32
    %27 = vector.broadcast %cst_25 : f32 to vector<32x128xf32>
    %28 = arith.subf %26, %27 : vector<32x128xf32>
    %cst_26 = arith.constant 1.67326319 : f32
    %29 = vector.broadcast %cst_26 : f32 to vector<32x128xf32>
    %30 = arith.mulf %29, %28 : vector<32x128xf32>
    %cst_27 = arith.constant 0.000000e+00 : f32
    %31 = vector.broadcast %cst_27 : f32 to vector<32x128xf32>
    %32 = arith.cmpf ogt, %23, %31 : vector<32x128xf32>
    %33 = arith.select %32, %23, %30 : vector<32x128xi1>, vector<32x128xf32>
    %cst_28 = arith.constant 1.05070102 : f32
    %34 = vector.broadcast %cst_28 : f32 to vector<32x128xf32>
    %35 = arith.mulf %34, %33 : vector<32x128xf32>
    %c0_29 = arith.constant 0 : index
    %c0_30 = arith.constant 0 : index
    %c0_31 = arith.constant 0 : index
    %36 = vector.load %arg4[%c0_29, %c0_30, %c0_31] : memref<3x16x32xf32, #tpu.memory_space<vmem>>, vector<1x16x32xf32>
    %37 = vector.shape_cast %36 : vector<1x16x32xf32> to vector<16x32xf32>
    %cst_32 = arith.constant dense<0.000000e+00> : vector<16x128xf32>
    %38 = tpu.matmul %37, %35, %cst_32 {dimension_numbers = #tpu.dot_dimension_numbers<[1], [0], [0], [1], [0, 0, 1, 1], [], []>} : vector<16x32xf32>, vector<32x128xf32>, vector<16x128xf32> -> vector<16x128xf32>
    %c0_33 = arith.constant 0 : index
    %c0_34 = arith.constant 0 : index
    %c0_35 = arith.constant 0 : index
    %39 = vector.load %arg5[%c0_33, %c0_34, %c0_35] : memref<3x128x128xf32, #tpu.memory_space<vmem>>, vector<1x128x128xf32>
    %40 = vector.shape_cast %39 : vector<1x128x128xf32> to vector<128x128xf32>
    %cst_36 = arith.constant dense<0.000000e+00> : vector<16x128xf32>
    %41 = tpu.matmul %38, %40, %cst_36 {dimension_numbers = #tpu.dot_dimension_numbers<[1], [0], [0], [1], [0, 0, 1, 1], [], []>} : vector<16x128xf32>, vector<128x128xf32>, vector<16x128xf32> -> vector<16x128xf32>
    %c1_37 = arith.constant 1 : index
    %c0_38 = arith.constant 0 : index
    %c0_39 = arith.constant 0 : index
    %42 = vector.load %arg4[%c1_37, %c0_38, %c0_39] : memref<3x16x32xf32, #tpu.memory_space<vmem>>, vector<1x16x32xf32>
    %43 = vector.shape_cast %42 : vector<1x16x32xf32> to vector<16x32xf32>
    %cst_40 = arith.constant dense<0.000000e+00> : vector<16x128xf32>
    %44 = tpu.matmul %43, %35, %cst_40 {dimension_numbers = #tpu.dot_dimension_numbers<[1], [0], [0], [1], [0, 0, 1, 1], [], []>} : vector<16x32xf32>, vector<32x128xf32>, vector<16x128xf32> -> vector<16x128xf32>
    %c1_41 = arith.constant 1 : index
    %c0_42 = arith.constant 0 : index
    %c0_43 = arith.constant 0 : index
    %45 = vector.load %arg5[%c1_41, %c0_42, %c0_43] : memref<3x128x128xf32, #tpu.memory_space<vmem>>, vector<1x128x128xf32>
    %46 = vector.shape_cast %45 : vector<1x128x128xf32> to vector<128x128xf32>
    %cst_44 = arith.constant dense<0.000000e+00> : vector<16x128xf32>
    %47 = tpu.matmul %44, %46, %cst_44 {dimension_numbers = #tpu.dot_dimension_numbers<[1], [0], [0], [1], [0, 0, 1, 1], [], []>} : vector<16x128xf32>, vector<128x128xf32>, vector<16x128xf32> -> vector<16x128xf32>
    %48 = arith.addf %41, %47 : vector<16x128xf32>
    %c2_45 = arith.constant 2 : index
    %c0_46 = arith.constant 0 : index
    %c0_47 = arith.constant 0 : index
    %49 = vector.load %arg4[%c2_45, %c0_46, %c0_47] : memref<3x16x32xf32, #tpu.memory_space<vmem>>, vector<1x16x32xf32>
    %50 = vector.shape_cast %49 : vector<1x16x32xf32> to vector<16x32xf32>
    %cst_48 = arith.constant dense<0.000000e+00> : vector<16x128xf32>
    %51 = tpu.matmul %50, %35, %cst_48 {dimension_numbers = #tpu.dot_dimension_numbers<[1], [0], [0], [1], [0, 0, 1, 1], [], []>} : vector<16x32xf32>, vector<32x128xf32>, vector<16x128xf32> -> vector<16x128xf32>
    %c2_49 = arith.constant 2 : index
    %c0_50 = arith.constant 0 : index
    %c0_51 = arith.constant 0 : index
    %52 = vector.load %arg5[%c2_49, %c0_50, %c0_51] : memref<3x128x128xf32, #tpu.memory_space<vmem>>, vector<1x128x128xf32>
    %53 = vector.shape_cast %52 : vector<1x128x128xf32> to vector<128x128xf32>
    %cst_52 = arith.constant dense<0.000000e+00> : vector<16x128xf32>
    %54 = tpu.matmul %51, %53, %cst_52 {dimension_numbers = #tpu.dot_dimension_numbers<[1], [0], [0], [1], [0, 0, 1, 1], [], []>} : vector<16x128xf32>, vector<128x128xf32>, vector<16x128xf32> -> vector<16x128xf32>
    %55 = arith.addf %48, %54 : vector<16x128xf32>
    %c0_53 = arith.constant 0 : index
    %c0_54 = arith.constant 0 : index
    %56 = vector.load %arg6[%c0_53, %c0_54] : memref<1x128xf32, #tpu.memory_space<vmem>>, vector<1x128xf32>
    %57 = vector.broadcast %56 : vector<1x128xf32> to vector<16x128xf32>
    %58 = arith.addf %55, %57 : vector<16x128xf32>
    %cst_55 = arith.constant 0.000000e+00 : f32
    %59 = vector.broadcast %cst_55 : f32 to vector<16x128xf32>
    %60 = arith.minimumf %58, %59 : vector<16x128xf32>
    %61 = math.exp %60 : vector<16x128xf32>
    %cst_56 = arith.constant 1.000000e+00 : f32
    %62 = vector.broadcast %cst_56 : f32 to vector<16x128xf32>
    %63 = arith.subf %61, %62 : vector<16x128xf32>
    %cst_57 = arith.constant 1.67326319 : f32
    %64 = vector.broadcast %cst_57 : f32 to vector<16x128xf32>
    %65 = arith.mulf %64, %63 : vector<16x128xf32>
    %cst_58 = arith.constant 0.000000e+00 : f32
    %66 = vector.broadcast %cst_58 : f32 to vector<16x128xf32>
    %67 = arith.cmpf ogt, %58, %66 : vector<16x128xf32>
    %68 = arith.select %67, %58, %65 : vector<16x128xi1>, vector<16x128xf32>
    %cst_59 = arith.constant 1.05070102 : f32
    %69 = vector.broadcast %cst_59 : f32 to vector<16x128xf32>
    %70 = arith.mulf %69, %68 : vector<16x128xf32>
    %c0_60 = arith.constant 0 : index
    %c0_61 = arith.constant 0 : index
    %c0_62 = arith.constant 0 : index
    %71 = vector.load %arg7[%c0_60, %c0_61, %c0_62] : memref<3x16x16xf32, #tpu.memory_space<vmem>>, vector<1x16x16xf32>
    %72 = vector.shape_cast %71 : vector<1x16x16xf32> to vector<16x16xf32>
    %cst_63 = arith.constant dense<0.000000e+00> : vector<16x128xf32>
    %73 = tpu.matmul %72, %70, %cst_63 {dimension_numbers = #tpu.dot_dimension_numbers<[1], [0], [0], [1], [0, 0, 1, 1], [], []>} : vector<16x16xf32>, vector<16x128xf32>, vector<16x128xf32> -> vector<16x128xf32>
    %c0_64 = arith.constant 0 : index
    %c0_65 = arith.constant 0 : index
    %c0_66 = arith.constant 0 : index
    %74 = vector.load %arg8[%c0_64, %c0_65, %c0_66] : memref<3x128x128xf32, #tpu.memory_space<vmem>>, vector<1x128x128xf32>
    %75 = vector.shape_cast %74 : vector<1x128x128xf32> to vector<128x128xf32>
    %cst_67 = arith.constant dense<0.000000e+00> : vector<16x128xf32>
    %76 = tpu.matmul %73, %75, %cst_67 {dimension_numbers = #tpu.dot_dimension_numbers<[1], [0], [0], [1], [0, 0, 1, 1], [], []>} : vector<16x128xf32>, vector<128x128xf32>, vector<16x128xf32> -> vector<16x128xf32>
    %c1_68 = arith.constant 1 : index
    %c0_69 = arith.constant 0 : index
    %c0_70 = arith.constant 0 : index
    %77 = vector.load %arg7[%c1_68, %c0_69, %c0_70] : memref<3x16x16xf32, #tpu.memory_space<vmem>>, vector<1x16x16xf32>
    %78 = vector.shape_cast %77 : vector<1x16x16xf32> to vector<16x16xf32>
    %cst_71 = arith.constant dense<0.000000e+00> : vector<16x128xf32>
    %79 = tpu.matmul %78, %70, %cst_71 {dimension_numbers = #tpu.dot_dimension_numbers<[1], [0], [0], [1], [0, 0, 1, 1], [], []>} : vector<16x16xf32>, vector<16x128xf32>, vector<16x128xf32> -> vector<16x128xf32>
    %c1_72 = arith.constant 1 : index
    %c0_73 = arith.constant 0 : index
    %c0_74 = arith.constant 0 : index
    %80 = vector.load %arg8[%c1_72, %c0_73, %c0_74] : memref<3x128x128xf32, #tpu.memory_space<vmem>>, vector<1x128x128xf32>
    %81 = vector.shape_cast %80 : vector<1x128x128xf32> to vector<128x128xf32>
    %cst_75 = arith.constant dense<0.000000e+00> : vector<16x128xf32>
    %82 = tpu.matmul %79, %81, %cst_75 {dimension_numbers = #tpu.dot_dimension_numbers<[1], [0], [0], [1], [0, 0, 1, 1], [], []>} : vector<16x128xf32>, vector<128x128xf32>, vector<16x128xf32> -> vector<16x128xf32>
    %83 = arith.addf %76, %82 : vector<16x128xf32>
    %c2_76 = arith.constant 2 : index
    %c0_77 = arith.constant 0 : index
    %c0_78 = arith.constant 0 : index
    %84 = vector.load %arg7[%c2_76, %c0_77, %c0_78] : memref<3x16x16xf32, #tpu.memory_space<vmem>>, vector<1x16x16xf32>
    %85 = vector.shape_cast %84 : vector<1x16x16xf32> to vector<16x16xf32>
    %cst_79 = arith.constant dense<0.000000e+00> : vector<16x128xf32>
    %86 = tpu.matmul %85, %70, %cst_79 {dimension_numbers = #tpu.dot_dimension_numbers<[1], [0], [0], [1], [0, 0, 1, 1], [], []>} : vector<16x16xf32>, vector<16x128xf32>, vector<16x128xf32> -> vector<16x128xf32>
    %c2_80 = arith.constant 2 : index
    %c0_81 = arith.constant 0 : index
    %c0_82 = arith.constant 0 : index
    %87 = vector.load %arg8[%c2_80, %c0_81, %c0_82] : memref<3x128x128xf32, #tpu.memory_space<vmem>>, vector<1x128x128xf32>
    %88 = vector.shape_cast %87 : vector<1x128x128xf32> to vector<128x128xf32>
    %cst_83 = arith.constant dense<0.000000e+00> : vector<16x128xf32>
    %89 = tpu.matmul %86, %88, %cst_83 {dimension_numbers = #tpu.dot_dimension_numbers<[1], [0], [0], [1], [0, 0, 1, 1], [], []>} : vector<16x128xf32>, vector<128x128xf32>, vector<16x128xf32> -> vector<16x128xf32>
    %90 = arith.addf %83, %89 : vector<16x128xf32>
    %c0_84 = arith.constant 0 : index
    %c0_85 = arith.constant 0 : index
    %91 = vector.load %arg9[%c0_84, %c0_85] : memref<1x128xf32, #tpu.memory_space<vmem>>, vector<1x128xf32>
    %92 = vector.broadcast %91 : vector<1x128xf32> to vector<16x128xf32>
    %93 = arith.addf %90, %92 : vector<16x128xf32>
    %cst_86 = arith.constant 0.000000e+00 : f32
    %94 = vector.broadcast %cst_86 : f32 to vector<16x128xf32>
    %95 = arith.minimumf %93, %94 : vector<16x128xf32>
    %96 = math.exp %95 : vector<16x128xf32>
    %cst_87 = arith.constant 1.000000e+00 : f32
    %97 = vector.broadcast %cst_87 : f32 to vector<16x128xf32>
    %98 = arith.subf %96, %97 : vector<16x128xf32>
    %cst_88 = arith.constant 1.67326319 : f32
    %99 = vector.broadcast %cst_88 : f32 to vector<16x128xf32>
    %100 = arith.mulf %99, %98 : vector<16x128xf32>
    %cst_89 = arith.constant 0.000000e+00 : f32
    %101 = vector.broadcast %cst_89 : f32 to vector<16x128xf32>
    %102 = arith.cmpf ogt, %93, %101 : vector<16x128xf32>
    %103 = arith.select %102, %93, %100 : vector<16x128xi1>, vector<16x128xf32>
    %cst_90 = arith.constant 1.05070102 : f32
    %104 = vector.broadcast %cst_90 : f32 to vector<16x128xf32>
    %105 = arith.mulf %104, %103 : vector<16x128xf32>
    %c0_91 = arith.constant 0 : index
    %c0_92 = arith.constant 0 : index
    %c0_93 = arith.constant 0 : index
    %106 = vector.load %arg10[%c0_91, %c0_92, %c0_93] : memref<1x16x32xf32, #tpu.memory_space<vmem>>, vector<1x16x32xf32>
    %107 = vector.shape_cast %106 : vector<1x16x32xf32> to vector<16x32xf32>
    %cst_94 = arith.constant dense<0.000000e+00> : vector<16x128xf32>
    %108 = tpu.matmul %107, %35, %cst_94 {dimension_numbers = #tpu.dot_dimension_numbers<[1], [0], [0], [1], [0, 0, 1, 1], [], []>} : vector<16x32xf32>, vector<32x128xf32>, vector<16x128xf32> -> vector<16x128xf32>
    %c0_95 = arith.constant 0 : index
    %c0_96 = arith.constant 0 : index
    %c0_97 = arith.constant 0 : index
    %109 = vector.load %arg11[%c0_95, %c0_96, %c0_97] : memref<1x128x128xf32, #tpu.memory_space<vmem>>, vector<1x128x128xf32>
    %110 = vector.shape_cast %109 : vector<1x128x128xf32> to vector<128x128xf32>
    %cst_98 = arith.constant dense<0.000000e+00> : vector<16x128xf32>
    %111 = tpu.matmul %108, %110, %cst_98 {dimension_numbers = #tpu.dot_dimension_numbers<[1], [0], [0], [1], [0, 0, 1, 1], [], []>} : vector<16x128xf32>, vector<128x128xf32>, vector<16x128xf32> -> vector<16x128xf32>
    %c0_99 = arith.constant 0 : index
    %c0_100 = arith.constant 0 : index
    %112 = vector.load %arg12[%c0_99, %c0_100] : memref<1x128xf32, #tpu.memory_space<vmem>>, vector<1x128xf32>
    %113 = vector.broadcast %112 : vector<1x128xf32> to vector<16x128xf32>
    %114 = arith.addf %111, %113 : vector<16x128xf32>
    %115 = arith.addf %114, %105 : vector<16x128xf32>
    %cst_101 = arith.constant 0.000000e+00 : f32
    %116 = vector.broadcast %cst_101 : f32 to vector<16x128xf32>
    %117 = arith.minimumf %115, %116 : vector<16x128xf32>
    %118 = math.exp %117 : vector<16x128xf32>
    %cst_102 = arith.constant 1.000000e+00 : f32
    %119 = vector.broadcast %cst_102 : f32 to vector<16x128xf32>
    %120 = arith.subf %118, %119 : vector<16x128xf32>
    %cst_103 = arith.constant 1.67326319 : f32
    %121 = vector.broadcast %cst_103 : f32 to vector<16x128xf32>
    %122 = arith.mulf %121, %120 : vector<16x128xf32>
    %cst_104 = arith.constant 0.000000e+00 : f32
    %123 = vector.broadcast %cst_104 : f32 to vector<16x128xf32>
    %124 = arith.cmpf ogt, %115, %123 : vector<16x128xf32>
    %125 = arith.select %124, %115, %122 : vector<16x128xi1>, vector<16x128xf32>
    %cst_105 = arith.constant 1.05070102 : f32
    %126 = vector.broadcast %cst_105 : f32 to vector<16x128xf32>
    %127 = arith.mulf %126, %125 : vector<16x128xf32>
    %c0_106 = arith.constant 0 : index
    %c0_107 = arith.constant 0 : index
    %c0_108 = arith.constant 0 : index
    %128 = vector.load %arg13[%c0_106, %c0_107, %c0_108] : memref<3x8x16xf32, #tpu.memory_space<vmem>>, vector<1x8x16xf32>
    %129 = vector.shape_cast %128 : vector<1x8x16xf32> to vector<8x16xf32>
    %cst_109 = arith.constant dense<0.000000e+00> : vector<8x128xf32>
    %130 = tpu.matmul %129, %127, %cst_109 {dimension_numbers = #tpu.dot_dimension_numbers<[1], [0], [0], [1], [0, 0, 1, 1], [], []>} : vector<8x16xf32>, vector<16x128xf32>, vector<8x128xf32> -> vector<8x128xf32>
    %c0_110 = arith.constant 0 : index
    %c0_111 = arith.constant 0 : index
    %c0_112 = arith.constant 0 : index
    %131 = vector.load %arg14[%c0_110, %c0_111, %c0_112] : memref<3x128x128xf32, #tpu.memory_space<vmem>>, vector<1x128x128xf32>
    %132 = vector.shape_cast %131 : vector<1x128x128xf32> to vector<128x128xf32>
    %cst_113 = arith.constant dense<0.000000e+00> : vector<8x128xf32>
    %133 = tpu.matmul %130, %132, %cst_113 {dimension_numbers = #tpu.dot_dimension_numbers<[1], [0], [0], [1], [0, 0, 1, 1], [], []>} : vector<8x128xf32>, vector<128x128xf32>, vector<8x128xf32> -> vector<8x128xf32>
    %c1_114 = arith.constant 1 : index
    %c0_115 = arith.constant 0 : index
    %c0_116 = arith.constant 0 : index
    %134 = vector.load %arg13[%c1_114, %c0_115, %c0_116] : memref<3x8x16xf32, #tpu.memory_space<vmem>>, vector<1x8x16xf32>
    %135 = vector.shape_cast %134 : vector<1x8x16xf32> to vector<8x16xf32>
    %cst_117 = arith.constant dense<0.000000e+00> : vector<8x128xf32>
    %136 = tpu.matmul %135, %127, %cst_117 {dimension_numbers = #tpu.dot_dimension_numbers<[1], [0], [0], [1], [0, 0, 1, 1], [], []>} : vector<8x16xf32>, vector<16x128xf32>, vector<8x128xf32> -> vector<8x128xf32>
    %c1_118 = arith.constant 1 : index
    %c0_119 = arith.constant 0 : index
    %c0_120 = arith.constant 0 : index
    %137 = vector.load %arg14[%c1_118, %c0_119, %c0_120] : memref<3x128x128xf32, #tpu.memory_space<vmem>>, vector<1x128x128xf32>
    %138 = vector.shape_cast %137 : vector<1x128x128xf32> to vector<128x128xf32>
    %cst_121 = arith.constant dense<0.000000e+00> : vector<8x128xf32>
    %139 = tpu.matmul %136, %138, %cst_121 {dimension_numbers = #tpu.dot_dimension_numbers<[1], [0], [0], [1], [0, 0, 1, 1], [], []>} : vector<8x128xf32>, vector<128x128xf32>, vector<8x128xf32> -> vector<8x128xf32>
    %140 = arith.addf %133, %139 : vector<8x128xf32>
    %c2_122 = arith.constant 2 : index
    %c0_123 = arith.constant 0 : index
    %c0_124 = arith.constant 0 : index
    %141 = vector.load %arg13[%c2_122, %c0_123, %c0_124] : memref<3x8x16xf32, #tpu.memory_space<vmem>>, vector<1x8x16xf32>
    %142 = vector.shape_cast %141 : vector<1x8x16xf32> to vector<8x16xf32>
    %cst_125 = arith.constant dense<0.000000e+00> : vector<8x128xf32>
    %143 = tpu.matmul %142, %127, %cst_125 {dimension_numbers = #tpu.dot_dimension_numbers<[1], [0], [0], [1], [0, 0, 1, 1], [], []>} : vector<8x16xf32>, vector<16x128xf32>, vector<8x128xf32> -> vector<8x128xf32>
    %c2_126 = arith.constant 2 : index
    %c0_127 = arith.constant 0 : index
    %c0_128 = arith.constant 0 : index
    %144 = vector.load %arg14[%c2_126, %c0_127, %c0_128] : memref<3x128x128xf32, #tpu.memory_space<vmem>>, vector<1x128x128xf32>
    %145 = vector.shape_cast %144 : vector<1x128x128xf32> to vector<128x128xf32>
    %cst_129 = arith.constant dense<0.000000e+00> : vector<8x128xf32>
    %146 = tpu.matmul %143, %145, %cst_129 {dimension_numbers = #tpu.dot_dimension_numbers<[1], [0], [0], [1], [0, 0, 1, 1], [], []>} : vector<8x128xf32>, vector<128x128xf32>, vector<8x128xf32> -> vector<8x128xf32>
    %147 = arith.addf %140, %146 : vector<8x128xf32>
    %c0_130 = arith.constant 0 : index
    %c0_131 = arith.constant 0 : index
    %148 = vector.load %arg15[%c0_130, %c0_131] : memref<1x128xf32, #tpu.memory_space<vmem>>, vector<1x128xf32>
    %149 = vector.broadcast %148 : vector<1x128xf32> to vector<8x128xf32>
    %150 = arith.addf %147, %149 : vector<8x128xf32>
    %cst_132 = arith.constant 0.000000e+00 : f32
    %151 = vector.broadcast %cst_132 : f32 to vector<8x128xf32>
    %152 = arith.minimumf %150, %151 : vector<8x128xf32>
    %153 = math.exp %152 : vector<8x128xf32>
    %cst_133 = arith.constant 1.000000e+00 : f32
    %154 = vector.broadcast %cst_133 : f32 to vector<8x128xf32>
    %155 = arith.subf %153, %154 : vector<8x128xf32>
    %cst_134 = arith.constant 1.67326319 : f32
    %156 = vector.broadcast %cst_134 : f32 to vector<8x128xf32>
    %157 = arith.mulf %156, %155 : vector<8x128xf32>
    %cst_135 = arith.constant 0.000000e+00 : f32
    %158 = vector.broadcast %cst_135 : f32 to vector<8x128xf32>
    %159 = arith.cmpf ogt, %150, %158 : vector<8x128xf32>
    %160 = arith.select %159, %150, %157 : vector<8x128xi1>, vector<8x128xf32>
    %cst_136 = arith.constant 1.05070102 : f32
    %161 = vector.broadcast %cst_136 : f32 to vector<8x128xf32>
    %162 = arith.mulf %161, %160 : vector<8x128xf32>
    %c0_137 = arith.constant 0 : index
    %c0_138 = arith.constant 0 : index
    %c0_139 = arith.constant 0 : index
    %163 = vector.load %arg16[%c0_137, %c0_138, %c0_139] : memref<3x8x8xf32, #tpu.memory_space<vmem>>, vector<1x8x8xf32>
    %164 = vector.shape_cast %163 : vector<1x8x8xf32> to vector<8x8xf32>
    %cst_140 = arith.constant dense<0.000000e+00> : vector<8x128xf32>
    %165 = tpu.matmul %164, %162, %cst_140 {dimension_numbers = #tpu.dot_dimension_numbers<[1], [0], [0], [1], [0, 0, 1, 1], [], []>} : vector<8x8xf32>, vector<8x128xf32>, vector<8x128xf32> -> vector<8x128xf32>
    %c0_141 = arith.constant 0 : index
    %c0_142 = arith.constant 0 : index
    %c0_143 = arith.constant 0 : index
    %166 = vector.load %arg17[%c0_141, %c0_142, %c0_143] : memref<3x128x128xf32, #tpu.memory_space<vmem>>, vector<1x128x128xf32>
    %167 = vector.shape_cast %166 : vector<1x128x128xf32> to vector<128x128xf32>
    %cst_144 = arith.constant dense<0.000000e+00> : vector<8x128xf32>
    %168 = tpu.matmul %165, %167, %cst_144 {dimension_numbers = #tpu.dot_dimension_numbers<[1], [0], [0], [1], [0, 0, 1, 1], [], []>} : vector<8x128xf32>, vector<128x128xf32>, vector<8x128xf32> -> vector<8x128xf32>
    %c1_145 = arith.constant 1 : index
    %c0_146 = arith.constant 0 : index
    %c0_147 = arith.constant 0 : index
    %169 = vector.load %arg16[%c1_145, %c0_146, %c0_147] : memref<3x8x8xf32, #tpu.memory_space<vmem>>, vector<1x8x8xf32>
    %170 = vector.shape_cast %169 : vector<1x8x8xf32> to vector<8x8xf32>
    %cst_148 = arith.constant dense<0.000000e+00> : vector<8x128xf32>
    %171 = tpu.matmul %170, %162, %cst_148 {dimension_numbers = #tpu.dot_dimension_numbers<[1], [0], [0], [1], [0, 0, 1, 1], [], []>} : vector<8x8xf32>, vector<8x128xf32>, vector<8x128xf32> -> vector<8x128xf32>
    %c1_149 = arith.constant 1 : index
    %c0_150 = arith.constant 0 : index
    %c0_151 = arith.constant 0 : index
    %172 = vector.load %arg17[%c1_149, %c0_150, %c0_151] : memref<3x128x128xf32, #tpu.memory_space<vmem>>, vector<1x128x128xf32>
    %173 = vector.shape_cast %172 : vector<1x128x128xf32> to vector<128x128xf32>
    %cst_152 = arith.constant dense<0.000000e+00> : vector<8x128xf32>
    %174 = tpu.matmul %171, %173, %cst_152 {dimension_numbers = #tpu.dot_dimension_numbers<[1], [0], [0], [1], [0, 0, 1, 1], [], []>} : vector<8x128xf32>, vector<128x128xf32>, vector<8x128xf32> -> vector<8x128xf32>
    %175 = arith.addf %168, %174 : vector<8x128xf32>
    %c2_153 = arith.constant 2 : index
    %c0_154 = arith.constant 0 : index
    %c0_155 = arith.constant 0 : index
    %176 = vector.load %arg16[%c2_153, %c0_154, %c0_155] : memref<3x8x8xf32, #tpu.memory_space<vmem>>, vector<1x8x8xf32>
    %177 = vector.shape_cast %176 : vector<1x8x8xf32> to vector<8x8xf32>
    %cst_156 = arith.constant dense<0.000000e+00> : vector<8x128xf32>
    %178 = tpu.matmul %177, %162, %cst_156 {dimension_numbers = #tpu.dot_dimension_numbers<[1], [0], [0], [1], [0, 0, 1, 1], [], []>} : vector<8x8xf32>, vector<8x128xf32>, vector<8x128xf32> -> vector<8x128xf32>
    %c2_157 = arith.constant 2 : index
    %c0_158 = arith.constant 0 : index
    %c0_159 = arith.constant 0 : index
    %179 = vector.load %arg17[%c2_157, %c0_158, %c0_159] : memref<3x128x128xf32, #tpu.memory_space<vmem>>, vector<1x128x128xf32>
    %180 = vector.shape_cast %179 : vector<1x128x128xf32> to vector<128x128xf32>
    %cst_160 = arith.constant dense<0.000000e+00> : vector<8x128xf32>
    %181 = tpu.matmul %178, %180, %cst_160 {dimension_numbers = #tpu.dot_dimension_numbers<[1], [0], [0], [1], [0, 0, 1, 1], [], []>} : vector<8x128xf32>, vector<128x128xf32>, vector<8x128xf32> -> vector<8x128xf32>
    %182 = arith.addf %175, %181 : vector<8x128xf32>
    %c0_161 = arith.constant 0 : index
    %c0_162 = arith.constant 0 : index
    %183 = vector.load %arg18[%c0_161, %c0_162] : memref<1x128xf32, #tpu.memory_space<vmem>>, vector<1x128xf32>
    %184 = vector.broadcast %183 : vector<1x128xf32> to vector<8x128xf32>
    %185 = arith.addf %182, %184 : vector<8x128xf32>
    %cst_163 = arith.constant 0.000000e+00 : f32
    %186 = vector.broadcast %cst_163 : f32 to vector<8x128xf32>
    %187 = arith.minimumf %185, %186 : vector<8x128xf32>
    %188 = math.exp %187 : vector<8x128xf32>
    %cst_164 = arith.constant 1.000000e+00 : f32
    %189 = vector.broadcast %cst_164 : f32 to vector<8x128xf32>
    %190 = arith.subf %188, %189 : vector<8x128xf32>
    %cst_165 = arith.constant 1.67326319 : f32
    %191 = vector.broadcast %cst_165 : f32 to vector<8x128xf32>
    %192 = arith.mulf %191, %190 : vector<8x128xf32>
    %cst_166 = arith.constant 0.000000e+00 : f32
    %193 = vector.broadcast %cst_166 : f32 to vector<8x128xf32>
    %194 = arith.cmpf ogt, %185, %193 : vector<8x128xf32>
    %195 = arith.select %194, %185, %192 : vector<8x128xi1>, vector<8x128xf32>
    %cst_167 = arith.constant 1.05070102 : f32
    %196 = vector.broadcast %cst_167 : f32 to vector<8x128xf32>
    %197 = arith.mulf %196, %195 : vector<8x128xf32>
    %c0_168 = arith.constant 0 : index
    %c0_169 = arith.constant 0 : index
    %c0_170 = arith.constant 0 : index
    %198 = vector.load %arg19[%c0_168, %c0_169, %c0_170] : memref<1x8x16xf32, #tpu.memory_space<vmem>>, vector<1x8x16xf32>
    %199 = vector.shape_cast %198 : vector<1x8x16xf32> to vector<8x16xf32>
    %cst_171 = arith.constant dense<0.000000e+00> : vector<8x128xf32>
    %200 = tpu.matmul %199, %127, %cst_171 {dimension_numbers = #tpu.dot_dimension_numbers<[1], [0], [0], [1], [0, 0, 1, 1], [], []>} : vector<8x16xf32>, vector<16x128xf32>, vector<8x128xf32> -> vector<8x128xf32>
    %c0_172 = arith.constant 0 : index
    %c0_173 = arith.constant 0 : index
    %c0_174 = arith.constant 0 : index
    %201 = vector.load %arg20[%c0_172, %c0_173, %c0_174] : memref<1x128x128xf32, #tpu.memory_space<vmem>>, vector<1x128x128xf32>
    %202 = vector.shape_cast %201 : vector<1x128x128xf32> to vector<128x128xf32>
    %cst_175 = arith.constant dense<0.000000e+00> : vector<8x128xf32>
    %203 = tpu.matmul %200, %202, %cst_175 {dimension_numbers = #tpu.dot_dimension_numbers<[1], [0], [0], [1], [0, 0, 1, 1], [], []>} : vector<8x128xf32>, vector<128x128xf32>, vector<8x128xf32> -> vector<8x128xf32>
    %c0_176 = arith.constant 0 : index
    %c0_177 = arith.constant 0 : index
    %204 = vector.load %arg21[%c0_176, %c0_177] : memref<1x128xf32, #tpu.memory_space<vmem>>, vector<1x128xf32>
    %205 = vector.broadcast %204 : vector<1x128xf32> to vector<8x128xf32>
    %206 = arith.addf %203, %205 : vector<8x128xf32>
    %207 = arith.addf %206, %197 : vector<8x128xf32>
    %cst_178 = arith.constant 0.000000e+00 : f32
    %208 = vector.broadcast %cst_178 : f32 to vector<8x128xf32>
    %209 = arith.minimumf %207, %208 : vector<8x128xf32>
    %210 = math.exp %209 : vector<8x128xf32>
    %cst_179 = arith.constant 1.000000e+00 : f32
    %211 = vector.broadcast %cst_179 : f32 to vector<8x128xf32>
    %212 = arith.subf %210, %211 : vector<8x128xf32>
    %cst_180 = arith.constant 1.67326319 : f32
    %213 = vector.broadcast %cst_180 : f32 to vector<8x128xf32>
    %214 = arith.mulf %213, %212 : vector<8x128xf32>
    %cst_181 = arith.constant 0.000000e+00 : f32
    %215 = vector.broadcast %cst_181 : f32 to vector<8x128xf32>
    %216 = arith.cmpf ogt, %207, %215 : vector<8x128xf32>
    %217 = arith.select %216, %207, %214 : vector<8x128xi1>, vector<8x128xf32>
    %cst_182 = arith.constant 1.05070102 : f32
    %218 = vector.broadcast %cst_182 : f32 to vector<8x128xf32>
    %219 = arith.mulf %218, %217 : vector<8x128xf32>
    %c0_183 = arith.constant 0 : index
    %c0_184 = arith.constant 0 : index
    %c0_185 = arith.constant 0 : index
    %220 = vector.load %arg22[%c0_183, %c0_184, %c0_185] : memref<4x2x8xf32, #tpu.memory_space<vmem>>, vector<1x2x8xf32>
    %221 = vector.shape_cast %220 : vector<1x2x8xf32> to vector<2x8xf32>
    %cst_186 = arith.constant dense<0.000000e+00> : vector<2x128xf32>
    %222 = tpu.matmul %221, %219, %cst_186 {dimension_numbers = #tpu.dot_dimension_numbers<[1], [0], [0], [1], [0, 0, 1, 1], [], []>} : vector<2x8xf32>, vector<8x128xf32>, vector<2x128xf32> -> vector<2x128xf32>
    %c0_187 = arith.constant 0 : index
    %c0_188 = arith.constant 0 : index
    %c0_189 = arith.constant 0 : index
    %223 = vector.load %arg23[%c0_187, %c0_188, %c0_189] : memref<4x128x32xf32, #tpu.memory_space<vmem>>, vector<1x128x32xf32>
    %224 = vector.shape_cast %223 : vector<1x128x32xf32> to vector<128x32xf32>
    %cst_190 = arith.constant dense<0.000000e+00> : vector<2x32xf32>
    %225 = tpu.matmul %222, %224, %cst_190 {dimension_numbers = #tpu.dot_dimension_numbers<[1], [0], [0], [1], [0, 0, 1, 1], [], []>} : vector<2x128xf32>, vector<128x32xf32>, vector<2x32xf32> -> vector<2x32xf32>
    %c1_191 = arith.constant 1 : index
    %c0_192 = arith.constant 0 : index
    %c0_193 = arith.constant 0 : index
    %226 = vector.load %arg22[%c1_191, %c0_192, %c0_193] : memref<4x2x8xf32, #tpu.memory_space<vmem>>, vector<1x2x8xf32>
    %227 = vector.shape_cast %226 : vector<1x2x8xf32> to vector<2x8xf32>
    %cst_194 = arith.constant dense<0.000000e+00> : vector<2x128xf32>
    %228 = tpu.matmul %227, %219, %cst_194 {dimension_numbers = #tpu.dot_dimension_numbers<[1], [0], [0], [1], [0, 0, 1, 1], [], []>} : vector<2x8xf32>, vector<8x128xf32>, vector<2x128xf32> -> vector<2x128xf32>
    %c1_195 = arith.constant 1 : index
    %c0_196 = arith.constant 0 : index
    %c0_197 = arith.constant 0 : index
    %229 = vector.load %arg23[%c1_195, %c0_196, %c0_197] : memref<4x128x32xf32, #tpu.memory_space<vmem>>, vector<1x128x32xf32>
    %230 = vector.shape_cast %229 : vector<1x128x32xf32> to vector<128x32xf32>
    %cst_198 = arith.constant dense<0.000000e+00> : vector<2x32xf32>
    %231 = tpu.matmul %228, %230, %cst_198 {dimension_numbers = #tpu.dot_dimension_numbers<[1], [0], [0], [1], [0, 0, 1, 1], [], []>} : vector<2x128xf32>, vector<128x32xf32>, vector<2x32xf32> -> vector<2x32xf32>
    %232 = arith.addf %225, %231 : vector<2x32xf32>
    %c2_199 = arith.constant 2 : index
    %c0_200 = arith.constant 0 : index
    %c0_201 = arith.constant 0 : index
    %233 = vector.load %arg22[%c2_199, %c0_200, %c0_201] : memref<4x2x8xf32, #tpu.memory_space<vmem>>, vector<1x2x8xf32>
    %234 = vector.shape_cast %233 : vector<1x2x8xf32> to vector<2x8xf32>
    %cst_202 = arith.constant dense<0.000000e+00> : vector<2x128xf32>
    %235 = tpu.matmul %234, %219, %cst_202 {dimension_numbers = #tpu.dot_dimension_numbers<[1], [0], [0], [1], [0, 0, 1, 1], [], []>} : vector<2x8xf32>, vector<8x128xf32>, vector<2x128xf32> -> vector<2x128xf32>
    %c2_203 = arith.constant 2 : index
    %c0_204 = arith.constant 0 : index
    %c0_205 = arith.constant 0 : index
    %236 = vector.load %arg23[%c2_203, %c0_204, %c0_205] : memref<4x128x32xf32, #tpu.memory_space<vmem>>, vector<1x128x32xf32>
    %237 = vector.shape_cast %236 : vector<1x128x32xf32> to vector<128x32xf32>
    %cst_206 = arith.constant dense<0.000000e+00> : vector<2x32xf32>
    %238 = tpu.matmul %235, %237, %cst_206 {dimension_numbers = #tpu.dot_dimension_numbers<[1], [0], [0], [1], [0, 0, 1, 1], [], []>} : vector<2x128xf32>, vector<128x32xf32>, vector<2x32xf32> -> vector<2x32xf32>
    %239 = arith.addf %232, %238 : vector<2x32xf32>
    %c3 = arith.constant 3 : index
    %c0_207 = arith.constant 0 : index
    %c0_208 = arith.constant 0 : index
    %240 = vector.load %arg22[%c3, %c0_207, %c0_208] : memref<4x2x8xf32, #tpu.memory_space<vmem>>, vector<1x2x8xf32>
    %241 = vector.shape_cast %240 : vector<1x2x8xf32> to vector<2x8xf32>
    %cst_209 = arith.constant dense<0.000000e+00> : vector<2x128xf32>
    %242 = tpu.matmul %241, %219, %cst_209 {dimension_numbers = #tpu.dot_dimension_numbers<[1], [0], [0], [1], [0, 0, 1, 1], [], []>} : vector<2x8xf32>, vector<8x128xf32>, vector<2x128xf32> -> vector<2x128xf32>
    %c3_210 = arith.constant 3 : index
    %c0_211 = arith.constant 0 : index
    %c0_212 = arith.constant 0 : index
    %243 = vector.load %arg23[%c3_210, %c0_211, %c0_212] : memref<4x128x32xf32, #tpu.memory_space<vmem>>, vector<1x128x32xf32>
    %244 = vector.shape_cast %243 : vector<1x128x32xf32> to vector<128x32xf32>
    %cst_213 = arith.constant dense<0.000000e+00> : vector<2x32xf32>
    %245 = tpu.matmul %242, %244, %cst_213 {dimension_numbers = #tpu.dot_dimension_numbers<[1], [0], [0], [1], [0, 0, 1, 1], [], []>} : vector<2x128xf32>, vector<128x32xf32>, vector<2x32xf32> -> vector<2x32xf32>
    %246 = arith.addf %239, %245 : vector<2x32xf32>
    %c0_214 = arith.constant 0 : index
    %c0_215 = arith.constant 0 : index
    %247 = vector.load %arg24[%c0_214, %c0_215] : memref<1x32xf32, #tpu.memory_space<vmem>>, vector<1x32xf32>
    %248 = vector.broadcast %247 : vector<1x32xf32> to vector<2x32xf32>
    %249 = arith.addf %246, %248 : vector<2x32xf32>
    %c0_216 = arith.constant 0 : index
    %c0_217 = arith.constant 0 : index
    %250 = vector.load %arg25[%c0_216, %c0_217] : memref<32x6xf32, #tpu.memory_space<vmem>>, vector<32x6xf32>
    %cst_218 = arith.constant dense<0.000000e+00> : vector<2x6xf32>
    %251 = tpu.matmul %249, %250, %cst_218 {dimension_numbers = #tpu.dot_dimension_numbers<[1], [0], [0], [1], [0, 0, 1, 1], [], []>} : vector<2x32xf32>, vector<32x6xf32>, vector<2x6xf32> -> vector<2x6xf32>
    %c0_219 = arith.constant 0 : index
    %c0_220 = arith.constant 0 : index
    %252 = vector.load %arg26[%c0_219, %c0_220] : memref<1x6xf32, #tpu.memory_space<vmem>>, vector<1x6xf32>
    %253 = vector.broadcast %252 : vector<1x6xf32> to vector<2x6xf32>
    %254 = arith.addf %251, %253 : vector<2x6xf32>
    %cst_221 = arith.constant dense<0xFF800000> : vector<2xf32>
    %255 = vector.multi_reduction <maximumf>, %254, %cst_221 [1] : vector<2x6xf32> to vector<2xf32>
    %256 = vector.shape_cast %255 : vector<2xf32> to vector<2x1xf32>
    %257 = vector.broadcast %256 : vector<2x1xf32> to vector<2x6xf32>
    %258 = arith.subf %254, %257 : vector<2x6xf32>
    %259 = math.exp %258 : vector<2x6xf32>
    %cst_222 = arith.constant dense<0.000000e+00> : vector<2xf32>
    %260 = vector.multi_reduction <add>, %259, %cst_222 [1] : vector<2x6xf32> to vector<2xf32>
    %261 = vector.shape_cast %260 : vector<2xf32> to vector<2x1xf32>
    %262 = math.log %261 : vector<2x1xf32>
    %263 = arith.addf %262, %256 : vector<2x1xf32>
    %264 = vector.broadcast %263 : vector<2x1xf32> to vector<2x6xf32>
    %265 = arith.subf %254, %264 : vector<2x6xf32>
    %c0_223 = arith.constant 0 : index
    %c0_224 = arith.constant 0 : index
    %266 = vector.load %arg27[%c0_223, %c0_224] : memref<2x6xf32, #tpu.memory_space<vmem>>, vector<2x6xf32>
    tpu.vector_store %arg27[%c0_223, %c0_224], %265 {strides = array<i32>} : memref<2x6xf32, #tpu.memory_space<vmem>>, vector<2x6xf32>,
    %c0_225 = arith.constant 0 : index
    %c0_226 = arith.constant 0 : index
    %267 = vector.load %arg28[%c0_225, %c0_226] : memref<2x32xf32, #tpu.memory_space<vmem>>, vector<2x32xf32>
    tpu.vector_store %arg28[%c0_225, %c0_226], %249 {strides = array<i32>} : memref<2x32xf32, #tpu.memory_space<vmem>>, vector<2x32xf32>,
    return
  }
}

</mosaic_0001>

<llo_original>
// kernel: fwd.1
$region0: #{fwd.1}
  #allocation0 [shape = 'u32[]', space=smem, size = 0x4, offset = 0x4, fixed_abs, tag = 'smem constant byte address 0x4 - core index']
  #allocation1 [shape = 'u32[144,128]{1,0:T(1,128)}', space=vmem, size = 0x12000, scoped, tag = 'internal scratch']
  %s0 = inlined_call_operand.vmem [shape: f32[32,64], index: 0, kind: input, shape index: {}]
  %s1 = inlined_call_operand.vmem [shape: f32[3,32,32], index: 1, kind: input, shape index: {}]
  %s2 = inlined_call_operand.hbm [shape: f32[3,64,128], index: 2, kind: input, shape index: {}]
  %s3 = inlined_call_operand.hbm [shape: f32[1,128], index: 3, kind: input, shape index: {}]
  %s4 = inlined_call_operand.hbm [shape: f32[3,16,32], index: 4, kind: input, shape index: {}]
  %s5 = inlined_call_operand.hbm [shape: f32[3,128,128], index: 5, kind: input, shape index: {}]
  %s6 = inlined_call_operand.hbm [shape: f32[1,128], index: 6, kind: input, shape index: {}]
  %s7 = inlined_call_operand.hbm [shape: f32[3,16,16], index: 7, kind: input, shape index: {}]
  %s8 = inlined_call_operand.hbm [shape: f32[3,128,128], index: 8, kind: input, shape index: {}]
  %s9 = inlined_call_operand.hbm [shape: f32[1,128], index: 9, kind: input, shape index: {}]
  %s10 = inlined_call_operand.hbm [shape: f32[1,16,32], index: 10, kind: input, shape index: {}]
  %s11 = inlined_call_operand.hbm [shape: f32[1,128,128], index: 11, kind: input, shape index: {}]
  %s12 = inlined_call_operand.hbm [shape: f32[1,128], index: 12, kind: input, shape index: {}]
  %s13 = inlined_call_operand.hbm [shape: f32[3,8,16], index: 13, kind: input, shape index: {}]
  %s14 = inlined_call_operand.hbm [shape: f32[3,128,128], index: 14, kind: input, shape index: {}]
  %s15 = inlined_call_operand.hbm [shape: f32[1,128], index: 15, kind: input, shape index: {}]
  %s16 = inlined_call_operand.hbm [shape: f32[3,8,8], index: 16, kind: input, shape index: {}]
  %s17 = inlined_call_operand.hbm [shape: f32[3,128,128], index: 17, kind: input, shape index: {}]
  %s18 = inlined_call_operand.hbm [shape: f32[1,128], index: 18, kind: input, shape index: {}]
  %s19 = inlined_call_operand.hbm [shape: f32[1,8,16], index: 19, kind: input, shape index: {}]
  %s20 = inlined_call_operand.hbm [shape: f32[1,128,128], index: 20, kind: input, shape index: {}]
  %s21 = inlined_call_operand.hbm [shape: f32[1,128], index: 21, kind: input, shape index: {}]
  %s22 = inlined_call_operand.hbm [shape: f32[4,2,8], index: 22, kind: input, shape index: {}]
  %s23 = inlined_call_operand.vmem [shape: f32[4,128,32], index: 23, kind: input, shape index: {}]
  %s24 = inlined_call_operand.vmem [shape: f32[1,32], index: 24, kind: input, shape index: {}]
  %s25 = inlined_call_operand.vmem [shape: f32[32,6], index: 25, kind: input, shape index: {}]
  %s26 = inlined_call_operand.vmem [shape: f32[1,6], index: 26, kind: input, shape index: {}]
  %s27 = inlined_call_operand.hbm [shape: f32[2,6], index: 27, kind: output, shape index: {0}]
  %s28 = inlined_call_operand.hbm [shape: f32[2,32], index: 28, kind: output, shape index: {1}]
  %29 = xla_tuple %s27, %s28
  %s30 = sld [smem:[#allocation0]]
  $region210: #{fwd.1} parent=0
    _
  %s32 = ssub.s32 1, %s30
  %s33 = scalar_select 0, %s32, %s30
  $region1: #{fwd.1} parent=0
    #allocation2 [shape = 'u8[98304]{0}', space=vmem, size = 0x18000, scoped, tag = 'input window, operand 2, single buffered']
    #allocation3 [shape = 's32[1]{0}', space=sflag, size = 0x4, scoped, tag = 'scoped memory for fwd.1']
    #allocation4 [shape = 's32[1]{0}', space=sflag, size = 0x4, scoped, tag = 'scoped memory for fwd.1']
    #allocation5 [shape = 'u8[512]{0}', space=vmem, size = 0x400, scoped, tag = 'input window, operand 3, single buffered']
    #allocation6 [shape = 's32[1]{0}', space=sflag, size = 0x4, scoped, tag = 'scoped memory for fwd.1']
    #allocation7 [shape = 'u8[24576]{0}', space=vmem, size = 0x6000, scoped, tag = 'input window, operand 4, single buffered']
    #allocation8 [shape = 'u8[196608]{0}', space=vmem, size = 0x30000, scoped, tag = 'input window, operand 5, single buffered']
    #allocation9 [shape = 's32[1]{0}', space=sflag, size = 0x4, scoped, tag = 'scoped memory for fwd.1']
    #allocation10 [shape = 'u8[512]{0}', space=vmem, size = 0x400, scoped, tag = 'input window, operand 6, single buffered']
    #allocation11 [shape = 'u8[24576]{0}', space=vmem, size = 0x6000, scoped, tag = 'input window, operand 7, single buffered']
    #allocation12 [shape = 's32[1]{0}', space=sflag, size = 0x4, scoped, tag = 'scoped memory for fwd.1']
    #allocation13 [shape = 'u8[196608]{0}', space=vmem, size = 0x30000, scoped, tag = 'input window, operand 8, single buffered']
    #allocation14 [shape = 'u8[512]{0}', space=vmem, size = 0x400, scoped, tag = 'input window, operand 9, single buffered']
    #allocation15 [shape = 's32[1]{0}', space=sflag, size = 0x4, scoped, tag = 'scoped memory for fwd.1']
    #allocation16 [shape = 'u8[8192]{0}', space=vmem, size = 0x2000, scoped, tag = 'input window, operand 10, single buffered']
    #allocation17 [shape = 'u8[65536]{0}', space=vmem, size = 0x10000, scoped, tag = 'input window, operand 11, single buffered']
    #allocation18 [shape = 's32[1]{0}', space=sflag, size = 0x4, scoped, tag = 'scoped memory for fwd.1']
    #allocation19 [shape = 'u8[512]{0}', space=vmem, size = 0x400, scoped, tag = 'input window, operand 12, single buffered']
    #allocation20 [shape = 'u8[12288]{0}', space=vmem, size = 0x3000, scoped, tag = 'input window, operand 13, single buffered']
    #allocation21 [shape = 's32[1]{0}', space=sflag, size = 0x4, scoped, tag = 'scoped memory for fwd.1']
    #allocation22 [shape = 'u8[196608]{0}', space=vmem, size = 0x30000, scoped, tag = 'input window, operand 14, single buffered']
    #allocation23 [shape = 'u8[512]{0}', space=vmem, size = 0x400, scoped, tag = 'input window, operand 15, single buffered']
    #allocation24 [shape = 's32[1]{0}', space=sflag, size = 0x4, scoped, tag = 'scoped memory for fwd.1']
    #allocation25 [shape = 'u8[12288]{0}', space=vmem, size = 0x3000, scoped, tag = 'input window, operand 16, single buffered']
    #allocation26 [shape = 'u8[196608]{0}', space=vmem, size = 0x30000, scoped, tag = 'input window, operand 17, single buffered']
    #allocation27 [shape = 's32[1]{0}', space=sflag, size = 0x4, scoped, tag = 'scoped memory for fwd.1']
    #allocation28 [shape = 'u8[512]{0}', space=vmem, size = 0x400, scoped, tag = 'input window, operand 18, single buffered']
    #allocation29 [shape = 'u8[4096]{0}', space=vmem, size = 0x1000, scoped, tag = 'input window, operand 19, single buffered']
    #allocation30 [shape = 's32[1]{0}', space=sflag, size = 0x4, scoped, tag = 'scoped memory for fwd.1']
    #allocation31 [shape = 'u8[65536]{0}', space=vmem, size = 0x10000, scoped, tag = 'input window, operand 20, single buffered']
    #allocation32 [shape = 'u8[512]{0}', space=vmem, size = 0x400, scoped, tag = 'input window, operand 21, single buffered']
    #allocation33 [shape = 's32[1]{0}', space=sflag, size = 0x4, scoped, tag = 'scoped memory for fwd.1']
    #allocation34 [shape = 'u8[4096]{0}', space=vmem, size = 0x1000, scoped, tag = 'input window, operand 22, single buffered']
    #allocation35 [shape = 'u8[1024]{0}', space=vmem, size = 0x400, scoped, tag = 'output window, operand 0, single buffered']
    #allocation36 [shape = 'u8[1024]{0}', space=vmem, size = 0x400, scoped, tag = 'output window, operand 1, single buffered']
    #allocation37 [shape = 's32[1]{0}', space=sflag, size = 0x4, scoped, tag = 'scoped memory for fwd.1']
    %34 = vsyncpa [#allocation3], 0
    %35 = vsyncpa [#allocation6], 0
    %36 = vsyncpa [#allocation9], 0
    %37 = vsyncpa [#allocation12], 0
    %38 = vsyncpa [#allocation15], 0
    %39 = vsyncpa [#allocation18], 0
    %40 = vsyncpa [#allocation21], 0
    %41 = vsyncpa [#allocation24], 0
    %42 = vsyncpa [#allocation27], 0
    %43 = vsyncpa [#allocation30], 0
    %44 = vsyncpa [#allocation33], 0
    %45 = vsyncpa [#allocation4], 0
    %46 = vsyncpa [#allocation37], 0
    // Predicated region
    $region2: #{fwd.1} parent=1 // pred_check
      _
    $region3: #{fwd.1} parent=1 // pred_check_branch
      %48 = sbr.rel (0) target = $region5
    $region4: #{fwd.1} parent=1 // pred_region
      _
    $region5: #{fwd.1} parent=1 // pred_fallthru
      _
    // Predicated region
    $region6: #{fwd.1} parent=1 // pred_check
      _
    $region7: #{fwd.1} parent=1 // pred_check_branch
      %50 = sbr.rel (0) target = $region9
    $region8: #{fwd.1} parent=1 // pred_region
      _
    $region9: #{fwd.1} parent=1 // pred_fallthru
      _
    // Predicated region
    $region10: #{fwd.1} parent=1 // pred_check
      _
    $region11: #{fwd.1} parent=1 // pred_check_branch
      %52 = sbr.rel (0) target = $region13
    $region12: #{fwd.1} parent=1 // pred_region
      %s54 = ssub.s32 3072, 3072
      %55 = vsyncadd [#allocation3], %s54
      %s56 = sshll.u32 [#allocation2], 4
      %s57 = int_to_ptr.vmem [resolvable:$true] %s56
      %62 = dma.hbm_to_vmem [thread:$0]  %s2, 3072, %s57, [#allocation3], 128, 128, 8
    $region13: #{fwd.1} parent=1 // pred_fallthru
      _
    // Predicated region
    $region14: #{fwd.1} parent=1 // pred_check
      _
    $region15: #{fwd.1} parent=1 // pred_check_branch
      %64 = sbr.rel (0) target = $region17
    $region16: #{fwd.1} parent=1 // pred_region
      %s66 = ssub.s32 16, 16
      %67 = vsyncadd [#allocation6], %s66
      %s69 = sshll.u32 [#allocation5], 4
      %s70 = int_to_ptr.vmem [resolvable:$true] %s69
      %72 = dma.hbm_to_vmem [thread:$0]  %s3, 16, %s70, [#allocation6]
    $region17: #{fwd.1} parent=1 // pred_fallthru
      _
    // Predicated region
    $region18: #{fwd.1} parent=1 // pred_check
      _
    $region19: #{fwd.1} parent=1 // pred_check_branch
      %74 = sbr.rel (0) target = $region21
    $region20: #{fwd.1} parent=1 // pred_region
      %s76 = ssub.s32 768, 768
      %77 = vsyncadd [#allocation6], %s76
      %s78 = sshll.u32 [#allocation7], 4
      %s79 = int_to_ptr.vmem [resolvable:$true] %s78
      %84 = dma.hbm_to_vmem [thread:$0]  %s4, 768, %s79, [#allocation6], 128, 128, 8
    $region21: #{fwd.1} parent=1 // pred_fallthru
      _
    // Predicated region
    $region22: #{fwd.1} parent=1 // pred_check
      _
    $region23: #{fwd.1} parent=1 // pred_check_branch
      %86 = sbr.rel (0) target = $region25
    $region24: #{fwd.1} parent=1 // pred_region
      %s88 = ssub.s32 6144, 6144
      %89 = vsyncadd [#allocation9], %s88
      %s90 = sshll.u32 [#allocation8], 4
      %s91 = int_to_ptr.vmem [resolvable:$true] %s90
      %96 = dma.hbm_to_vmem [thread:$0]  %s5, 6144, %s91, [#allocation9], 128, 128, 8
    $region25: #{fwd.1} parent=1 // pred_fallthru
      _
    // Predicated region
    $region26: #{fwd.1} parent=1 // pred_check
      _
    $region27: #{fwd.1} parent=1 // pred_check_branch
      %98 = sbr.rel (0) target = $region29
    $region28: #{fwd.1} parent=1 // pred_region
      %s100 = ssub.s32 16, 16
      %101 = vsyncadd [#allocation9], %s100
      %s103 = sshll.u32 [#allocation10], 4
      %s104 = int_to_ptr.vmem [resolvable:$true] %s103
      %106 = dma.hbm_to_vmem [thread:$0]  %s6, 16, %s104, [#allocation9]
    $region29: #{fwd.1} parent=1 // pred_fallthru
      _
    // Predicated region
    $region30: #{fwd.1} parent=1 // pred_check
      _
    $region31: #{fwd.1} parent=1 // pred_check_branch
      %108 = sbr.rel (0) target = $region33
    $region32: #{fwd.1} parent=1 // pred_region
      %s110 = ssub.s32 768, 768
      %111 = vsyncadd [#allocation12], %s110
      %s112 = sshll.u32 [#allocation11], 4
      %s113 = int_to_ptr.vmem [resolvable:$true] %s112
      %118 = dma.hbm_to_vmem [thread:$0]  %s7, 768, %s113, [#allocation12], 128, 128, 8
    $region33: #{fwd.1} parent=1 // pred_fallthru
      _
    // Predicated region
    $region34: #{fwd.1} parent=1 // pred_check
      _
    $region35: #{fwd.1} parent=1 // pred_check_branch
      %120 = sbr.rel (0) target = $region37
    $region36: #{fwd.1} parent=1 // pred_region
      %s122 = ssub.s32 6144, 6144
      %123 = vsyncadd [#allocation12], %s122
      %s124 = sshll.u32 [#allocation13], 4
      %s125 = int_to_ptr.vmem [resolvable:$true] %s124
      %130 = dma.hbm_to_vmem [thread:$0]  %s8, 6144, %s125, [#allocation12], 128, 128, 8
    $region37: #{fwd.1} parent=1 // pred_fallthru
      _
    // Predicated region
    $region38: #{fwd.1} parent=1 // pred_check
      _
    $region39: #{fwd.1} parent=1 // pred_check_branch
      %132 = sbr.rel (0) target = $region41
    $region40: #{fwd.1} parent=1 // pred_region
      %s134 = ssub.s32 16, 16
      %135 = vsyncadd [#allocation15], %s134
      %s137 = sshll.u32 [#allocation14], 4
      %s138 = int_to_ptr.vmem [resolvable:$true] %s137
      %140 = dma.hbm_to_vmem [thread:$0]  %s9, 16, %s138, [#allocation15]
    $region41: #{fwd.1} parent=1 // pred_fallthru
      _
    // Predicated region
    $region42: #{fwd.1} parent=1 // pred_check
      _
    $region43: #{fwd.1} parent=1 // pred_check_branch
      %142 = sbr.rel (0) target = $region45
    $region44: #{fwd.1} parent=1 // pred_region
      %s144 = ssub.s32 256, 256
      %145 = vsyncadd [#allocation15], %s144
      %s146 = sshll.u32 [#allocation16], 4
      %s147 = int_to_ptr.vmem [resolvable:$true] %s146
      %152 = dma.hbm_to_vmem [thread:$0]  %s10, 256, %s147, [#allocation15], 128, 128, 8
    $region45: #{fwd.1} parent=1 // pred_fallthru
      _
    // Predicated region
    $region46: #{fwd.1} parent=1 // pred_check
      _
    $region47: #{fwd.1} parent=1 // pred_check_branch
      %154 = sbr.rel (0) target = $region49
    $region48: #{fwd.1} parent=1 // pred_region
      %s156 = ssub.s32 2048, 2048
      %157 = vsyncadd [#allocation18], %s156
      %s158 = sshll.u32 [#allocation17], 4
      %s159 = int_to_ptr.vmem [resolvable:$true] %s158
      %164 = dma.hbm_to_vmem [thread:$0]  %s11, 2048, %s159, [#allocation18], 128, 128, 8
    $region49: #{fwd.1} parent=1 // pred_fallthru
      _
    // Predicated region
    $region50: #{fwd.1} parent=1 // pred_check
      _
    $region51: #{fwd.1} parent=1 // pred_check_branch
      %166 = sbr.rel (0) target = $region53
    $region52: #{fwd.1} parent=1 // pred_region
      %s168 = ssub.s32 16, 16
      %169 = vsyncadd [#allocation18], %s168
      %s171 = sshll.u32 [#allocation19], 4
      %s172 = int_to_ptr.vmem [resolvable:$true] %s171
      %174 = dma.hbm_to_vmem [thread:$0]  %s12, 16, %s172, [#allocation18]
    $region53: #{fwd.1} parent=1 // pred_fallthru
      _
    // Predicated region
    $region54: #{fwd.1} parent=1 // pred_check
      _
    $region55: #{fwd.1} parent=1 // pred_check_branch
      %176 = sbr.rel (0) target = $region57
    $region56: #{fwd.1} parent=1 // pred_region
      %s178 = ssub.s32 384, 384
      %179 = vsyncadd [#allocation21], %s178
      %s180 = sshll.u32 [#allocation20], 4
      %s181 = int_to_ptr.vmem [resolvable:$true] %s180
      %186 = dma.hbm_to_vmem [thread:$0]  %s13, 384, %s181, [#allocation21], 128, 128, 8
    $region57: #{fwd.1} parent=1 // pred_fallthru
      _
    // Predicated region
    $region58: #{fwd.1} parent=1 // pred_check
      _
    $region59: #{fwd.1} parent=1 // pred_check_branch
      %188 = sbr.rel (0) target = $region61
    $region60: #{fwd.1} parent=1 // pred_region
      %s190 = ssub.s32 6144, 6144
      %191 = vsyncadd [#allocation21], %s190
      %s192 = sshll.u32 [#allocation22], 4
      %s193 = int_to_ptr.vmem [resolvable:$true] %s192
      %198 = dma.hbm_to_vmem [thread:$0]  %s14, 6144, %s193, [#allocation21], 128, 128, 8
    $region61: #{fwd.1} parent=1 // pred_fallthru
      _
    // Predicated region
    $region62: #{fwd.1} parent=1 // pred_check
      _
    $region63: #{fwd.1} parent=1 // pred_check_branch
      %200 = sbr.rel (0) target = $region65
    $region64: #{fwd.1} parent=1 // pred_region
      %s202 = ssub.s32 16, 16
      %203 = vsyncadd [#allocation24], %s202
      %s205 = sshll.u32 [#allocation23], 4
      %s206 = int_to_ptr.vmem [resolvable:$true] %s205
      %208 = dma.hbm_to_vmem [thread:$0]  %s15, 16, %s206, [#allocation24]
    $region65: #{fwd.1} parent=1 // pred_fallthru
      _
    // Predicated region
    $region66: #{fwd.1} parent=1 // pred_check
      _
    $region67: #{fwd.1} parent=1 // pred_check_branch
      %210 = sbr.rel (0) target = $region69
    $region68: #{fwd.1} parent=1 // pred_region
      %s212 = ssub.s32 384, 384
      %213 = vsyncadd [#allocation24], %s212
      %s214 = sshll.u32 [#allocation25], 4
      %s215 = int_to_ptr.vmem [resolvable:$true] %s214
      %220 = dma.hbm_to_vmem [thread:$0]  %s16, 384, %s215, [#allocation24], 128, 128, 8
    $region69: #{fwd.1} parent=1 // pred_fallthru
      _
    // Predicated region
    $region70: #{fwd.1} parent=1 // pred_check
      _
    $region71: #{fwd.1} parent=1 // pred_check_branch
      %222 = sbr.rel (0) target = $region73
    $region72: #{fwd.1} parent=1 // pred_region
      %s224 = ssub.s32 6144, 6144
      %225 = vsyncadd [#allocation27], %s224
      %s226 = sshll.u32 [#allocation26], 4
      %s227 = int_to_ptr.vmem [resolvable:$true] %s226
      %232 = dma.hbm_to_vmem [thread:$0]  %s17, 6144, %s227, [#allocation27], 128, 128, 8
    $region73: #{fwd.1} parent=1 // pred_fallthru
      _
    // Predicated region
    $region74: #{fwd.1} parent=1 // pred_check
      _
    $region75: #{fwd.1} parent=1 // pred_check_branch
      %234 = sbr.rel (0) target = $region77
    $region76: #{fwd.1} parent=1 // pred_region
      %s236 = ssub.s32 16, 16
      %237 = vsyncadd [#allocation27], %s236
      %s239 = sshll.u32 [#allocation28], 4
      %s240 = int_to_ptr.vmem [resolvable:$true] %s239
      %242 = dma.hbm_to_vmem [thread:$0]  %s18, 16, %s240, [#allocation27]
    $region77: #{fwd.1} parent=1 // pred_fallthru
      _
    // Predicated region
    $region78: #{fwd.1} parent=1 // pred_check
      _
    $region79: #{fwd.1} parent=1 // pred_check_branch
      %244 = sbr.rel (0) target = $region81
    $region80: #{fwd.1} parent=1 // pred_region
      %s246 = ssub.s32 128, 128
      %247 = vsyncadd [#allocation30], %s246
      %s249 = sshll.u32 [#allocation29], 4
      %s250 = int_to_ptr.vmem [resolvable:$true] %s249
      %252 = dma.hbm_to_vmem [thread:$0]  %s19, 128, %s250, [#allocation30]
    $region81: #{fwd.1} parent=1 // pred_fallthru
      _
    // Predicated region
    $region82: #{fwd.1} parent=1 // pred_check
      _
    $region83: #{fwd.1} parent=1 // pred_check_branch
      %254 = sbr.rel (0) target = $region85
    $region84: #{fwd.1} parent=1 // pred_region
      %s256 = ssub.s32 2048, 2048
      %257 = vsyncadd [#allocation30], %s256
      %s258 = sshll.u32 [#allocation31], 4
      %s259 = int_to_ptr.vmem [resolvable:$true] %s258
      %264 = dma.hbm_to_vmem [thread:$0]  %s20, 2048, %s259, [#allocation30], 128, 128, 8
    $region85: #{fwd.1} parent=1 // pred_fallthru
      _
    // Predicated region
    $region86: #{fwd.1} parent=1 // pred_check
      _
    $region87: #{fwd.1} parent=1 // pred_check_branch
      %266 = sbr.rel (0) target = $region89
    $region88: #{fwd.1} parent=1 // pred_region
      %s268 = ssub.s32 16, 16
      %269 = vsyncadd [#allocation33], %s268
      %s271 = sshll.u32 [#allocation32], 4
      %s272 = int_to_ptr.vmem [resolvable:$true] %s271
      %274 = dma.hbm_to_vmem [thread:$0]  %s21, 16, %s272, [#allocation33]
    $region89: #{fwd.1} parent=1 // pred_fallthru
      _
    // Predicated region
    $region90: #{fwd.1} parent=1 // pred_check
      _
    $region91: #{fwd.1} parent=1 // pred_check_branch
      %276 = sbr.rel (0) target = $region93
    $region92: #{fwd.1} parent=1 // pred_region
      %s278 = ssub.s32 128, 128
      %279 = vsyncadd [#allocation33], %s278
      %s280 = sshll.u32 [#allocation34], 4
      %s281 = int_to_ptr.vmem [resolvable:$true] %s280
      %286 = dma.hbm_to_vmem [thread:$0]  %s22, 128, %s281, [#allocation33], 32, 32, 2
    $region93: #{fwd.1} parent=1 // pred_fallthru
      _
    // Predicated region
    $region94: #{fwd.1} parent=1 // pred_check
      _
    $region95: #{fwd.1} parent=1 // pred_check_branch
      %288 = sbr.rel (0) target = $region97
    $region96: #{fwd.1} parent=1 // pred_region
      _
    $region97: #{fwd.1} parent=1 // pred_fallthru
      _
    // Predicated region
    $region98: #{fwd.1} parent=1 // pred_check
      _
    $region99: #{fwd.1} parent=1 // pred_check_branch
      %290 = sbr.rel (0) target = $region101
    $region100: #{fwd.1} parent=1 // pred_region
      _
    $region101: #{fwd.1} parent=1 // pred_fallthru
      _
    // Predicated region
    $region102: #{fwd.1} parent=1 // pred_check
      _
    $region103: #{fwd.1} parent=1 // pred_check_branch
      %292 = sbr.rel (0) target = $region105
    $region104: #{fwd.1} parent=1 // pred_region
      _
    $region105: #{fwd.1} parent=1 // pred_fallthru
      _
    // Predicated region
    $region106: #{fwd.1} parent=1 // pred_check
      _
    $region107: #{fwd.1} parent=1 // pred_check_branch
      %294 = sbr.rel (0) target = $region109
    $region108: #{fwd.1} parent=1 // pred_region
      _
    $region109: #{fwd.1} parent=1 // pred_fallthru
      _
    // Predicated region
    $region110: #{fwd.1} parent=1 // pred_check
      _
    $region111: #{fwd.1} parent=1 // pred_check_branch
      %296 = sbr.rel (0) target = $region113
    $region112: #{fwd.1} parent=1 // pred_region
      %297 = dma.done [#allocation3], 3072
    $region113: #{fwd.1} parent=1 // pred_fallthru
      _
    // Predicated region
    $region114: #{fwd.1} parent=1 // pred_check
      _
    $region115: #{fwd.1} parent=1 // pred_check_branch
      %299 = sbr.rel (0) target = $region117
    $region116: #{fwd.1} parent=1 // pred_region
      %300 = dma.done [#allocation6], 16
    $region117: #{fwd.1} parent=1 // pred_fallthru
      _
    // Predicated region
    $region118: #{fwd.1} parent=1 // pred_check
      _
    $region119: #{fwd.1} parent=1 // pred_check_branch
      %302 = sbr.rel (0) target = $region121
    $region120: #{fwd.1} parent=1 // pred_region
      %303 = dma.done [#allocation6], 768
    $region121: #{fwd.1} parent=1 // pred_fallthru
      _
    // Predicated region
    $region122: #{fwd.1} parent=1 // pred_check
      _
    $region123: #{fwd.1} parent=1 // pred_check_branch
      %305 = sbr.rel (0) target = $region125
    $region124: #{fwd.1} parent=1 // pred_region
      %306 = dma.done [#allocation9], 6144
    $region125: #{fwd.1} parent=1 // pred_fallthru
      _
    // Predicated region
    $region126: #{fwd.1} parent=1 // pred_check
      _
    $region127: #{fwd.1} parent=1 // pred_check_branch
      %308 = sbr.rel (0) target = $region129
    $region128: #{fwd.1} parent=1 // pred_region
      %309 = dma.done [#allocation9], 16
    $region129: #{fwd.1} parent=1 // pred_fallthru
      _
    // Predicated region
    $region130: #{fwd.1} parent=1 // pred_check
      _
    $region131: #{fwd.1} parent=1 // pred_check_branch
      %311 = sbr.rel (0) target = $region133
    $region132: #{fwd.1} parent=1 // pred_region
      %312 = dma.done [#allocation12], 768
    $region133: #{fwd.1} parent=1 // pred_fallthru
      _
    // Predicated region
    $region134: #{fwd.1} parent=1 // pred_check
      _
    $region135: #{fwd.1} parent=1 // pred_check_branch
      %314 = sbr.rel (0) target = $region137
    $region136: #{fwd.1} parent=1 // pred_region
      %315 = dma.done [#allocation12], 6144
    $region137: #{fwd.1} parent=1 // pred_fallthru
      _
    // Predicated region
    $region138: #{fwd.1} parent=1 // pred_check
      _
    $region139: #{fwd.1} parent=1 // pred_check_branch
      %317 = sbr.rel (0) target = $region141
    $region140: #{fwd.1} parent=1 // pred_region
      %318 = dma.done [#allocation15], 16
    $region141: #{fwd.1} parent=1 // pred_fallthru
      _
    // Predicated region
    $region142: #{fwd.1} parent=1 // pred_check
      _
    $region143: #{fwd.1} parent=1 // pred_check_branch
      %320 = sbr.rel (0) target = $region145
    $region144: #{fwd.1} parent=1 // pred_region
      %321 = dma.done [#allocation15], 256
    $region145: #{fwd.1} parent=1 // pred_fallthru
      _
    // Predicated region
    $region146: #{fwd.1} parent=1 // pred_check
      _
    $region147: #{fwd.1} parent=1 // pred_check_branch
      %323 = sbr.rel (0) target = $region149
    $region148: #{fwd.1} parent=1 // pred_region
      %324 = dma.done [#allocation18], 2048
    $region149: #{fwd.1} parent=1 // pred_fallthru
      _
    // Predicated region
    $region150: #{fwd.1} parent=1 // pred_check
      _
    $region151: #{fwd.1} parent=1 // pred_check_branch
      %326 = sbr.rel (0) target = $region153
    $region152: #{fwd.1} parent=1 // pred_region
      %327 = dma.done [#allocation18], 16
    $region153: #{fwd.1} parent=1 // pred_fallthru
      _
    // Predicated region
    $region154: #{fwd.1} parent=1 // pred_check
      _
    $region155: #{fwd.1} parent=1 // pred_check_branch
      %329 = sbr.rel (0) target = $region157
    $region156: #{fwd.1} parent=1 // pred_region
      %330 = dma.done [#allocation21], 384
    $region157: #{fwd.1} parent=1 // pred_fallthru
      _
    // Predicated region
    $region158: #{fwd.1} parent=1 // pred_check
      _
    $region159: #{fwd.1} parent=1 // pred_check_branch
      %332 = sbr.rel (0) target = $region161
    $region160: #{fwd.1} parent=1 // pred_region
      %333 = dma.done [#allocation21], 6144
    $region161: #{fwd.1} parent=1 // pred_fallthru
      _
    // Predicated region
    $region162: #{fwd.1} parent=1 // pred_check
      _
    $region163: #{fwd.1} parent=1 // pred_check_branch
      %335 = sbr.rel (0) target = $region165
    $region164: #{fwd.1} parent=1 // pred_region
      %336 = dma.done [#allocation24], 16
    $region165: #{fwd.1} parent=1 // pred_fallthru
      _
    // Predicated region
    $region166: #{fwd.1} parent=1 // pred_check
      _
    $region167: #{fwd.1} parent=1 // pred_check_branch
      %338 = sbr.rel (0) target = $region169
    $region168: #{fwd.1} parent=1 // pred_region
      %339 = dma.done [#allocation24], 384
    $region169: #{fwd.1} parent=1 // pred_fallthru
      _
    // Predicated region
    $region170: #{fwd.1} parent=1 // pred_check
      _
    $region171: #{fwd.1} parent=1 // pred_check_branch
      %341 = sbr.rel (0) target = $region173
    $region172: #{fwd.1} parent=1 // pred_region
      %342 = dma.done [#allocation27], 6144
    $region173: #{fwd.1} parent=1 // pred_fallthru
      _
    // Predicated region
    $region174: #{fwd.1} parent=1 // pred_check
      _
    $region175: #{fwd.1} parent=1 // pred_check_branch
      %344 = sbr.rel (0) target = $region177
    $region176: #{fwd.1} parent=1 // pred_region
      %345 = dma.done [#allocation27], 16
    $region177: #{fwd.1} parent=1 // pred_fallthru
      _
    // Predicated region
    $region178: #{fwd.1} parent=1 // pred_check
      _
    $region179: #{fwd.1} parent=1 // pred_check_branch
      %347 = sbr.rel (0) target = $region181
    $region180: #{fwd.1} parent=1 // pred_region
      %348 = dma.done [#allocation30], 128
    $region181: #{fwd.1} parent=1 // pred_fallthru
      _
    // Predicated region
    $region182: #{fwd.1} parent=1 // pred_check
      _
    $region183: #{fwd.1} parent=1 // pred_check_branch
      %350 = sbr.rel (0) target = $region185
    $region184: #{fwd.1} parent=1 // pred_region
      %351 = dma.done [#allocation30], 2048
    $region185: #{fwd.1} parent=1 // pred_fallthru
      _
    // Predicated region
    $region186: #{fwd.1} parent=1 // pred_check
      _
    $region187: #{fwd.1} parent=1 // pred_check_branch
      %353 = sbr.rel (0) target = $region189
    $region188: #{fwd.1} parent=1 // pred_region
      %354 = dma.done [#allocation33], 16
    $region189: #{fwd.1} parent=1 // pred_fallthru
      _
    // Predicated region
    $region190: #{fwd.1} parent=1 // pred_check
      _
    $region191: #{fwd.1} parent=1 // pred_check_branch
      %356 = sbr.rel (0) target = $region193
    $region192: #{fwd.1} parent=1 // pred_region
      %357 = dma.done [#allocation33], 128
    $region193: #{fwd.1} parent=1 // pred_fallthru
      _
    %v358 = vld [vmem:[%s0] sm:$0xff]
    %v359 = vld [vmem:[%s0 + $0x8] sm:$0xff]
    %v360 = vld [vmem:[%s0 + $0x10] sm:$0xff]
    %v361 = vld [vmem:[%s0 + $0x18] sm:$0xff]
    %v362 = vld [vmem:[%s1] sm:$0xff]
    %v363 = vld [vmem:[%s1 + $0x8] sm:$0xff]
    %v364 = vld [vmem:[%s1 + $0x10] sm:$0xff]
    %v365 = vld [vmem:[%s1 + $0x18] sm:$0xff]
    %vm366 = vcmask 261120
    %v368 = vsel %vm366, %v362, 0
    %v371 = vsel %vm366, %v363, 0
    %v374 = vsel %vm366, %v364, 0
    %v377 = vsel %vm366, %v365, 0
    %379 = vmatprep.subr.mxu0 0.0
    %380 = vmatpush1.msra.mxu0 %v358
    %381 = vmatprep.subr.mxu0 0.0
    %382 = vmatpush1.msra.mxu0 %v359
    %383 = vmatprep.subr.mxu0 0.0
    %384 = vmatpush1.msra.mxu0 %v360
    %385 = vmatprep.subr.mxu0 0.0
    %386 = vmatpush1.msra.mxu0 %v361
    %387 = vmatprep.subr.mxu0 0.0
    %388 = vmatpush1.msra.mxu0 0.0
    %389 = vmatprep.subr.mxu0 0.0
    %390 = vmatpush1.msra.mxu0 0.0
    %391 = vmatprep.subr.mxu0 0.0
    %392 = vmatpush1.msra.mxu0 0.0
    %393 = vmatprep.subr.mxu0 0.0
    %394 = vmatpush1.msra.mxu0 0.0
    %395 = vmatprep.subr.mxu0 0.0
    %396 = vmatpush1.msra.mxu0 0.0
    %397 = vmatprep.subr.mxu0 0.0
    %398 = vmatpush1.msra.mxu0 0.0
    %399 = vmatprep.subr.mxu0 0.0
    %400 = vmatpush1.msra.mxu0 0.0
    %401 = vmatprep.subr.mxu0 0.0
    %402 = vmatpush1.msra.mxu0 0.0
    %403 = vmatprep.subr.mxu0 0.0
    %404 = vmatpush1.msra.mxu0 0.0
    %405 = vmatprep.subr.mxu0 0.0
    %406 = vmatpush1.msra.mxu0 0.0
    %407 = vmatprep.subr.mxu0 0.0
    %408 = vmatpush1.msra.mxu0 0.0
    %409 = vmatprep.subr.mxu0 0.0
    %410 = vmatpush1.msra.mxu0 0.0
    %411 = vmatprep.subr.mxu0 0.0
    %412 = vmatpush1.msra.mxu0 0.0
    %413 = vmatprep.subr.mxu0 0.0
    %414 = vmatpush1.msra.mxu0 0.0
    %415 = vmatprep.subr.mxu0 0.0
    %416 = vmatpush1.msra.mxu0 0.0
    %417 = vmatprep.subr.mxu0 0.0
    %418 = vmatpush1.msra.mxu0 0.0
    %419 = vmatprep.subr.mxu0 0.0
    %420 = vmatpush1.msra.mxu0 0.0
    %421 = vmatprep.subr.mxu0 0.0
    %422 = vmatpush1.msra.mxu0 0.0
    %423 = vmatprep.subr.mxu0 0.0
    %424 = vmatpush1.msra.mxu0 0.0
    %425 = vmatprep.subr.mxu0 0.0
    %426 = vmatpush1.msra.mxu0 0.0
    %427 = vmatprep.subr.mxu0 0.0
    %428 = vmatpush1.msra.mxu0 0.0
    %429 = vmatprep.subr.mxu0 0.0
    %430 = vmatpush1.msra.mxu0 0.0
    %431 = vmatprep.subr.mxu0 0.0
    %432 = vmatpush1.msra.mxu0 0.0
    %433 = vmatprep.subr.mxu0 0.0
    %434 = vmatpush1.msra.mxu0 0.0
    %435 = vmatprep.subr.mxu0 0.0
    %436 = vmatpush1.msra.mxu0 0.0
    %437 = vmatprep.subr.mxu0 0.0
    %438 = vmatpush1.msra.mxu0 0.0
    %439 = vmatprep.subr.mxu0 0.0
    %440 = vmatpush1.msra.mxu0 0.0
    %441 = vmatprep.subr.mxu0 0.0
    %442 = vmatpush1.msra.mxu0 0.0
    %443 = vmatprep.mubr.f32.mxu0 0.0
    %444 = vmatmul.mubr.f32.gmra.mrb[0].mxu0 %v368
    %v445 = vpop.f32.mrb[0].mxu0
    %v446 = vadd.f32 0.0, %v445
    %v447 = vpop.f32.mrb[0].mxu0
    %448 = vmatprep.mubr.f32.mxu0 0.0
    %449 = vmatmul.mubr.f32.gmra.mrb[0].mxu0 %v371
    %v450 = vpop.f32.mrb[0].mxu0
    %v451 = vadd.f32 0.0, %v450
    %v452 = vpop.f32.mrb[0].mxu0
    %453 = vmatprep.mubr.f32.mxu0 0.0
    %454 = vmatmul.mubr.f32.gmra.mrb[0].mxu0 %v374
    %v455 = vpop.f32.mrb[0].mxu0
    %v456 = vadd.f32 0.0, %v455
    %v457 = vpop.f32.mrb[0].mxu0
    %458 = vmatprep.mubr.f32.mxu0 0.0
    %459 = vmatmul.mubr.f32.gmra.mrb[0].mxu0 %v377
    %v460 = vpop.f32.mrb[0].mxu0
    %v461 = vadd.f32 0.0, %v460
    %v462 = vpop.f32.mrb[0].mxu0
    %463 = vdwg.mxu0
    %v464 = vld [vmem:[#allocation2] sm:$0xff]
    %v465 = vld [vmem:[#allocation2 + $0x8] sm:$0xff]
    %v466 = vld [vmem:[#allocation2 + $0x10] sm:$0xff]
    %v467 = vld [vmem:[#allocation2 + $0x18] sm:$0xff]
    %v468 = vld [vmem:[#allocation2 + $0x20] sm:$0xff]
    %v469 = vld [vmem:[#allocation2 + $0x28] sm:$0xff]
    %v470 = vld [vmem:[#allocation2 + $0x30] sm:$0xff]
    %v471 = vld [vmem:[#allocation2 + $0x38] sm:$0xff]
    %s472 = scalar_lea.vmem %s1, 32
    %v473 = vld [vmem:[%s472] sm:$0xff]
    %v474 = vld [vmem:[%s472 + $0x8] sm:$0xff]
    %v475 = vld [vmem:[%s472 + $0x10] sm:$0xff]
    %v476 = vld [vmem:[%s472 + $0x18] sm:$0xff]
    %v478 = vsel %vm366, %v473, 0
    %v481 = vsel %vm366, %v474, 0
    %v484 = vsel %vm366, %v475, 0
    %v487 = vsel %vm366, %v476, 0
    %489 = vmatprep.subr.mxu0 0.0
    %490 = vmatpush1.msra.mxu0 %v358
    %491 = vmatprep.subr.mxu0 0.0
    %492 = vmatpush1.msra.mxu0 %v359
    %493 = vmatprep.subr.mxu0 0.0
    %494 = vmatpush1.msra.mxu0 %v360
    %495 = vmatprep.subr.mxu0 0.0
    %496 = vmatpush1.msra.mxu0 %v361
    %497 = vmatprep.subr.mxu0 0.0
    %498 = vmatpush1.msra.mxu0 0.0
    %499 = vmatprep.subr.mxu0 0.0
    %500 = vmatpush1.msra.mxu0 0.0
    %501 = vmatprep.subr.mxu0 0.0
    %502 = vmatpush1.msra.mxu0 0.0
    %503 = vmatprep.subr.mxu0 0.0
    %504 = vmatpush1.msra.mxu0 0.0
    %505 = vmatprep.subr.mxu0 0.0
    %506 = vmatpush1.msra.mxu0 0.0
    %507 = vmatprep.subr.mxu0 0.0
    %508 = vmatpush1.msra.mxu0 0.0
    %509 = vmatprep.subr.mxu0 0.0
    %510 = vmatpush1.msra.mxu0 0.0
    %511 = vmatprep.subr.mxu0 0.0
    %512 = vmatpush1.msra.mxu0 0.0
    %513 = vmatprep.subr.mxu0 0.0
    %514 = vmatpush1.msra.mxu0 0.0
    %515 = vmatprep.subr.mxu0 0.0
    %516 = vmatpush1.msra.mxu0 0.0
    %517 = vmatprep.subr.mxu0 0.0
    %518 = vmatpush1.msra.mxu0 0.0
    %519 = vmatprep.subr.mxu0 0.0
    %520 = vmatpush1.msra.mxu0 0.0
    %521 = vmatprep.subr.mxu0 0.0
    %522 = vmatpush1.msra.mxu0 0.0
    %523 = vmatprep.subr.mxu0 0.0
    %524 = vmatpush1.msra.mxu0 0.0
    %525 = vmatprep.subr.mxu0 0.0
    %526 = vmatpush1.msra.mxu0 0.0
    %527 = vmatprep.subr.mxu0 0.0
    %528 = vmatpush1.msra.mxu0 0.0
    %529 = vmatprep.subr.mxu0 0.0
    %530 = vmatpush1.msra.mxu0 0.0
    %531 = vmatprep.subr.mxu0 0.0
    %532 = vmatpush1.msra.mxu0 0.0
    %533 = vmatprep.subr.mxu0 0.0
    %534 = vmatpush1.msra.mxu0 0.0
    %535 = vmatprep.subr.mxu0 0.0
    %536 = vmatpush1.msra.mxu0 0.0
    %537 = vmatprep.subr.mxu0 0.0
    %538 = vmatpush1.msra.mxu0 0.0
    %539 = vmatprep.subr.mxu0 0.0
    %540 = vmatpush1.msra.mxu0 0.0
    %541 = vmatprep.subr.mxu0 0.0
    %542 = vmatpush1.msra.mxu0 0.0
    %543 = vmatprep.subr.mxu0 0.0
    %544 = vmatpush1.msra.mxu0 0.0
    %545 = vmatprep.subr.mxu0 0.0
    %546 = vmatpush1.msra.mxu0 0.0
    %547 = vmatprep.subr.mxu0 0.0
    %548 = vmatpush1.msra.mxu0 0.0
    %549 = vmatprep.subr.mxu0 0.0
    %550 = vmatpush1.msra.mxu0 0.0
    %551 = vmatprep.subr.mxu0 0.0
    %552 = vmatpush1.msra.mxu0 0.0
    %553 = vmatprep.mubr.f32.mxu0 0.0
    %554 = vmatmul.mubr.f32.gmra.mrb[0].mxu0 %v478
    %v555 = vpop.f32.mrb[0].mxu0
    %v556 = vadd.f32 0.0, %v555
    %v557 = vpop.f32.mrb[0].mxu0
    %558 = vmatprep.mubr.f32.mxu0 0.0
    %559 = vmatmul.mubr.f32.gmra.mrb[0].mxu0 %v481
    %v560 = vpop.f32.mrb[0].mxu0
    %v561 = vadd.f32 0.0, %v560
    %v562 = vpop.f32.mrb[0].mxu0
    %563 = vmatprep.mubr.f32.mxu0 0.0
    %564 = vmatmul.mubr.f32.gmra.mrb[0].mxu0 %v484
    %v565 = vpop.f32.mrb[0].mxu0
    %v566 = vadd.f32 0.0, %v565
    %v567 = vpop.f32.mrb[0].mxu0
    %568 = vmatprep.mubr.f32.mxu0 0.0
    %569 = vmatmul.mubr.f32.gmra.mrb[0].mxu0 %v487
    %v570 = vpop.f32.mrb[0].mxu0
    %v571 = vadd.f32 0.0, %v570
    %v572 = vpop.f32.mrb[0].mxu0
    %573 = vdwg.mxu0
    %s574 = scalar_lea.vmem [#allocation2], 64
    %v575 = vld [vmem:[%s574] sm:$0xff]
    %v576 = vld [vmem:[%s574 + $0x8] sm:$0xff]
    %v577 = vld [vmem:[%s574 + $0x10] sm:$0xff]
    %v578 = vld [vmem:[%s574 + $0x18] sm:$0xff]
    %v579 = vld [vmem:[%s574 + $0x20] sm:$0xff]
    %v580 = vld [vmem:[%s574 + $0x28] sm:$0xff]
    %v581 = vld [vmem:[%s574 + $0x30] sm:$0xff]
    %v582 = vld [vmem:[%s574 + $0x38] sm:$0xff]
    %vm583 = vcmask 523264
    %v585 = vsel %vm583, %v556, 0
    %v588 = vsel %vm583, %v561, 0
    %v591 = vsel %vm583, %v566, 0
    %v594 = vsel %vm583, %v571, 0
    %596 = vmatprep.subr.mxu0 0.0
    %597 = vmatpush1.msra.mxu0 %v575
    %598 = vmatprep.subr.mxu0 0.0
    %599 = vmatpush1.msra.mxu0 %v576
    %600 = vmatprep.subr.mxu0 0.0
    %601 = vmatpush1.msra.mxu0 %v577
    %602 = vmatprep.subr.mxu0 0.0
    %603 = vmatpush1.msra.mxu0 %v578
    %604 = vmatprep.subr.mxu0 0.0
    %605 = vmatpush1.msra.mxu0 %v579
    %606 = vmatprep.subr.mxu0 0.0
    %607 = vmatpush1.msra.mxu0 %v580
    %608 = vmatprep.subr.mxu0 0.0
    %609 = vmatpush1.msra.mxu0 %v581
    %610 = vmatprep.subr.mxu0 0.0
    %611 = vmatpush1.msra.mxu0 %v582
    %612 = vmatprep.subr.mxu0 0.0
    %613 = vmatpush1.msra.mxu0 0.0
    %614 = vmatprep.subr.mxu0 0.0
    %615 = vmatpush1.msra.mxu0 0.0
    %616 = vmatprep.subr.mxu0 0.0
    %617 = vmatpush1.msra.mxu0 0.0
    %618 = vmatprep.subr.mxu0 0.0
    %619 = vmatpush1.msra.mxu0 0.0
    %620 = vmatprep.subr.mxu0 0.0
    %621 = vmatpush1.msra.mxu0 0.0
    %622 = vmatprep.subr.mxu0 0.0
    %623 = vmatpush1.msra.mxu0 0.0
    %624 = vmatprep.subr.mxu0 0.0
    %625 = vmatpush1.msra.mxu0 0.0
    %626 = vmatprep.subr.mxu0 0.0
    %627 = vmatpush1.msra.mxu0 0.0
    %628 = vmatprep.subr.mxu0 0.0
    %629 = vmatpush1.msra.mxu0 0.0
    %630 = vmatprep.subr.mxu0 0.0
    %631 = vmatpush1.msra.mxu0 0.0
    %632 = vmatprep.subr.mxu0 0.0
    %633 = vmatpush1.msra.mxu0 0.0
    %634 = vmatprep.subr.mxu0 0.0
    %635 = vmatpush1.msra.mxu0 0.0
    %636 = vmatprep.subr.mxu0 0.0
    %637 = vmatpush1.msra.mxu0 0.0
    %638 = vmatprep.subr.mxu0 0.0
    %639 = vmatpush1.msra.mxu0 0.0
    %640 = vmatprep.subr.mxu0 0.0
    %641 = vmatpush1.msra.mxu0 0.0
    %642 = vmatprep.subr.mxu0 0.0
    %643 = vmatpush1.msra.mxu0 0.0
    %644 = vmatprep.subr.mxu0 0.0
    %645 = vmatpush1.msra.mxu0 0.0
    %646 = vmatprep.subr.mxu0 0.0
    %647 = vmatpush1.msra.mxu0 0.0
    %648 = vmatprep.subr.mxu0 0.0
    %649 = vmatpush1.msra.mxu0 0.0
    %650 = vmatprep.subr.mxu0 0.0
    %651 = vmatpush1.msra.mxu0 0.0
    %652 = vmatprep.subr.mxu0 0.0
    %653 = vmatpush1.msra.mxu0 0.0
    %654 = vmatprep.subr.mxu0 0.0
    %655 = vmatpush1.msra.mxu0 0.0
    %656 = vmatprep.subr.mxu0 0.0
    %657 = vmatpush1.msra.mxu0 0.0
    %658 = vmatprep.subr.mxu0 0.0
    %659 = vmatpush1.msra.mxu0 0.0
    %660 = vmatprep.mubr.f32.mxu0 0.0
    %661 = vmatmul.mubr.f32.gmra.mrb[0].mxu0 %v585
    %v662 = vpop.f32.mrb[0].mxu0
    %v663 = vadd.f32 0.0, %v662
    %v664 = vpop.f32.mrb[0].mxu0
    %665 = vmatprep.mubr.f32.mxu0 0.0
    %666 = vmatmul.mubr.f32.gmra.mrb[0].mxu0 %v588
    %v667 = vpop.f32.mrb[0].mxu0
    %v668 = vadd.f32 0.0, %v667
    %v669 = vpop.f32.mrb[0].mxu0
    %670 = vmatprep.mubr.f32.mxu0 0.0
    %671 = vmatmul.mubr.f32.gmra.mrb[0].mxu0 %v591
    %v672 = vpop.f32.mrb[0].mxu0
    %v673 = vadd.f32 0.0, %v672
    %v674 = vpop.f32.mrb[0].mxu0
    %675 = vmatprep.mubr.f32.mxu0 0.0
    %676 = vmatmul.mubr.f32.gmra.mrb[0].mxu0 %v594
    %v677 = vpop.f32.mrb[0].mxu0
    %v678 = vadd.f32 0.0, %v677
    %v679 = vpop.f32.mrb[0].mxu0
    %680 = vdwg.mxu0
    %v682 = vsel %vm583, %v446, 0
    %v685 = vsel %vm583, %v451, 0
    %v688 = vsel %vm583, %v456, 0
    %v691 = vsel %vm583, %v461, 0
    %693 = vmatprep.subr.mxu0 0.0
    %694 = vmatpush1.msra.mxu0 %v464
    %695 = vmatprep.subr.mxu0 0.0
    %696 = vmatpush1.msra.mxu0 %v465
    %697 = vmatprep.subr.mxu0 0.0
    %698 = vmatpush1.msra.mxu0 %v466
    %699 = vmatprep.subr.mxu0 0.0
    %700 = vmatpush1.msra.mxu0 %v467
    %701 = vmatprep.subr.mxu0 0.0
    %702 = vmatpush1.msra.mxu0 %v468
    %703 = vmatprep.subr.mxu0 0.0
    %704 = vmatpush1.msra.mxu0 %v469
    %705 = vmatprep.subr.mxu0 0.0
    %706 = vmatpush1.msra.mxu0 %v470
    %707 = vmatprep.subr.mxu0 0.0
    %708 = vmatpush1.msra.mxu0 %v471
    %709 = vmatprep.subr.mxu0 0.0
    %710 = vmatpush1.msra.mxu0 0.0
    %711 = vmatprep.subr.mxu0 0.0
    %712 = vmatpush1.msra.mxu0 0.0
    %713 = vmatprep.subr.mxu0 0.0
    %714 = vmatpush1.msra.mxu0 0.0
    %715 = vmatprep.subr.mxu0 0.0
    %716 = vmatpush1.msra.mxu0 0.0
    %717 = vmatprep.subr.mxu0 0.0
    %718 = vmatpush1.msra.mxu0 0.0
    %719 = vmatprep.subr.mxu0 0.0
    %720 = vmatpush1.msra.mxu0 0.0
    %721 = vmatprep.subr.mxu0 0.0
    %722 = vmatpush1.msra.mxu0 0.0
    %723 = vmatprep.subr.mxu0 0.0
    %724 = vmatpush1.msra.mxu0 0.0
    %725 = vmatprep.subr.mxu0 0.0
    %726 = vmatpush1.msra.mxu0 0.0
    %727 = vmatprep.subr.mxu0 0.0
    %728 = vmatpush1.msra.mxu0 0.0
    %729 = vmatprep.subr.mxu0 0.0
    %730 = vmatpush1.msra.mxu0 0.0
    %731 = vmatprep.subr.mxu0 0.0
    %732 = vmatpush1.msra.mxu0 0.0
    %733 = vmatprep.subr.mxu0 0.0
    %734 = vmatpush1.msra.mxu0 0.0
    %735 = vmatprep.subr.mxu0 0.0
    %736 = vmatpush1.msra.mxu0 0.0
    %737 = vmatprep.subr.mxu0 0.0
    %738 = vmatpush1.msra.mxu0 0.0
    %739 = vmatprep.subr.mxu0 0.0
    %740 = vmatpush1.msra.mxu0 0.0
    %741 = vmatprep.subr.mxu0 0.0
    %742 = vmatpush1.msra.mxu0 0.0
    %743 = vmatprep.subr.mxu0 0.0
    %744 = vmatpush1.msra.mxu0 0.0
    %745 = vmatprep.subr.mxu0 0.0
    %746 = vmatpush1.msra.mxu0 0.0
    %747 = vmatprep.subr.mxu0 0.0
    %748 = vmatpush1.msra.mxu0 0.0
    %749 = vmatprep.subr.mxu0 0.0
    %750 = vmatpush1.msra.mxu0 0.0
    %751 = vmatprep.subr.mxu0 0.0
    %752 = vmatpush1.msra.mxu0 0.0
    %753 = vmatprep.subr.mxu0 0.0
    %754 = vmatpush1.msra.mxu0 0.0
    %755 = vmatprep.subr.mxu0 0.0
    %756 = vmatpush1.msra.mxu0 0.0
    %757 = vmatprep.mubr.f32.mxu0 0.0
    %758 = vmatmul.mubr.f32.gmra.mrb[0].mxu0 %v682
    %v759 = vpop.f32.mrb[0].mxu0
    %v760 = vadd.f32 %v663, %v759
    %v761 = vpop.f32.mrb[0].mxu0
    %762 = vmatprep.mubr.f32.mxu0 0.0
    %763 = vmatmul.mubr.f32.gmra.mrb[0].mxu0 %v685
    %v764 = vpop.f32.mrb[0].mxu0
    %v765 = vadd.f32 %v668, %v764
    %v766 = vpop.f32.mrb[0].mxu0
    %767 = vmatprep.mubr.f32.mxu0 0.0
    %768 = vmatmul.mubr.f32.gmra.mrb[0].mxu0 %v688
    %v769 = vpop.f32.mrb[0].mxu0
    %v770 = vadd.f32 %v673, %v769
    %v771 = vpop.f32.mrb[0].mxu0
    %772 = vmatprep.mubr.f32.mxu0 0.0
    %773 = vmatmul.mubr.f32.gmra.mrb[0].mxu0 %v691
    %v774 = vpop.f32.mrb[0].mxu0
    %v775 = vadd.f32 %v678, %v774
    %v776 = vpop.f32.mrb[0].mxu0
    %777 = vdwg.mxu0
    %s778 = scalar_lea.vmem %s1, 64
    %v779 = vld [vmem:[%s778] sm:$0xff]
    %v780 = vld [vmem:[%s778 + $0x8] sm:$0xff]
    %v781 = vld [vmem:[%s778 + $0x10] sm:$0xff]
    %v782 = vld [vmem:[%s778 + $0x18] sm:$0xff]
    %v784 = vsel %vm366, %v779, 0
    %v787 = vsel %vm366, %v780, 0
    %v790 = vsel %vm366, %v781, 0
    %v793 = vsel %vm366, %v782, 0
    %795 = vmatprep.subr.mxu0 0.0
    %796 = vmatpush1.msra.mxu0 %v358
    %797 = vmatprep.subr.mxu0 0.0
    %798 = vmatpush1.msra.mxu0 %v359
    %799 = vmatprep.subr.mxu0 0.0
    %800 = vmatpush1.msra.mxu0 %v360
    %801 = vmatprep.subr.mxu0 0.0
    %802 = vmatpush1.msra.mxu0 %v361
    %803 = vmatprep.subr.mxu0 0.0
    %804 = vmatpush1.msra.mxu0 0.0
    %805 = vmatprep.subr.mxu0 0.0
    %806 = vmatpush1.msra.mxu0 0.0
    %807 = vmatprep.subr.mxu0 0.0
    %808 = vmatpush1.msra.mxu0 0.0
    %809 = vmatprep.subr.mxu0 0.0
    %810 = vmatpush1.msra.mxu0 0.0
    %811 = vmatprep.subr.mxu0 0.0
    %812 = vmatpush1.msra.mxu0 0.0
    %813 = vmatprep.subr.mxu0 0.0
    %814 = vmatpush1.msra.mxu0 0.0
    %815 = vmatprep.subr.mxu0 0.0
    %816 = vmatpush1.msra.mxu0 0.0
    %817 = vmatprep.subr.mxu0 0.0
    %818 = vmatpush1.msra.mxu0 0.0
    %819 = vmatprep.subr.mxu0 0.0
    %820 = vmatpush1.msra.mxu0 0.0
    %821 = vmatprep.subr.mxu0 0.0
    %822 = vmatpush1.msra.mxu0 0.0
    %823 = vmatprep.subr.mxu0 0.0
    %824 = vmatpush1.msra.mxu0 0.0
    %825 = vmatprep.subr.mxu0 0.0
    %826 = vmatpush1.msra.mxu0 0.0
    %827 = vmatprep.subr.mxu0 0.0
    %828 = vmatpush1.msra.mxu0 0.0
    %829 = vmatprep.subr.mxu0 0.0
    %830 = vmatpush1.msra.mxu0 0.0
    %831 = vmatprep.subr.mxu0 0.0
    %832 = vmatpush1.msra.mxu0 0.0
    %833 = vmatprep.subr.mxu0 0.0
    %834 = vmatpush1.msra.mxu0 0.0
    %835 = vmatprep.subr.mxu0 0.0
    %836 = vmatpush1.msra.mxu0 0.0
    %837 = vmatprep.subr.mxu0 0.0
    %838 = vmatpush1.msra.mxu0 0.0
    %839 = vmatprep.subr.mxu0 0.0
    %840 = vmatpush1.msra.mxu0 0.0
    %841 = vmatprep.subr.mxu0 0.0
    %842 = vmatpush1.msra.mxu0 0.0
    %843 = vmatprep.subr.mxu0 0.0
    %844 = vmatpush1.msra.mxu0 0.0
    %845 = vmatprep.subr.mxu0 0.0
    %846 = vmatpush1.msra.mxu0 0.0
    %847 = vmatprep.subr.mxu0 0.0
    %848 = vmatpush1.msra.mxu0 0.0
    %849 = vmatprep.subr.mxu0 0.0
    %850 = vmatpush1.msra.mxu0 0.0
    %851 = vmatprep.subr.mxu0 0.0
    %852 = vmatpush1.msra.mxu0 0.0
    %853 = vmatprep.subr.mxu0 0.0
    %854 = vmatpush1.msra.mxu0 0.0
    %855 = vmatprep.subr.mxu0 0.0
    %856 = vmatpush1.msra.mxu0 0.0
    %857 = vmatprep.subr.mxu0 0.0
    %858 = vmatpush1.msra.mxu0 0.0
    %859 = vmatprep.mubr.f32.mxu0 0.0
    %860 = vmatmul.mubr.f32.gmra.mrb[0].mxu0 %v784
    %v861 = vpop.f32.mrb[0].mxu0
    %v862 = vadd.f32 0.0, %v861
    %v863 = vpop.f32.mrb[0].mxu0
    %864 = vmatprep.mubr.f32.mxu0 0.0
    %865 = vmatmul.mubr.f32.gmra.mrb[0].mxu0 %v787
    %v866 = vpop.f32.mrb[0].mxu0
    %v867 = vadd.f32 0.0, %v866
    %v868 = vpop.f32.mrb[0].mxu0
    %869 = vmatprep.mubr.f32.mxu0 0.0
    %870 = vmatmul.mubr.f32.gmra.mrb[0].mxu0 %v790
    %v871 = vpop.f32.mrb[0].mxu0
    %v872 = vadd.f32 0.0, %v871
    %v873 = vpop.f32.mrb[0].mxu0
    %874 = vmatprep.mubr.f32.mxu0 0.0
    %875 = vmatmul.mubr.f32.gmra.mrb[0].mxu0 %v793
    %v876 = vpop.f32.mrb[0].mxu0
    %v877 = vadd.f32 0.0, %v876
    %v878 = vpop.f32.mrb[0].mxu0
    %879 = vdwg.mxu0
    %s880 = scalar_lea.vmem [#allocation2], 128
    %v881 = vld [vmem:[%s880] sm:$0xff]
    %v882 = vld [vmem:[%s880 + $0x8] sm:$0xff]
    %v883 = vld [vmem:[%s880 + $0x10] sm:$0xff]
    %v884 = vld [vmem:[%s880 + $0x18] sm:$0xff]
    %v885 = vld [vmem:[%s880 + $0x20] sm:$0xff]
    %v886 = vld [vmem:[%s880 + $0x28] sm:$0xff]
    %v887 = vld [vmem:[%s880 + $0x30] sm:$0xff]
    %v888 = vld [vmem:[%s880 + $0x38] sm:$0xff]
    %v890 = vsel %vm583, %v862, 0
    %v893 = vsel %vm583, %v867, 0
    %v896 = vsel %vm583, %v872, 0
    %v899 = vsel %vm583, %v877, 0
    %901 = vmatprep.subr.mxu0 0.0
    %902 = vmatpush1.msra.mxu0 %v881
    %903 = vmatprep.subr.mxu0 0.0
    %904 = vmatpush1.msra.mxu0 %v882
    %905 = vmatprep.subr.mxu0 0.0
    %906 = vmatpush1.msra.mxu0 %v883
    %907 = vmatprep.subr.mxu0 0.0
    %908 = vmatpush1.msra.mxu0 %v884
    %909 = vmatprep.subr.mxu0 0.0
    %910 = vmatpush1.msra.mxu0 %v885
    %911 = vmatprep.subr.mxu0 0.0
    %912 = vmatpush1.msra.mxu0 %v886
    %913 = vmatprep.subr.mxu0 0.0
    %914 = vmatpush1.msra.mxu0 %v887
    %915 = vmatprep.subr.mxu0 0.0
    %916 = vmatpush1.msra.mxu0 %v888
    %917 = vmatprep.subr.mxu0 0.0
    %918 = vmatpush1.msra.mxu0 0.0
    %919 = vmatprep.subr.mxu0 0.0
    %920 = vmatpush1.msra.mxu0 0.0
    %921 = vmatprep.subr.mxu0 0.0
    %922 = vmatpush1.msra.mxu0 0.0
    %923 = vmatprep.subr.mxu0 0.0
    %924 = vmatpush1.msra.mxu0 0.0
    %925 = vmatprep.subr.mxu0 0.0
    %926 = vmatpush1.msra.mxu0 0.0
    %927 = vmatprep.subr.mxu0 0.0
    %928 = vmatpush1.msra.mxu0 0.0
    %929 = vmatprep.subr.mxu0 0.0
    %930 = vmatpush1.msra.mxu0 0.0
    %931 = vmatprep.subr.mxu0 0.0
    %932 = vmatpush1.msra.mxu0 0.0
    %933 = vmatprep.subr.mxu0 0.0
    %934 = vmatpush1.msra.mxu0 0.0
    %935 = vmatprep.subr.mxu0 0.0
    %936 = vmatpush1.msra.mxu0 0.0
    %937 = vmatprep.subr.mxu0 0.0
    %938 = vmatpush1.msra.mxu0 0.0
    %939 = vmatprep.subr.mxu0 0.0
    %940 = vmatpush1.msra.mxu0 0.0
    %941 = vmatprep.subr.mxu0 0.0
    %942 = vmatpush1.msra.mxu0 0.0
    %943 = vmatprep.subr.mxu0 0.0
    %944 = vmatpush1.msra.mxu0 0.0
    %945 = vmatprep.subr.mxu0 0.0
    %946 = vmatpush1.msra.mxu0 0.0
    %947 = vmatprep.subr.mxu0 0.0
    %948 = vmatpush1.msra.mxu0 0.0
    %949 = vmatprep.subr.mxu0 0.0
    %950 = vmatpush1.msra.mxu0 0.0
    %951 = vmatprep.subr.mxu0 0.0
    %952 = vmatpush1.msra.mxu0 0.0
    %953 = vmatprep.subr.mxu0 0.0
    %954 = vmatpush1.msra.mxu0 0.0
    %955 = vmatprep.subr.mxu0 0.0
    %956 = vmatpush1.msra.mxu0 0.0
    %957 = vmatprep.subr.mxu0 0.0
    %958 = vmatpush1.msra.mxu0 0.0
    %959 = vmatprep.subr.mxu0 0.0
    %960 = vmatpush1.msra.mxu0 0.0
    %961 = vmatprep.subr.mxu0 0.0
    %962 = vmatpush1.msra.mxu0 0.0
    %963 = vmatprep.subr.mxu0 0.0
    %964 = vmatpush1.msra.mxu0 0.0
    %965 = vmatprep.mubr.f32.mxu0 0.0
    %966 = vmatmul.mubr.f32.gmra.mrb[0].mxu0 %v890
    %v967 = vpop.f32.mrb[0].mxu0
    %v968 = vadd.f32 0.0, %v967
    %v969 = vpop.f32.mrb[0].mxu0
    %970 = vmatprep.mubr.f32.mxu0 0.0
    %971 = vmatmul.mubr.f32.gmra.mrb[0].mxu0 %v893
    %v972 = vpop.f32.mrb[0].mxu0
    %v973 = vadd.f32 0.0, %v972
    %v974 = vpop.f32.mrb[0].mxu0
    %975 = vmatprep.mubr.f32.mxu0 0.0
    %976 = vmatmul.mubr.f32.gmra.mrb[0].mxu0 %v896
    %v977 = vpop.f32.mrb[0].mxu0
    %v978 = vadd.f32 0.0, %v977
    %v979 = vpop.f32.mrb[0].mxu0
    %980 = vmatprep.mubr.f32.mxu0 0.0
    %981 = vmatmul.mubr.f32.gmra.mrb[0].mxu0 %v899
    %v982 = vpop.f32.mrb[0].mxu0
    %v983 = vadd.f32 0.0, %v982
    %v984 = vpop.f32.mrb[0].mxu0
    %985 = vdwg.mxu0
    %v986 = vadd.f32 %v760, %v968
    %v987 = vadd.f32 %v765, %v973
    %v988 = vadd.f32 %v770, %v978
    %v989 = vadd.f32 %v775, %v983
    %v990 = vld [vmem:[#allocation5] sm:$0x1]
    %v992 = vlaneseq
    %v993 = vshrl.u32 %v992, 7
    %v994 = vsub.s32 0, %v993
    %v995 = vrot.slane %v990, %v994
    %v997 = vadd.f32 %v986, %v995
    %v998 = vadd.f32 %v987, %v995
    %v999 = vadd.f32 %v988, %v995
    %v1000 = vadd.f32 %v989, %v995
    %v1001 = vmin.f32 %v997, 0.0
    %v1002 = vmin.f32 %v998, 0.0
    %v1003 = vmin.f32 %v999, 0.0
    %v1004 = vmin.f32 %v1000, 0.0
    %v1005 = vmul.f32 %v1001, 1.442695
    %v1006 = vpow.pop %v1005
    %v1007 = vmul.f32 %v1002, 1.442695
    %v1008 = vpow.pop %v1007
    %v1009 = vmul.f32 %v1003, 1.442695
    %v1010 = vpow.pop %v1009
    %v1011 = vmul.f32 %v1004, 1.442695
    %v1012 = vpow.pop %v1011
    %v1013 = vsub.f32 %v1006, 1.0
    %v1014 = vsub.f32 %v1008, 1.0
    %v1015 = vsub.f32 %v1010, 1.0
    %v1016 = vsub.f32 %v1012, 1.0
    %v1017 = vmul.f32 %v1013, 1.6732632
    %v1018 = vmul.f32 %v1014, 1.6732632
    %v1019 = vmul.f32 %v1015, 1.6732632
    %v1020 = vmul.f32 %v1016, 1.6732632
    %vm1021 = vcmp.gt.f32.partialorder %v997, 0.0
    %vm1022 = vcmp.gt.f32.partialorder %v998, 0.0
    %vm1023 = vcmp.gt.f32.partialorder %v999, 0.0
    %vm1024 = vcmp.gt.f32.partialorder %v1000, 0.0
    %v1025 = vsel %vm1021, %v997, %v1017
    %v1026 = vsel %vm1022, %v998, %v1018
    %v1027 = vsel %vm1023, %v999, %v1019
    %v1028 = vsel %vm1024, %v1000, %v1020
    %v1029 = vmul.f32 %v1025, 1.050701
    %v1030 = vmul.f32 %v1026, 1.050701
    %v1031 = vmul.f32 %v1027, 1.050701
    %v1032 = vmul.f32 %v1028, 1.050701
    %v1033 = vld [vmem:[#allocation7] sm:$0xff]
    %v1034 = vld [vmem:[#allocation7 + $0x8] sm:$0xff]
    %v1036 = vsel %vm366, %v1033, 0
    %v1039 = vsel %vm366, %v1034, 0
    %1041 = vmatprep.subr.mxu0 0.0
    %1042 = vmatpush1.msra.mxu0 %v1029
    %1043 = vmatprep.subr.mxu0 0.0
    %1044 = vmatpush1.msra.mxu0 %v1030
    %1045 = vmatprep.subr.mxu0 0.0
    %1046 = vmatpush1.msra.mxu0 %v1031
    %1047 = vmatprep.subr.mxu0 0.0
    %1048 = vmatpush1.msra.mxu0 %v1032
    %1049 = vmatprep.subr.mxu0 0.0
    %1050 = vmatpush1.msra.mxu0 0.0
    %1051 = vmatprep.subr.mxu0 0.0
    %1052 = vmatpush1.msra.mxu0 0.0
    %1053 = vmatprep.subr.mxu0 0.0
    %1054 = vmatpush1.msra.mxu0 0.0
    %1055 = vmatprep.subr.mxu0 0.0
    %1056 = vmatpush1.msra.mxu0 0.0
    %1057 = vmatprep.subr.mxu0 0.0
    %1058 = vmatpush1.msra.mxu0 0.0
    %1059 = vmatprep.subr.mxu0 0.0
    %1060 = vmatpush1.msra.mxu0 0.0
    %1061 = vmatprep.subr.mxu0 0.0
    %1062 = vmatpush1.msra.mxu0 0.0
    %1063 = vmatprep.subr.mxu0 0.0
    %1064 = vmatpush1.msra.mxu0 0.0
    %1065 = vmatprep.subr.mxu0 0.0
    %1066 = vmatpush1.msra.mxu0 0.0
    %1067 = vmatprep.subr.mxu0 0.0
    %1068 = vmatpush1.msra.mxu0 0.0
    %1069 = vmatprep.subr.mxu0 0.0
    %1070 = vmatpush1.msra.mxu0 0.0
    %1071 = vmatprep.subr.mxu0 0.0
    %1072 = vmatpush1.msra.mxu0 0.0
    %1073 = vmatprep.subr.mxu0 0.0
    %1074 = vmatpush1.msra.mxu0 0.0
    %1075 = vmatprep.subr.mxu0 0.0
    %1076 = vmatpush1.msra.mxu0 0.0
    %1077 = vmatprep.subr.mxu0 0.0
    %1078 = vmatpush1.msra.mxu0 0.0
    %1079 = vmatprep.subr.mxu0 0.0
    %1080 = vmatpush1.msra.mxu0 0.0
    %1081 = vmatprep.subr.mxu0 0.0
    %1082 = vmatpush1.msra.mxu0 0.0
    %1083 = vmatprep.subr.mxu0 0.0
    %1084 = vmatpush1.msra.mxu0 0.0
    %1085 = vmatprep.subr.mxu0 0.0
    %1086 = vmatpush1.msra.mxu0 0.0
    %1087 = vmatprep.subr.mxu0 0.0
    %1088 = vmatpush1.msra.mxu0 0.0
    %1089 = vmatprep.subr.mxu0 0.0
    %1090 = vmatpush1.msra.mxu0 0.0
    %1091 = vmatprep.subr.mxu0 0.0
    %1092 = vmatpush1.msra.mxu0 0.0
    %1093 = vmatprep.subr.mxu0 0.0
    %1094 = vmatpush1.msra.mxu0 0.0
    %1095 = vmatprep.subr.mxu0 0.0
    %1096 = vmatpush1.msra.mxu0 0.0
    %1097 = vmatprep.subr.mxu0 0.0
    %1098 = vmatpush1.msra.mxu0 0.0
    %1099 = vmatprep.subr.mxu0 0.0
    %1100 = vmatpush1.msra.mxu0 0.0
    %1101 = vmatprep.subr.mxu0 0.0
    %1102 = vmatpush1.msra.mxu0 0.0
    %1103 = vmatprep.subr.mxu0 0.0
    %1104 = vmatpush1.msra.mxu0 0.0
    %1105 = vmatprep.mubr.f32.mxu0 0.0
    %1106 = vmatmul.mubr.f32.gmra.mrb[0].mxu0 %v1036
    %v1107 = vpop.f32.mrb[0].mxu0
    %v1108 = vadd.f32 0.0, %v1107
    %v1109 = vpop.f32.mrb[0].mxu0
    %1110 = vmatprep.mubr.f32.mxu0 0.0
    %1111 = vmatmul.mubr.f32.gmra.mrb[0].mxu0 %v1039
    %v1112 = vpop.f32.mrb[0].mxu0
    %v1113 = vadd.f32 0.0, %v1112
    %v1114 = vpop.f32.mrb[0].mxu0
    %1115 = vdwg.mxu0
    %v1116 = vld [vmem:[#allocation8] sm:$0xff]
    %v1117 = vld [vmem:[#allocation8 + $0x8] sm:$0xff]
    %v1118 = vld [vmem:[#allocation8 + $0x10] sm:$0xff]
    %v1119 = vld [vmem:[#allocation8 + $0x18] sm:$0xff]
    %v1120 = vld [vmem:[#allocation8 + $0x20] sm:$0xff]
    %v1121 = vld [vmem:[#allocation8 + $0x28] sm:$0xff]
    %v1122 = vld [vmem:[#allocation8 + $0x30] sm:$0xff]
    %v1123 = vld [vmem:[#allocation8 + $0x38] sm:$0xff]
    %v1124 = vld [vmem:[#allocation8 + $0x40] sm:$0xff]
    %v1125 = vld [vmem:[#allocation8 + $0x48] sm:$0xff]
    %v1126 = vld [vmem:[#allocation8 + $0x50] sm:$0xff]
    %v1127 = vld [vmem:[#allocation8 + $0x58] sm:$0xff]
    %v1128 = vld [vmem:[#allocation8 + $0x60] sm:$0xff]
    %v1129 = vld [vmem:[#allocation8 + $0x68] sm:$0xff]
    %v1130 = vld [vmem:[#allocation8 + $0x70] sm:$0xff]
    %v1131 = vld [vmem:[#allocation8 + $0x78] sm:$0xff]
    %s1132 = scalar_lea.vmem [#allocation7], 16
    %v1133 = vld [vmem:[%s1132] sm:$0xff]
    %v1134 = vld [vmem:[%s1132 + $0x8] sm:$0xff]
    %v1136 = vsel %vm366, %v1133, 0
    %v1139 = vsel %vm366, %v1134, 0
    %1141 = vmatprep.subr.mxu0 0.0
    %1142 = vmatpush1.msra.mxu0 %v1029
    %1143 = vmatprep.subr.mxu0 0.0
    %1144 = vmatpush1.msra.mxu0 %v1030
    %1145 = vmatprep.subr.mxu0 0.0
    %1146 = vmatpush1.msra.mxu0 %v1031
    %1147 = vmatprep.subr.mxu0 0.0
    %1148 = vmatpush1.msra.mxu0 %v1032
    %1149 = vmatprep.subr.mxu0 0.0
    %1150 = vmatpush1.msra.mxu0 0.0
    %1151 = vmatprep.subr.mxu0 0.0
    %1152 = vmatpush1.msra.mxu0 0.0
    %1153 = vmatprep.subr.mxu0 0.0
    %1154 = vmatpush1.msra.mxu0 0.0
    %1155 = vmatprep.subr.mxu0 0.0
    %1156 = vmatpush1.msra.mxu0 0.0
    %1157 = vmatprep.subr.mxu0 0.0
    %1158 = vmatpush1.msra.mxu0 0.0
    %1159 = vmatprep.subr.mxu0 0.0
    %1160 = vmatpush1.msra.mxu0 0.0
    %1161 = vmatprep.subr.mxu0 0.0
    %1162 = vmatpush1.msra.mxu0 0.0
    %1163 = vmatprep.subr.mxu0 0.0
    %1164 = vmatpush1.msra.mxu0 0.0
    %1165 = vmatprep.subr.mxu0 0.0
    %1166 = vmatpush1.msra.mxu0 0.0
    %1167 = vmatprep.subr.mxu0 0.0
    %1168 = vmatpush1.msra.mxu0 0.0
    %1169 = vmatprep.subr.mxu0 0.0
    %1170 = vmatpush1.msra.mxu0 0.0
    %1171 = vmatprep.subr.mxu0 0.0
    %1172 = vmatpush1.msra.mxu0 0.0
    %1173 = vmatprep.subr.mxu0 0.0
    %1174 = vmatpush1.msra.mxu0 0.0
    %1175 = vmatprep.subr.mxu0 0.0
    %1176 = vmatpush1.msra.mxu0 0.0
    %1177 = vmatprep.subr.mxu0 0.0
    %1178 = vmatpush1.msra.mxu0 0.0
    %1179 = vmatprep.subr.mxu0 0.0
    %1180 = vmatpush1.msra.mxu0 0.0
    %1181 = vmatprep.subr.mxu0 0.0
    %1182 = vmatpush1.msra.mxu0 0.0
    %1183 = vmatprep.subr.mxu0 0.0
    %1184 = vmatpush1.msra.mxu0 0.0
    %1185 = vmatprep.subr.mxu0 0.0
    %1186 = vmatpush1.msra.mxu0 0.0
    %1187 = vmatprep.subr.mxu0 0.0
    %1188 = vmatpush1.msra.mxu0 0.0
    %1189 = vmatprep.subr.mxu0 0.0
    %1190 = vmatpush1.msra.mxu0 0.0
    %1191 = vmatprep.subr.mxu0 0.0
    %1192 = vmatpush1.msra.mxu0 0.0
    %1193 = vmatprep.subr.mxu0 0.0
    %1194 = vmatpush1.msra.mxu0 0.0
    %1195 = vmatprep.subr.mxu0 0.0
    %1196 = vmatpush1.msra.mxu0 0.0
    %1197 = vmatprep.subr.mxu0 0.0
    %1198 = vmatpush1.msra.mxu0 0.0
    %1199 = vmatprep.subr.mxu0 0.0
    %1200 = vmatpush1.msra.mxu0 0.0
    %1201 = vmatprep.subr.mxu0 0.0
    %1202 = vmatpush1.msra.mxu0 0.0
    %1203 = vmatprep.subr.mxu0 0.0
    %1204 = vmatpush1.msra.mxu0 0.0
    %1205 = vmatprep.mubr.f32.mxu0 0.0
    %1206 = vmatmul.mubr.f32.gmra.mrb[0].mxu0 %v1136
    %v1207 = vpop.f32.mrb[0].mxu0
    %v1208 = vadd.f32 0.0, %v1207
    %v1209 = vpop.f32.mrb[0].mxu0
    %1210 = vmatprep.mubr.f32.mxu0 0.0
    %1211 = vmatmul.mubr.f32.gmra.mrb[0].mxu0 %v1139
    %v1212 = vpop.f32.mrb[0].mxu0
    %v1213 = vadd.f32 0.0, %v1212
    %v1214 = vpop.f32.mrb[0].mxu0
    %1215 = vdwg.mxu0
    %s1216 = scalar_lea.vmem [#allocation8], 128
    %v1217 = vld [vmem:[%s1216] sm:$0xff]
    %v1218 = vld [vmem:[%s1216 + $0x8] sm:$0xff]
    %v1219 = vld [vmem:[%s1216 + $0x10] sm:$0xff]
    %v1220 = vld [vmem:[%s1216 + $0x18] sm:$0xff]
    %v1221 = vld [vmem:[%s1216 + $0x20] sm:$0xff]
    %v1222 = vld [vmem:[%s1216 + $0x28] sm:$0xff]
    %v1223 = vld [vmem:[%s1216 + $0x30] sm:$0xff]
    %v1224 = vld [vmem:[%s1216 + $0x38] sm:$0xff]
    %v1225 = vld [vmem:[%s1216 + $0x40] sm:$0xff]
    %v1226 = vld [vmem:[%s1216 + $0x48] sm:$0xff]
    %v1227 = vld [vmem:[%s1216 + $0x50] sm:$0xff]
    %v1228 = vld [vmem:[%s1216 + $0x58] sm:$0xff]
    %v1229 = vld [vmem:[%s1216 + $0x60] sm:$0xff]
    %v1230 = vld [vmem:[%s1216 + $0x68] sm:$0xff]
    %v1231 = vld [vmem:[%s1216 + $0x70] sm:$0xff]
    %v1232 = vld [vmem:[%s1216 + $0x78] sm:$0xff]
    %1233 = vmatprep.subr.mxu0 0.0
    %1234 = vmatpush1.msra.mxu0 %v1217
    %1235 = vmatprep.subr.mxu0 0.0
    %1236 = vmatpush1.msra.mxu0 %v1218
    %1237 = vmatprep.subr.mxu0 0.0
    %1238 = vmatpush1.msra.mxu0 %v1219
    %1239 = vmatprep.subr.mxu0 0.0
    %1240 = vmatpush1.msra.mxu0 %v1220
    %1241 = vmatprep.subr.mxu0 0.0
    %1242 = vmatpush1.msra.mxu0 %v1221
    %1243 = vmatprep.subr.mxu0 0.0
    %1244 = vmatpush1.msra.mxu0 %v1222
    %1245 = vmatprep.subr.mxu0 0.0
    %1246 = vmatpush1.msra.mxu0 %v1223
    %1247 = vmatprep.subr.mxu0 0.0
    %1248 = vmatpush1.msra.mxu0 %v1224
    %1249 = vmatprep.subr.mxu0 0.0
    %1250 = vmatpush1.msra.mxu0 %v1225
    %1251 = vmatprep.subr.mxu0 0.0
    %1252 = vmatpush1.msra.mxu0 %v1226
    %1253 = vmatprep.subr.mxu0 0.0
    %1254 = vmatpush1.msra.mxu0 %v1227
    %1255 = vmatprep.subr.mxu0 0.0
    %1256 = vmatpush1.msra.mxu0 %v1228
    %1257 = vmatprep.subr.mxu0 0.0
    %1258 = vmatpush1.msra.mxu0 %v1229
    %1259 = vmatprep.subr.mxu0 0.0
    %1260 = vmatpush1.msra.mxu0 %v1230
    %1261 = vmatprep.subr.mxu0 0.0
    %1262 = vmatpush1.msra.mxu0 %v1231
    %1263 = vmatprep.subr.mxu0 0.0
    %1264 = vmatpush1.msra.mxu0 %v1232
    %1265 = vmatprep.subr.mxu0 0.0
    %1266 = vmatpush1.msra.mxu0 0.0
    %1267 = vmatprep.subr.mxu0 0.0
    %1268 = vmatpush1.msra.mxu0 0.0
    %1269 = vmatprep.subr.mxu0 0.0
    %1270 = vmatpush1.msra.mxu0 0.0
    %1271 = vmatprep.subr.mxu0 0.0
    %1272 = vmatpush1.msra.mxu0 0.0
    %1273 = vmatprep.subr.mxu0 0.0
    %1274 = vmatpush1.msra.mxu0 0.0
    %1275 = vmatprep.subr.mxu0 0.0
    %1276 = vmatpush1.msra.mxu0 0.0
    %1277 = vmatprep.subr.mxu0 0.0
    %1278 = vmatpush1.msra.mxu0 0.0
    %1279 = vmatprep.subr.mxu0 0.0
    %1280 = vmatpush1.msra.mxu0 0.0
    %1281 = vmatprep.subr.mxu0 0.0
    %1282 = vmatpush1.msra.mxu0 0.0
    %1283 = vmatprep.subr.mxu0 0.0
    %1284 = vmatpush1.msra.mxu0 0.0
    %1285 = vmatprep.subr.mxu0 0.0
    %1286 = vmatpush1.msra.mxu0 0.0
    %1287 = vmatprep.subr.mxu0 0.0
    %1288 = vmatpush1.msra.mxu0 0.0
    %1289 = vmatprep.subr.mxu0 0.0
    %1290 = vmatpush1.msra.mxu0 0.0
    %1291 = vmatprep.subr.mxu0 0.0
    %1292 = vmatpush1.msra.mxu0 0.0
    %1293 = vmatprep.subr.mxu0 0.0
    %1294 = vmatpush1.msra.mxu0 0.0
    %1295 = vmatprep.subr.mxu0 0.0
    %1296 = vmatpush1.msra.mxu0 0.0
    %1297 = vmatprep.mubr.f32.mxu0 0.0
    %1298 = vmatmul.mubr.f32.gmra.mrb[0].mxu0 %v1208
    %v1299 = vpop.f32.mrb[0].mxu0
    %v1300 = vadd.f32 0.0, %v1299
    %v1301 = vpop.f32.mrb[0].mxu0
    %1302 = vmatprep.mubr.f32.mxu0 0.0
    %1303 = vmatmul.mubr.f32.gmra.mrb[0].mxu0 %v1213
    %v1304 = vpop.f32.mrb[0].mxu0
    %v1305 = vadd.f32 0.0, %v1304
    %v1306 = vpop.f32.mrb[0].mxu0
    %1307 = vdwg.mxu0
    %1308 = vmatprep.subr.mxu0 0.0
    %1309 = vmatpush1.msra.mxu0 %v1116
    %1310 = vmatprep.subr.mxu0 0.0
    %1311 = vmatpush1.msra.mxu0 %v1117
    %1312 = vmatprep.subr.mxu0 0.0
    %1313 = vmatpush1.msra.mxu0 %v1118
    %1314 = vmatprep.subr.mxu0 0.0
    %1315 = vmatpush1.msra.mxu0 %v1119
    %1316 = vmatprep.subr.mxu0 0.0
    %1317 = vmatpush1.msra.mxu0 %v1120
    %1318 = vmatprep.subr.mxu0 0.0
    %1319 = vmatpush1.msra.mxu0 %v1121
    %1320 = vmatprep.subr.mxu0 0.0
    %1321 = vmatpush1.msra.mxu0 %v1122
    %1322 = vmatprep.subr.mxu0 0.0
    %1323 = vmatpush1.msra.mxu0 %v1123
    %1324 = vmatprep.subr.mxu0 0.0
    %1325 = vmatpush1.msra.mxu0 %v1124
    %1326 = vmatprep.subr.mxu0 0.0
    %1327 = vmatpush1.msra.mxu0 %v1125
    %1328 = vmatprep.subr.mxu0 0.0
    %1329 = vmatpush1.msra.mxu0 %v1126
    %1330 = vmatprep.subr.mxu0 0.0
    %1331 = vmatpush1.msra.mxu0 %v1127
    %1332 = vmatprep.subr.mxu0 0.0
    %1333 = vmatpush1.msra.mxu0 %v1128
    %1334 = vmatprep.subr.mxu0 0.0
    %1335 = vmatpush1.msra.mxu0 %v1129
    %1336 = vmatprep.subr.mxu0 0.0
    %1337 = vmatpush1.msra.mxu0 %v1130
    %1338 = vmatprep.subr.mxu0 0.0
    %1339 = vmatpush1.msra.mxu0 %v1131
    %1340 = vmatprep.subr.mxu0 0.0
    %1341 = vmatpush1.msra.mxu0 0.0
    %1342 = vmatprep.subr.mxu0 0.0
    %1343 = vmatpush1.msra.mxu0 0.0
    %1344 = vmatprep.subr.mxu0 0.0
    %1345 = vmatpush1.msra.mxu0 0.0
    %1346 = vmatprep.subr.mxu0 0.0
    %1347 = vmatpush1.msra.mxu0 0.0
    %1348 = vmatprep.subr.mxu0 0.0
    %1349 = vmatpush1.msra.mxu0 0.0
    %1350 = vmatprep.subr.mxu0 0.0
    %1351 = vmatpush1.msra.mxu0 0.0
    %1352 = vmatprep.subr.mxu0 0.0
    %1353 = vmatpush1.msra.mxu0 0.0
    %1354 = vmatprep.subr.mxu0 0.0
    %1355 = vmatpush1.msra.mxu0 0.0
    %1356 = vmatprep.subr.mxu0 0.0
    %1357 = vmatpush1.msra.mxu0 0.0
    %1358 = vmatprep.subr.mxu0 0.0
    %1359 = vmatpush1.msra.mxu0 0.0
    %1360 = vmatprep.subr.mxu0 0.0
    %1361 = vmatpush1.msra.mxu0 0.0
    %1362 = vmatprep.subr.mxu0 0.0
    %1363 = vmatpush1.msra.mxu0 0.0
    %1364 = vmatprep.subr.mxu0 0.0
    %1365 = vmatpush1.msra.mxu0 0.0
    %1366 = vmatprep.subr.mxu0 0.0
    %1367 = vmatpush1.msra.mxu0 0.0
    %1368 = vmatprep.subr.mxu0 0.0
    %1369 = vmatpush1.msra.mxu0 0.0
    %1370 = vmatprep.subr.mxu0 0.0
    %1371 = vmatpush1.msra.mxu0 0.0
    %1372 = vmatprep.mubr.f32.mxu0 0.0
    %1373 = vmatmul.mubr.f32.gmra.mrb[0].mxu0 %v1108
    %v1374 = vpop.f32.mrb[0].mxu0
    %v1375 = vadd.f32 %v1300, %v1374
    %v1376 = vpop.f32.mrb[0].mxu0
    %1377 = vmatprep.mubr.f32.mxu0 0.0
    %1378 = vmatmul.mubr.f32.gmra.mrb[0].mxu0 %v1113
    %v1379 = vpop.f32.mrb[0].mxu0
    %v1380 = vadd.f32 %v1305, %v1379
    %v1381 = vpop.f32.mrb[0].mxu0
    %1382 = vdwg.mxu0
    %s1383 = scalar_lea.vmem [#allocation7], 32
    %v1384 = vld [vmem:[%s1383] sm:$0xff]
    %v1385 = vld [vmem:[%s1383 + $0x8] sm:$0xff]
    %v1387 = vsel %vm366, %v1384, 0
    %v1390 = vsel %vm366, %v1385, 0
    %1392 = vmatprep.subr.mxu0 0.0
    %1393 = vmatpush1.msra.mxu0 %v1029
    %1394 = vmatprep.subr.mxu0 0.0
    %1395 = vmatpush1.msra.mxu0 %v1030
    %1396 = vmatprep.subr.mxu0 0.0
    %1397 = vmatpush1.msra.mxu0 %v1031
    %1398 = vmatprep.subr.mxu0 0.0
    %1399 = vmatpush1.msra.mxu0 %v1032
    %1400 = vmatprep.subr.mxu0 0.0
    %1401 = vmatpush1.msra.mxu0 0.0
    %1402 = vmatprep.subr.mxu0 0.0
    %1403 = vmatpush1.msra.mxu0 0.0
    %1404 = vmatprep.subr.mxu0 0.0
    %1405 = vmatpush1.msra.mxu0 0.0
    %1406 = vmatprep.subr.mxu0 0.0
    %1407 = vmatpush1.msra.mxu0 0.0
    %1408 = vmatprep.subr.mxu0 0.0
    %1409 = vmatpush1.msra.mxu0 0.0
    %1410 = vmatprep.subr.mxu0 0.0
    %1411 = vmatpush1.msra.mxu0 0.0
    %1412 = vmatprep.subr.mxu0 0.0
    %1413 = vmatpush1.msra.mxu0 0.0
    %1414 = vmatprep.subr.mxu0 0.0
    %1415 = vmatpush1.msra.mxu0 0.0
    %1416 = vmatprep.subr.mxu0 0.0
    %1417 = vmatpush1.msra.mxu0 0.0
    %1418 = vmatprep.subr.mxu0 0.0
    %1419 = vmatpush1.msra.mxu0 0.0
    %1420 = vmatprep.subr.mxu0 0.0
    %1421 = vmatpush1.msra.mxu0 0.0
    %1422 = vmatprep.subr.mxu0 0.0
    %1423 = vmatpush1.msra.mxu0 0.0
    %1424 = vmatprep.subr.mxu0 0.0
    %1425 = vmatpush1.msra.mxu0 0.0
    %1426 = vmatprep.subr.mxu0 0.0
    %1427 = vmatpush1.msra.mxu0 0.0
    %1428 = vmatprep.subr.mxu0 0.0
    %1429 = vmatpush1.msra.mxu0 0.0
    %1430 = vmatprep.subr.mxu0 0.0
    %1431 = vmatpush1.msra.mxu0 0.0
    %1432 = vmatprep.subr.mxu0 0.0
    %1433 = vmatpush1.msra.mxu0 0.0
    %1434 = vmatprep.subr.mxu0 0.0
    %1435 = vmatpush1.msra.mxu0 0.0
    %1436 = vmatprep.subr.mxu0 0.0
    %1437 = vmatpush1.msra.mxu0 0.0
    %1438 = vmatprep.subr.mxu0 0.0
    %1439 = vmatpush1.msra.mxu0 0.0
    %1440 = vmatprep.subr.mxu0 0.0
    %1441 = vmatpush1.msra.mxu0 0.0
    %1442 = vmatprep.subr.mxu0 0.0
    %1443 = vmatpush1.msra.mxu0 0.0
    %1444 = vmatprep.subr.mxu0 0.0
    %1445 = vmatpush1.msra.mxu0 0.0
    %1446 = vmatprep.subr.mxu0 0.0
    %1447 = vmatpush1.msra.mxu0 0.0
    %1448 = vmatprep.subr.mxu0 0.0
    %1449 = vmatpush1.msra.mxu0 0.0
    %1450 = vmatprep.subr.mxu0 0.0
    %1451 = vmatpush1.msra.mxu0 0.0
    %1452 = vmatprep.subr.mxu0 0.0
    %1453 = vmatpush1.msra.mxu0 0.0
    %1454 = vmatprep.subr.mxu0 0.0
    %1455 = vmatpush1.msra.mxu0 0.0
    %1456 = vmatprep.mubr.f32.mxu0 0.0
    %1457 = vmatmul.mubr.f32.gmra.mrb[0].mxu0 %v1387
    %v1458 = vpop.f32.mrb[0].mxu0
    %v1459 = vadd.f32 0.0, %v1458
    %v1460 = vpop.f32.mrb[0].mxu0
    %1461 = vmatprep.mubr.f32.mxu0 0.0
    %1462 = vmatmul.mubr.f32.gmra.mrb[0].mxu0 %v1390
    %v1463 = vpop.f32.mrb[0].mxu0
    %v1464 = vadd.f32 0.0, %v1463
    %v1465 = vpop.f32.mrb[0].mxu0
    %1466 = vdwg.mxu0
    %s1467 = scalar_lea.vmem [#allocation8], 256
    %v1468 = vld [vmem:[%s1467] sm:$0xff]
    %v1469 = vld [vmem:[%s1467 + $0x8] sm:$0xff]
    %v1470 = vld [vmem:[%s1467 + $0x10] sm:$0xff]
    %v1471 = vld [vmem:[%s1467 + $0x18] sm:$0xff]
    %v1472 = vld [vmem:[%s1467 + $0x20] sm:$0xff]
    %v1473 = vld [vmem:[%s1467 + $0x28] sm:$0xff]
    %v1474 = vld [vmem:[%s1467 + $0x30] sm:$0xff]
    %v1475 = vld [vmem:[%s1467 + $0x38] sm:$0xff]
    %v1476 = vld [vmem:[%s1467 + $0x40] sm:$0xff]
    %v1477 = vld [vmem:[%s1467 + $0x48] sm:$0xff]
    %v1478 = vld [vmem:[%s1467 + $0x50] sm:$0xff]
    %v1479 = vld [vmem:[%s1467 + $0x58] sm:$0xff]
    %v1480 = vld [vmem:[%s1467 + $0x60] sm:$0xff]
    %v1481 = vld [vmem:[%s1467 + $0x68] sm:$0xff]
    %v1482 = vld [vmem:[%s1467 + $0x70] sm:$0xff]
    %v1483 = vld [vmem:[%s1467 + $0x78] sm:$0xff]
    %1484 = vmatprep.subr.mxu0 0.0
    %1485 = vmatpush1.msra.mxu0 %v1468
    %1486 = vmatprep.subr.mxu0 0.0
    %1487 = vmatpush1.msra.mxu0 %v1469
    %1488 = vmatprep.subr.mxu0 0.0
    %1489 = vmatpush1.msra.mxu0 %v1470
    %1490 = vmatprep.subr.mxu0 0.0
    %1491 = vmatpush1.msra.mxu0 %v1471
    %1492 = vmatprep.subr.mxu0 0.0
    %1493 = vmatpush1.msra.mxu0 %v1472
    %1494 = vmatprep.subr.mxu0 0.0
    %1495 = vmatpush1.msra.mxu0 %v1473
    %1496 = vmatprep.subr.mxu0 0.0
    %1497 = vmatpush1.msra.mxu0 %v1474
    %1498 = vmatprep.subr.mxu0 0.0
    %1499 = vmatpush1.msra.mxu0 %v1475
    %1500 = vmatprep.subr.mxu0 0.0
    %1501 = vmatpush1.msra.mxu0 %v1476
    %1502 = vmatprep.subr.mxu0 0.0
    %1503 = vmatpush1.msra.mxu0 %v1477
    %1504 = vmatprep.subr.mxu0 0.0
    %1505 = vmatpush1.msra.mxu0 %v1478
    %1506 = vmatprep.subr.mxu0 0.0
    %1507 = vmatpush1.msra.mxu0 %v1479
    %1508 = vmatprep.subr.mxu0 0.0
    %1509 = vmatpush1.msra.mxu0 %v1480
    %1510 = vmatprep.subr.mxu0 0.0
    %1511 = vmatpush1.msra.mxu0 %v1481
    %1512 = vmatprep.subr.mxu0 0.0
    %1513 = vmatpush1.msra.mxu0 %v1482
    %1514 = vmatprep.subr.mxu0 0.0
    %1515 = vmatpush1.msra.mxu0 %v1483
    %1516 = vmatprep.subr.mxu0 0.0
    %1517 = vmatpush1.msra.mxu0 0.0
    %1518 = vmatprep.subr.mxu0 0.0
    %1519 = vmatpush1.msra.mxu0 0.0
    %1520 = vmatprep.subr.mxu0 0.0
    %1521 = vmatpush1.msra.mxu0 0.0
    %1522 = vmatprep.subr.mxu0 0.0
    %1523 = vmatpush1.msra.mxu0 0.0
    %1524 = vmatprep.subr.mxu0 0.0
    %1525 = vmatpush1.msra.mxu0 0.0
    %1526 = vmatprep.subr.mxu0 0.0
    %1527 = vmatpush1.msra.mxu0 0.0
    %1528 = vmatprep.subr.mxu0 0.0
    %1529 = vmatpush1.msra.mxu0 0.0
    %1530 = vmatprep.subr.mxu0 0.0
    %1531 = vmatpush1.msra.mxu0 0.0
    %1532 = vmatprep.subr.mxu0 0.0
    %1533 = vmatpush1.msra.mxu0 0.0
    %1534 = vmatprep.subr.mxu0 0.0
    %1535 = vmatpush1.msra.mxu0 0.0
    %1536 = vmatprep.subr.mxu0 0.0
    %1537 = vmatpush1.msra.mxu0 0.0
    %1538 = vmatprep.subr.mxu0 0.0
    %1539 = vmatpush1.msra.mxu0 0.0
    %1540 = vmatprep.subr.mxu0 0.0
    %1541 = vmatpush1.msra.mxu0 0.0
    %1542 = vmatprep.subr.mxu0 0.0
    %1543 = vmatpush1.msra.mxu0 0.0
    %1544 = vmatprep.subr.mxu0 0.0
    %1545 = vmatpush1.msra.mxu0 0.0
    %1546 = vmatprep.subr.mxu0 0.0
    %1547 = vmatpush1.msra.mxu0 0.0
    %1548 = vmatprep.mubr.f32.mxu0 0.0
    %1549 = vmatmul.mubr.f32.gmra.mrb[0].mxu0 %v1459
    %v1550 = vpop.f32.mrb[0].mxu0
    %v1551 = vadd.f32 0.0, %v1550
    %v1552 = vpop.f32.mrb[0].mxu0
    %1553 = vmatprep.mubr.f32.mxu0 0.0
    %1554 = vmatmul.mubr.f32.gmra.mrb[0].mxu0 %v1464
    %v1555 = vpop.f32.mrb[0].mxu0
    %v1556 = vadd.f32 0.0, %v1555
    %v1557 = vpop.f32.mrb[0].mxu0
    %1558 = vdwg.mxu0
    %v1559 = vadd.f32 %v1375, %v1551
    %v1560 = vadd.f32 %v1380, %v1556
    %v1561 = vld [vmem:[#allocation10] sm:$0x1]
    %v1563 = vlaneseq
    %v1564 = vshrl.u32 %v1563, 7
    %v1565 = vsub.s32 0, %v1564
    %v1566 = vrot.slane %v1561, %v1565
    %v1568 = vadd.f32 %v1559, %v1566
    %v1569 = vadd.f32 %v1560, %v1566
    %v1570 = vmin.f32 %v1568, 0.0
    %v1571 = vmin.f32 %v1569, 0.0
    %v1572 = vmul.f32 %v1570, 1.442695
    %v1573 = vpow.pop %v1572
    %v1574 = vmul.f32 %v1571, 1.442695
    %v1575 = vpow.pop %v1574
    %v1576 = vsub.f32 %v1573, 1.0
    %v1577 = vsub.f32 %v1575, 1.0
    %v1578 = vmul.f32 %v1576, 1.6732632
    %v1579 = vmul.f32 %v1577, 1.6732632
    %vm1580 = vcmp.gt.f32.partialorder %v1568, 0.0
    %vm1581 = vcmp.gt.f32.partialorder %v1569, 0.0
    %v1582 = vsel %vm1580, %v1568, %v1578
    %v1583 = vsel %vm1581, %v1569, %v1579
    %v1584 = vmul.f32 %v1582, 1.050701
    %v1585 = vmul.f32 %v1583, 1.050701
    %v1586 = vld [vmem:[#allocation11] sm:$0xff]
    %v1587 = vld [vmem:[#allocation11 + $0x8] sm:$0xff]
    %vm1588 = vcmask 130048
    %v1590 = vsel %vm1588, %v1586, 0
    %v1593 = vsel %vm1588, %v1587, 0
    %1595 = vmatprep.subr.mxu0 0.0
    %1596 = vmatpush1.msra.mxu0 %v1584
    %1597 = vmatprep.subr.mxu0 0.0
    %1598 = vmatpush1.msra.mxu0 %v1585
    %1599 = vmatprep.subr.mxu0 0.0
    %1600 = vmatpush1.msra.mxu0 0.0
    %1601 = vmatprep.subr.mxu0 0.0
    %1602 = vmatpush1.msra.mxu0 0.0
    %1603 = vmatprep.subr.mxu0 0.0
    %1604 = vmatpush1.msra.mxu0 0.0
    %1605 = vmatprep.subr.mxu0 0.0
    %1606 = vmatpush1.msra.mxu0 0.0
    %1607 = vmatprep.subr.mxu0 0.0
    %1608 = vmatpush1.msra.mxu0 0.0
    %1609 = vmatprep.subr.mxu0 0.0
    %1610 = vmatpush1.msra.mxu0 0.0
    %1611 = vmatprep.subr.mxu0 0.0
    %1612 = vmatpush1.msra.mxu0 0.0
    %1613 = vmatprep.subr.mxu0 0.0
    %1614 = vmatpush1.msra.mxu0 0.0
    %1615 = vmatprep.subr.mxu0 0.0
    %1616 = vmatpush1.msra.mxu0 0.0
    %1617 = vmatprep.subr.mxu0 0.0
    %1618 = vmatpush1.msra.mxu0 0.0
    %1619 = vmatprep.subr.mxu0 0.0
    %1620 = vmatpush1.msra.mxu0 0.0
    %1621 = vmatprep.subr.mxu0 0.0
    %1622 = vmatpush1.msra.mxu0 0.0
    %1623 = vmatprep.subr.mxu0 0.0
    %1624 = vmatpush1.msra.mxu0 0.0
    %1625 = vmatprep.subr.mxu0 0.0
    %1626 = vmatpush1.msra.mxu0 0.0
    %1627 = vmatprep.subr.mxu0 0.0
    %1628 = vmatpush1.msra.mxu0 0.0
    %1629 = vmatprep.subr.mxu0 0.0
    %1630 = vmatpush1.msra.mxu0 0.0
    %1631 = vmatprep.subr.mxu0 0.0
    %1632 = vmatpush1.msra.mxu0 0.0
    %1633 = vmatprep.subr.mxu0 0.0
    %1634 = vmatpush1.msra.mxu0 0.0
    %1635 = vmatprep.subr.mxu0 0.0
    %1636 = vmatpush1.msra.mxu0 0.0
    %1637 = vmatprep.subr.mxu0 0.0
    %1638 = vmatpush1.msra.mxu0 0.0
    %1639 = vmatprep.subr.mxu0 0.0
    %1640 = vmatpush1.msra.mxu0 0.0
    %1641 = vmatprep.subr.mxu0 0.0
    %1642 = vmatpush1.msra.mxu0 0.0
    %1643 = vmatprep.subr.mxu0 0.0
    %1644 = vmatpush1.msra.mxu0 0.0
    %1645 = vmatprep.subr.mxu0 0.0
    %1646 = vmatpush1.msra.mxu0 0.0
    %1647 = vmatprep.subr.mxu0 0.0
    %1648 = vmatpush1.msra.mxu0 0.0
    %1649 = vmatprep.subr.mxu0 0.0
    %1650 = vmatpush1.msra.mxu0 0.0
    %1651 = vmatprep.subr.mxu0 0.0
    %1652 = vmatpush1.msra.mxu0 0.0
    %1653 = vmatprep.subr.mxu0 0.0
    %1654 = vmatpush1.msra.mxu0 0.0
    %1655 = vmatprep.subr.mxu0 0.0
    %1656 = vmatpush1.msra.mxu0 0.0
    %1657 = vmatprep.subr.mxu0 0.0
    %1658 = vmatpush1.msra.mxu0 0.0
    %1659 = vmatprep.mubr.f32.mxu0 0.0
    %1660 = vmatmul.mubr.f32.gmra.mrb[0].mxu0 %v1590
    %v1661 = vpop.f32.mrb[0].mxu0
    %v1662 = vadd.f32 0.0, %v1661
    %v1663 = vpop.f32.mrb[0].mxu0
    %1664 = vmatprep.mubr.f32.mxu0 0.0
    %1665 = vmatmul.mubr.f32.gmra.mrb[0].mxu0 %v1593
    %v1666 = vpop.f32.mrb[0].mxu0
    %v1667 = vadd.f32 0.0, %v1666
    %v1668 = vpop.f32.mrb[0].mxu0
    %1669 = vdwg.mxu0
    %v1670 = vld [vmem:[#allocation13] sm:$0xff]
    %v1671 = vld [vmem:[#allocation13 + $0x8] sm:$0xff]
    %v1672 = vld [vmem:[#allocation13 + $0x10] sm:$0xff]
    %v1673 = vld [vmem:[#allocation13 + $0x18] sm:$0xff]
    %v1674 = vld [vmem:[#allocation13 + $0x20] sm:$0xff]
    %v1675 = vld [vmem:[#allocation13 + $0x28] sm:$0xff]
    %v1676 = vld [vmem:[#allocation13 + $0x30] sm:$0xff]
    %v1677 = vld [vmem:[#allocation13 + $0x38] sm:$0xff]
    %v1678 = vld [vmem:[#allocation13 + $0x40] sm:$0xff]
    %v1679 = vld [vmem:[#allocation13 + $0x48] sm:$0xff]
    %v1680 = vld [vmem:[#allocation13 + $0x50] sm:$0xff]
    %v1681 = vld [vmem:[#allocation13 + $0x58] sm:$0xff]
    %v1682 = vld [vmem:[#allocation13 + $0x60] sm:$0xff]
    %v1683 = vld [vmem:[#allocation13 + $0x68] sm:$0xff]
    %v1684 = vld [vmem:[#allocation13 + $0x70] sm:$0xff]
    %v1685 = vld [vmem:[#allocation13 + $0x78] sm:$0xff]
    %s1686 = scalar_lea.vmem [#allocation11], 16
    %v1687 = vld [vmem:[%s1686] sm:$0xff]
    %v1688 = vld [vmem:[%s1686 + $0x8] sm:$0xff]
    %v1690 = vsel %vm1588, %v1687, 0
    %v1693 = vsel %vm1588, %v1688, 0
    %1695 = vmatprep.subr.mxu0 0.0
    %1696 = vmatpush1.msra.mxu0 %v1584
    %1697 = vmatprep.subr.mxu0 0.0
    %1698 = vmatpush1.msra.mxu0 %v1585
    %1699 = vmatprep.subr.mxu0 0.0
    %1700 = vmatpush1.msra.mxu0 0.0
    %1701 = vmatprep.subr.mxu0 0.0
    %1702 = vmatpush1.msra.mxu0 0.0
    %1703 = vmatprep.subr.mxu0 0.0
    %1704 = vmatpush1.msra.mxu0 0.0
    %1705 = vmatprep.subr.mxu0 0.0
    %1706 = vmatpush1.msra.mxu0 0.0
    %1707 = vmatprep.subr.mxu0 0.0
    %1708 = vmatpush1.msra.mxu0 0.0
    %1709 = vmatprep.subr.mxu0 0.0
    %1710 = vmatpush1.msra.mxu0 0.0
    %1711 = vmatprep.subr.mxu0 0.0
    %1712 = vmatpush1.msra.mxu0 0.0
    %1713 = vmatprep.subr.mxu0 0.0
    %1714 = vmatpush1.msra.mxu0 0.0
    %1715 = vmatprep.subr.mxu0 0.0
    %1716 = vmatpush1.msra.mxu0 0.0
    %1717 = vmatprep.subr.mxu0 0.0
    %1718 = vmatpush1.msra.mxu0 0.0
    %1719 = vmatprep.subr.mxu0 0.0
    %1720 = vmatpush1.msra.mxu0 0.0
    %1721 = vmatprep.subr.mxu0 0.0
    %1722 = vmatpush1.msra.mxu0 0.0
    %1723 = vmatprep.subr.mxu0 0.0
    %1724 = vmatpush1.msra.mxu0 0.0
    %1725 = vmatprep.subr.mxu0 0.0
    %1726 = vmatpush1.msra.mxu0 0.0
    %1727 = vmatprep.subr.mxu0 0.0
    %1728 = vmatpush1.msra.mxu0 0.0
    %1729 = vmatprep.subr.mxu0 0.0
    %1730 = vmatpush1.msra.mxu0 0.0
    %1731 = vmatprep.subr.mxu0 0.0
    %1732 = vmatpush1.msra.mxu0 0.0
    %1733 = vmatprep.subr.mxu0 0.0
    %1734 = vmatpush1.msra.mxu0 0.0
    %1735 = vmatprep.subr.mxu0 0.0
    %1736 = vmatpush1.msra.mxu0 0.0
    %1737 = vmatprep.subr.mxu0 0.0
    %1738 = vmatpush1.msra.mxu0 0.0
    %1739 = vmatprep.subr.mxu0 0.0
    %1740 = vmatpush1.msra.mxu0 0.0
    %1741 = vmatprep.subr.mxu0 0.0
    %1742 = vmatpush1.msra.mxu0 0.0
    %1743 = vmatprep.subr.mxu0 0.0
    %1744 = vmatpush1.msra.mxu0 0.0
    %1745 = vmatprep.subr.mxu0 0.0
    %1746 = vmatpush1.msra.mxu0 0.0
    %1747 = vmatprep.subr.mxu0 0.0
    %1748 = vmatpush1.msra.mxu0 0.0
    %1749 = vmatprep.subr.mxu0 0.0
    %1750 = vmatpush1.msra.mxu0 0.0
    %1751 = vmatprep.subr.mxu0 0.0
    %1752 = vmatpush1.msra.mxu0 0.0
    %1753 = vmatprep.subr.mxu0 0.0
    %1754 = vmatpush1.msra.mxu0 0.0
    %1755 = vmatprep.subr.mxu0 0.0
    %1756 = vmatpush1.msra.mxu0 0.0
    %1757 = vmatprep.subr.mxu0 0.0
    %1758 = vmatpush1.msra.mxu0 0.0
    %1759 = vmatprep.mubr.f32.mxu0 0.0
    %1760 = vmatmul.mubr.f32.gmra.mrb[0].mxu0 %v1690
    %v1761 = vpop.f32.mrb[0].mxu0
    %v1762 = vadd.f32 0.0, %v1761
    %v1763 = vpop.f32.mrb[0].mxu0
    %1764 = vmatprep.mubr.f32.mxu0 0.0
    %1765 = vmatmul.mubr.f32.gmra.mrb[0].mxu0 %v1693
    %v1766 = vpop.f32.mrb[0].mxu0
    %v1767 = vadd.f32 0.0, %v1766
    %v1768 = vpop.f32.mrb[0].mxu0
    %1769 = vdwg.mxu0
    %s1770 = scalar_lea.vmem [#allocation13], 128
    %v1771 = vld [vmem:[%s1770] sm:$0xff]
    %v1772 = vld [vmem:[%s1770 + $0x8] sm:$0xff]
    %v1773 = vld [vmem:[%s1770 + $0x10] sm:$0xff]
    %v1774 = vld [vmem:[%s1770 + $0x18] sm:$0xff]
    %v1775 = vld [vmem:[%s1770 + $0x20] sm:$0xff]
    %v1776 = vld [vmem:[%s1770 + $0x28] sm:$0xff]
    %v1777 = vld [vmem:[%s1770 + $0x30] sm:$0xff]
    %v1778 = vld [vmem:[%s1770 + $0x38] sm:$0xff]
    %v1779 = vld [vmem:[%s1770 + $0x40] sm:$0xff]
    %v1780 = vld [vmem:[%s1770 + $0x48] sm:$0xff]
    %v1781 = vld [vmem:[%s1770 + $0x50] sm:$0xff]
    %v1782 = vld [vmem:[%s1770 + $0x58] sm:$0xff]
    %v1783 = vld [vmem:[%s1770 + $0x60] sm:$0xff]
    %v1784 = vld [vmem:[%s1770 + $0x68] sm:$0xff]
    %v1785 = vld [vmem:[%s1770 + $0x70] sm:$0xff]
    %v1786 = vld [vmem:[%s1770 + $0x78] sm:$0xff]
    %1787 = vmatprep.subr.mxu0 0.0
    %1788 = vmatpush1.msra.mxu0 %v1771
    %1789 = vmatprep.subr.mxu0 0.0
    %1790 = vmatpush1.msra.mxu0 %v1772
    %1791 = vmatprep.subr.mxu0 0.0
    %1792 = vmatpush1.msra.mxu0 %v1773
    %1793 = vmatprep.subr.mxu0 0.0
    %1794 = vmatpush1.msra.mxu0 %v1774
    %1795 = vmatprep.subr.mxu0 0.0
    %1796 = vmatpush1.msra.mxu0 %v1775
    %1797 = vmatprep.subr.mxu0 0.0
    %1798 = vmatpush1.msra.mxu0 %v1776
    %1799 = vmatprep.subr.mxu0 0.0
    %1800 = vmatpush1.msra.mxu0 %v1777
    %1801 = vmatprep.subr.mxu0 0.0
    %1802 = vmatpush1.msra.mxu0 %v1778
    %1803 = vmatprep.subr.mxu0 0.0
    %1804 = vmatpush1.msra.mxu0 %v1779
    %1805 = vmatprep.subr.mxu0 0.0
    %1806 = vmatpush1.msra.mxu0 %v1780
    %1807 = vmatprep.subr.mxu0 0.0
    %1808 = vmatpush1.msra.mxu0 %v1781
    %1809 = vmatprep.subr.mxu0 0.0
    %1810 = vmatpush1.msra.mxu0 %v1782
    %1811 = vmatprep.subr.mxu0 0.0
    %1812 = vmatpush1.msra.mxu0 %v1783
    %1813 = vmatprep.subr.mxu0 0.0
    %1814 = vmatpush1.msra.mxu0 %v1784
    %1815 = vmatprep.subr.mxu0 0.0
    %1816 = vmatpush1.msra.mxu0 %v1785
    %1817 = vmatprep.subr.mxu0 0.0
    %1818 = vmatpush1.msra.mxu0 %v1786
    %1819 = vmatprep.subr.mxu0 0.0
    %1820 = vmatpush1.msra.mxu0 0.0
    %1821 = vmatprep.subr.mxu0 0.0
    %1822 = vmatpush1.msra.mxu0 0.0
    %1823 = vmatprep.subr.mxu0 0.0
    %1824 = vmatpush1.msra.mxu0 0.0
    %1825 = vmatprep.subr.mxu0 0.0
    %1826 = vmatpush1.msra.mxu0 0.0
    %1827 = vmatprep.subr.mxu0 0.0
    %1828 = vmatpush1.msra.mxu0 0.0
    %1829 = vmatprep.subr.mxu0 0.0
    %1830 = vmatpush1.msra.mxu0 0.0
    %1831 = vmatprep.subr.mxu0 0.0
    %1832 = vmatpush1.msra.mxu0 0.0
    %1833 = vmatprep.subr.mxu0 0.0
    %1834 = vmatpush1.msra.mxu0 0.0
    %1835 = vmatprep.subr.mxu0 0.0
    %1836 = vmatpush1.msra.mxu0 0.0
    %1837 = vmatprep.subr.mxu0 0.0
    %1838 = vmatpush1.msra.mxu0 0.0
    %1839 = vmatprep.subr.mxu0 0.0
    %1840 = vmatpush1.msra.mxu0 0.0
    %1841 = vmatprep.subr.mxu0 0.0
    %1842 = vmatpush1.msra.mxu0 0.0
    %1843 = vmatprep.subr.mxu0 0.0
    %1844 = vmatpush1.msra.mxu0 0.0
    %1845 = vmatprep.subr.mxu0 0.0
    %1846 = vmatpush1.msra.mxu0 0.0
    %1847 = vmatprep.subr.mxu0 0.0
    %1848 = vmatpush1.msra.mxu0 0.0
    %1849 = vmatprep.subr.mxu0 0.0
    %1850 = vmatpush1.msra.mxu0 0.0
    %1851 = vmatprep.mubr.f32.mxu0 0.0
    %1852 = vmatmul.mubr.f32.gmra.mrb[0].mxu0 %v1762
    %v1853 = vpop.f32.mrb[0].mxu0
    %v1854 = vadd.f32 0.0, %v1853
    %v1855 = vpop.f32.mrb[0].mxu0
    %1856 = vmatprep.mubr.f32.mxu0 0.0
    %1857 = vmatmul.mubr.f32.gmra.mrb[0].mxu0 %v1767
    %v1858 = vpop.f32.mrb[0].mxu0
    %v1859 = vadd.f32 0.0, %v1858
    %v1860 = vpop.f32.mrb[0].mxu0
    %1861 = vdwg.mxu0
    %1862 = vmatprep.subr.mxu0 0.0
    %1863 = vmatpush1.msra.mxu0 %v1670
    %1864 = vmatprep.subr.mxu0 0.0
    %1865 = vmatpush1.msra.mxu0 %v1671
    %1866 = vmatprep.subr.mxu0 0.0
    %1867 = vmatpush1.msra.mxu0 %v1672
    %1868 = vmatprep.subr.mxu0 0.0
    %1869 = vmatpush1.msra.mxu0 %v1673
    %1870 = vmatprep.subr.mxu0 0.0
    %1871 = vmatpush1.msra.mxu0 %v1674
    %1872 = vmatprep.subr.mxu0 0.0
    %1873 = vmatpush1.msra.mxu0 %v1675
    %1874 = vmatprep.subr.mxu0 0.0
    %1875 = vmatpush1.msra.mxu0 %v1676
    %1876 = vmatprep.subr.mxu0 0.0
    %1877 = vmatpush1.msra.mxu0 %v1677
    %1878 = vmatprep.subr.mxu0 0.0
    %1879 = vmatpush1.msra.mxu0 %v1678
    %1880 = vmatprep.subr.mxu0 0.0
    %1881 = vmatpush1.msra.mxu0 %v1679
    %1882 = vmatprep.subr.mxu0 0.0
    %1883 = vmatpush1.msra.mxu0 %v1680
    %1884 = vmatprep.subr.mxu0 0.0
    %1885 = vmatpush1.msra.mxu0 %v1681
    %1886 = vmatprep.subr.mxu0 0.0
    %1887 = vmatpush1.msra.mxu0 %v1682
    %1888 = vmatprep.subr.mxu0 0.0
    %1889 = vmatpush1.msra.mxu0 %v1683
    %1890 = vmatprep.subr.mxu0 0.0
    %1891 = vmatpush1.msra.mxu0 %v1684
    %1892 = vmatprep.subr.mxu0 0.0
    %1893 = vmatpush1.msra.mxu0 %v1685
    %1894 = vmatprep.subr.mxu0 0.0
    %1895 = vmatpush1.msra.mxu0 0.0
    %1896 = vmatprep.subr.mxu0 0.0
    %1897 = vmatpush1.msra.mxu0 0.0
    %1898 = vmatprep.subr.mxu0 0.0
    %1899 = vmatpush1.msra.mxu0 0.0
    %1900 = vmatprep.subr.mxu0 0.0
    %1901 = vmatpush1.msra.mxu0 0.0
    %1902 = vmatprep.subr.mxu0 0.0
    %1903 = vmatpush1.msra.mxu0 0.0
    %1904 = vmatprep.subr.mxu0 0.0
    %1905 = vmatpush1.msra.mxu0 0.0
    %1906 = vmatprep.subr.mxu0 0.0
    %1907 = vmatpush1.msra.mxu0 0.0
    %1908 = vmatprep.subr.mxu0 0.0
    %1909 = vmatpush1.msra.mxu0 0.0
    %1910 = vmatprep.subr.mxu0 0.0
    %1911 = vmatpush1.msra.mxu0 0.0
    %1912 = vmatprep.subr.mxu0 0.0
    %1913 = vmatpush1.msra.mxu0 0.0
    %1914 = vmatprep.subr.mxu0 0.0
    %1915 = vmatpush1.msra.mxu0 0.0
    %1916 = vmatprep.subr.mxu0 0.0
    %1917 = vmatpush1.msra.mxu0 0.0
    %1918 = vmatprep.subr.mxu0 0.0
    %1919 = vmatpush1.msra.mxu0 0.0
    %1920 = vmatprep.subr.mxu0 0.0
    %1921 = vmatpush1.msra.mxu0 0.0
    %1922 = vmatprep.subr.mxu0 0.0
    %1923 = vmatpush1.msra.mxu0 0.0
    %1924 = vmatprep.subr.mxu0 0.0
    %1925 = vmatpush1.msra.mxu0 0.0
    %1926 = vmatprep.mubr.f32.mxu0 0.0
    %1927 = vmatmul.mubr.f32.gmra.mrb[0].mxu0 %v1662
    %v1928 = vpop.f32.mrb[0].mxu0
    %v1929 = vadd.f32 %v1854, %v1928
    %v1930 = vpop.f32.mrb[0].mxu0
    %1931 = vmatprep.mubr.f32.mxu0 0.0
    %1932 = vmatmul.mubr.f32.gmra.mrb[0].mxu0 %v1667
    %v1933 = vpop.f32.mrb[0].mxu0
    %v1934 = vadd.f32 %v1859, %v1933
    %v1935 = vpop.f32.mrb[0].mxu0
    %1936 = vdwg.mxu0
    %s1937 = scalar_lea.vmem [#allocation11], 32
    %v1938 = vld [vmem:[%s1937] sm:$0xff]
    %v1939 = vld [vmem:[%s1937 + $0x8] sm:$0xff]
    %v1941 = vsel %vm1588, %v1938, 0
    %v1944 = vsel %vm1588, %v1939, 0
    %1946 = vmatprep.subr.mxu0 0.0
    %1947 = vmatpush1.msra.mxu0 %v1584
    %1948 = vmatprep.subr.mxu0 0.0
    %1949 = vmatpush1.msra.mxu0 %v1585
    %1950 = vmatprep.subr.mxu0 0.0
    %1951 = vmatpush1.msra.mxu0 0.0
    %1952 = vmatprep.subr.mxu0 0.0
    %1953 = vmatpush1.msra.mxu0 0.0
    %1954 = vmatprep.subr.mxu0 0.0
    %1955 = vmatpush1.msra.mxu0 0.0
    %1956 = vmatprep.subr.mxu0 0.0
    %1957 = vmatpush1.msra.mxu0 0.0
    %1958 = vmatprep.subr.mxu0 0.0
    %1959 = vmatpush1.msra.mxu0 0.0
    %1960 = vmatprep.subr.mxu0 0.0
    %1961 = vmatpush1.msra.mxu0 0.0
    %1962 = vmatprep.subr.mxu0 0.0
    %1963 = vmatpush1.msra.mxu0 0.0
    %1964 = vmatprep.subr.mxu0 0.0
    %1965 = vmatpush1.msra.mxu0 0.0
    %1966 = vmatprep.subr.mxu0 0.0
    %1967 = vmatpush1.msra.mxu0 0.0
    %1968 = vmatprep.subr.mxu0 0.0
    %1969 = vmatpush1.msra.mxu0 0.0
    %1970 = vmatprep.subr.mxu0 0.0
    %1971 = vmatpush1.msra.mxu0 0.0
    %1972 = vmatprep.subr.mxu0 0.0
    %1973 = vmatpush1.msra.mxu0 0.0
    %1974 = vmatprep.subr.mxu0 0.0
    %1975 = vmatpush1.msra.mxu0 0.0
    %1976 = vmatprep.subr.mxu0 0.0
    %1977 = vmatpush1.msra.mxu0 0.0
    %1978 = vmatprep.subr.mxu0 0.0
    %1979 = vmatpush1.msra.mxu0 0.0
    %1980 = vmatprep.subr.mxu0 0.0
    %1981 = vmatpush1.msra.mxu0 0.0
    %1982 = vmatprep.subr.mxu0 0.0
    %1983 = vmatpush1.msra.mxu0 0.0
    %1984 = vmatprep.subr.mxu0 0.0
    %1985 = vmatpush1.msra.mxu0 0.0
    %1986 = vmatprep.subr.mxu0 0.0
    %1987 = vmatpush1.msra.mxu0 0.0
    %1988 = vmatprep.subr.mxu0 0.0
    %1989 = vmatpush1.msra.mxu0 0.0
    %1990 = vmatprep.subr.mxu0 0.0
    %1991 = vmatpush1.msra.mxu0 0.0
    %1992 = vmatprep.subr.mxu0 0.0
    %1993 = vmatpush1.msra.mxu0 0.0
    %1994 = vmatprep.subr.mxu0 0.0
    %1995 = vmatpush1.msra.mxu0 0.0
    %1996 = vmatprep.subr.mxu0 0.0
    %1997 = vmatpush1.msra.mxu0 0.0
    %1998 = vmatprep.subr.mxu0 0.0
    %1999 = vmatpush1.msra.mxu0 0.0
    %2000 = vmatprep.subr.mxu0 0.0
    %2001 = vmatpush1.msra.mxu0 0.0
    %2002 = vmatprep.subr.mxu0 0.0
    %2003 = vmatpush1.msra.mxu0 0.0
    %2004 = vmatprep.subr.mxu0 0.0
    %2005 = vmatpush1.msra.mxu0 0.0
    %2006 = vmatprep.subr.mxu0 0.0
    %2007 = vmatpush1.msra.mxu0 0.0
    %2008 = vmatprep.subr.mxu0 0.0
    %2009 = vmatpush1.msra.mxu0 0.0
    %2010 = vmatprep.mubr.f32.mxu0 0.0
    %2011 = vmatmul.mubr.f32.gmra.mrb[0].mxu0 %v1941
    %v2012 = vpop.f32.mrb[0].mxu0
    %v2013 = vadd.f32 0.0, %v2012
    %v2014 = vpop.f32.mrb[0].mxu0
    %2015 = vmatprep.mubr.f32.mxu0 0.0
    %2016 = vmatmul.mubr.f32.gmra.mrb[0].mxu0 %v1944
    %v2017 = vpop.f32.mrb[0].mxu0
    %v2018 = vadd.f32 0.0, %v2017
    %v2019 = vpop.f32.mrb[0].mxu0
    %2020 = vdwg.mxu0
    %s2021 = scalar_lea.vmem [#allocation13], 256
    %v2022 = vld [vmem:[%s2021] sm:$0xff]
    %v2023 = vld [vmem:[%s2021 + $0x8] sm:$0xff]
    %v2024 = vld [vmem:[%s2021 + $0x10] sm:$0xff]
    %v2025 = vld [vmem:[%s2021 + $0x18] sm:$0xff]
    %v2026 = vld [vmem:[%s2021 + $0x20] sm:$0xff]
    %v2027 = vld [vmem:[%s2021 + $0x28] sm:$0xff]
    %v2028 = vld [vmem:[%s2021 + $0x30] sm:$0xff]
    %v2029 = vld [vmem:[%s2021 + $0x38] sm:$0xff]
    %v2030 = vld [vmem:[%s2021 + $0x40] sm:$0xff]
    %v2031 = vld [vmem:[%s2021 + $0x48] sm:$0xff]
    %v2032 = vld [vmem:[%s2021 + $0x50] sm:$0xff]
    %v2033 = vld [vmem:[%s2021 + $0x58] sm:$0xff]
    %v2034 = vld [vmem:[%s2021 + $0x60] sm:$0xff]
    %v2035 = vld [vmem:[%s2021 + $0x68] sm:$0xff]
    %v2036 = vld [vmem:[%s2021 + $0x70] sm:$0xff]
    %v2037 = vld [vmem:[%s2021 + $0x78] sm:$0xff]
    %2038 = vmatprep.subr.mxu0 0.0
    %2039 = vmatpush1.msra.mxu0 %v2022
    %2040 = vmatprep.subr.mxu0 0.0
    %2041 = vmatpush1.msra.mxu0 %v2023
    %2042 = vmatprep.subr.mxu0 0.0
    %2043 = vmatpush1.msra.mxu0 %v2024
    %2044 = vmatprep.subr.mxu0 0.0
    %2045 = vmatpush1.msra.mxu0 %v2025
    %2046 = vmatprep.subr.mxu0 0.0
    %2047 = vmatpush1.msra.mxu0 %v2026
    %2048 = vmatprep.subr.mxu0 0.0
    %2049 = vmatpush1.msra.mxu0 %v2027
    %2050 = vmatprep.subr.mxu0 0.0
    %2051 = vmatpush1.msra.mxu0 %v2028
    %2052 = vmatprep.subr.mxu0 0.0
    %2053 = vmatpush1.msra.mxu0 %v2029
    %2054 = vmatprep.subr.mxu0 0.0
    %2055 = vmatpush1.msra.mxu0 %v2030
    %2056 = vmatprep.subr.mxu0 0.0
    %2057 = vmatpush1.msra.mxu0 %v2031
    %2058 = vmatprep.subr.mxu0 0.0
    %2059 = vmatpush1.msra.mxu0 %v2032
    %2060 = vmatprep.subr.mxu0 0.0
    %2061 = vmatpush1.msra.mxu0 %v2033
    %2062 = vmatprep.subr.mxu0 0.0
    %2063 = vmatpush1.msra.mxu0 %v2034
    %2064 = vmatprep.subr.mxu0 0.0
    %2065 = vmatpush1.msra.mxu0 %v2035
    %2066 = vmatprep.subr.mxu0 0.0
    %2067 = vmatpush1.msra.mxu0 %v2036
    %2068 = vmatprep.subr.mxu0 0.0
    %2069 = vmatpush1.msra.mxu0 %v2037
    %2070 = vmatprep.subr.mxu0 0.0
    %2071 = vmatpush1.msra.mxu0 0.0
    %2072 = vmatprep.subr.mxu0 0.0
    %2073 = vmatpush1.msra.mxu0 0.0
    %2074 = vmatprep.subr.mxu0 0.0
    %2075 = vmatpush1.msra.mxu0 0.0
    %2076 = vmatprep.subr.mxu0 0.0
    %2077 = vmatpush1.msra.mxu0 0.0
    %2078 = vmatprep.subr.mxu0 0.0
    %2079 = vmatpush1.msra.mxu0 0.0
    %2080 = vmatprep.subr.mxu0 0.0
    %2081 = vmatpush1.msra.mxu0 0.0
    %2082 = vmatprep.subr.mxu0 0.0
    %2083 = vmatpush1.msra.mxu0 0.0
    %2084 = vmatprep.subr.mxu0 0.0
    %2085 = vmatpush1.msra.mxu0 0.0
    %2086 = vmatprep.subr.mxu0 0.0
    %2087 = vmatpush1.msra.mxu0 0.0
    %2088 = vmatprep.subr.mxu0 0.0
    %2089 = vmatpush1.msra.mxu0 0.0
    %2090 = vmatprep.subr.mxu0 0.0
    %2091 = vmatpush1.msra.mxu0 0.0
    %2092 = vmatprep.subr.mxu0 0.0
    %2093 = vmatpush1.msra.mxu0 0.0
    %2094 = vmatprep.subr.mxu0 0.0
    %2095 = vmatpush1.msra.mxu0 0.0
    %2096 = vmatprep.subr.mxu0 0.0
    %2097 = vmatpush1.msra.mxu0 0.0
    %2098 = vmatprep.subr.mxu0 0.0
    %2099 = vmatpush1.msra.mxu0 0.0
    %2100 = vmatprep.subr.mxu0 0.0
    %2101 = vmatpush1.msra.mxu0 0.0
    %2102 = vmatprep.mubr.f32.mxu0 0.0
    %2103 = vmatmul.mubr.f32.gmra.mrb[0].mxu0 %v2013
    %v2104 = vpop.f32.mrb[0].mxu0
    %v2105 = vadd.f32 0.0, %v2104
    %v2106 = vpop.f32.mrb[0].mxu0
    %2107 = vmatprep.mubr.f32.mxu0 0.0
    %2108 = vmatmul.mubr.f32.gmra.mrb[0].mxu0 %v2018
    %v2109 = vpop.f32.mrb[0].mxu0
    %v2110 = vadd.f32 0.0, %v2109
    %v2111 = vpop.f32.mrb[0].mxu0
    %2112 = vdwg.mxu0
    %v2113 = vadd.f32 %v1929, %v2105
    %v2114 = vadd.f32 %v1934, %v2110
    %v2115 = vld [vmem:[#allocation14] sm:$0x1]
    %v2117 = vlaneseq
    %v2118 = vshrl.u32 %v2117, 7
    %v2119 = vsub.s32 0, %v2118
    %v2120 = vrot.slane %v2115, %v2119
    %v2122 = vadd.f32 %v2113, %v2120
    %v2123 = vadd.f32 %v2114, %v2120
    %v2124 = vmin.f32 %v2122, 0.0
    %v2125 = vmin.f32 %v2123, 0.0
    %v2126 = vmul.f32 %v2124, 1.442695
    %v2127 = vpow.pop %v2126
    %v2128 = vmul.f32 %v2125, 1.442695
    %v2129 = vpow.pop %v2128
    %v2130 = vsub.f32 %v2127, 1.0
    %v2131 = vsub.f32 %v2129, 1.0
    %v2132 = vmul.f32 %v2130, 1.6732632
    %v2133 = vmul.f32 %v2131, 1.6732632
    %vm2134 = vcmp.gt.f32.partialorder %v2122, 0.0
    %vm2135 = vcmp.gt.f32.partialorder %v2123, 0.0
    %v2136 = vsel %vm2134, %v2122, %v2132
    %v2137 = vsel %vm2135, %v2123, %v2133
    %v2138 = vmul.f32 %v2136, 1.050701
    %v2139 = vmul.f32 %v2137, 1.050701
    %v2140 = vld [vmem:[#allocation16] sm:$0xff]
    %v2141 = vld [vmem:[#allocation16 + $0x8] sm:$0xff]
    %v2143 = vsel %vm366, %v2140, 0
    %v2146 = vsel %vm366, %v2141, 0
    %2148 = vmatprep.subr.mxu0 0.0
    %2149 = vmatpush1.msra.mxu0 %v1029
    %2150 = vmatprep.subr.mxu0 0.0
    %2151 = vmatpush1.msra.mxu0 %v1030
    %2152 = vmatprep.subr.mxu0 0.0
    %2153 = vmatpush1.msra.mxu0 %v1031
    %2154 = vmatprep.subr.mxu0 0.0
    %2155 = vmatpush1.msra.mxu0 %v1032
    %2156 = vmatprep.subr.mxu0 0.0
    %2157 = vmatpush1.msra.mxu0 0.0
    %2158 = vmatprep.subr.mxu0 0.0
    %2159 = vmatpush1.msra.mxu0 0.0
    %2160 = vmatprep.subr.mxu0 0.0
    %2161 = vmatpush1.msra.mxu0 0.0
    %2162 = vmatprep.subr.mxu0 0.0
    %2163 = vmatpush1.msra.mxu0 0.0
    %2164 = vmatprep.subr.mxu0 0.0
    %2165 = vmatpush1.msra.mxu0 0.0
    %2166 = vmatprep.subr.mxu0 0.0
    %2167 = vmatpush1.msra.mxu0 0.0
    %2168 = vmatprep.subr.mxu0 0.0
    %2169 = vmatpush1.msra.mxu0 0.0
    %2170 = vmatprep.subr.mxu0 0.0
    %2171 = vmatpush1.msra.mxu0 0.0
    %2172 = vmatprep.subr.mxu0 0.0
    %2173 = vmatpush1.msra.mxu0 0.0
    %2174 = vmatprep.subr.mxu0 0.0
    %2175 = vmatpush1.msra.mxu0 0.0
    %2176 = vmatprep.subr.mxu0 0.0
    %2177 = vmatpush1.msra.mxu0 0.0
    %2178 = vmatprep.subr.mxu0 0.0
    %2179 = vmatpush1.msra.mxu0 0.0
    %2180 = vmatprep.subr.mxu0 0.0
    %2181 = vmatpush1.msra.mxu0 0.0
    %2182 = vmatprep.subr.mxu0 0.0
    %2183 = vmatpush1.msra.mxu0 0.0
    %2184 = vmatprep.subr.mxu0 0.0
    %2185 = vmatpush1.msra.mxu0 0.0
    %2186 = vmatprep.subr.mxu0 0.0
    %2187 = vmatpush1.msra.mxu0 0.0
    %2188 = vmatprep.subr.mxu0 0.0
    %2189 = vmatpush1.msra.mxu0 0.0
    %2190 = vmatprep.subr.mxu0 0.0
    %2191 = vmatpush1.msra.mxu0 0.0
    %2192 = vmatprep.subr.mxu0 0.0
    %2193 = vmatpush1.msra.mxu0 0.0
    %2194 = vmatprep.subr.mxu0 0.0
    %2195 = vmatpush1.msra.mxu0 0.0
    %2196 = vmatprep.subr.mxu0 0.0
    %2197 = vmatpush1.msra.mxu0 0.0
    %2198 = vmatprep.subr.mxu0 0.0
    %2199 = vmatpush1.msra.mxu0 0.0
    %2200 = vmatprep.subr.mxu0 0.0
    %2201 = vmatpush1.msra.mxu0 0.0
    %2202 = vmatprep.subr.mxu0 0.0
    %2203 = vmatpush1.msra.mxu0 0.0
    %2204 = vmatprep.subr.mxu0 0.0
    %2205 = vmatpush1.msra.mxu0 0.0
    %2206 = vmatprep.subr.mxu0 0.0
    %2207 = vmatpush1.msra.mxu0 0.0
    %2208 = vmatprep.subr.mxu0 0.0
    %2209 = vmatpush1.msra.mxu0 0.0
    %2210 = vmatprep.subr.mxu0 0.0
    %2211 = vmatpush1.msra.mxu0 0.0
    %2212 = vmatprep.mubr.f32.mxu0 0.0
    %2213 = vmatmul.mubr.f32.gmra.mrb[0].mxu0 %v2143
    %v2214 = vpop.f32.mrb[0].mxu0
    %v2215 = vadd.f32 0.0, %v2214
    %v2216 = vpop.f32.mrb[0].mxu0
    %2217 = vmatprep.mubr.f32.mxu0 0.0
    %2218 = vmatmul.mubr.f32.gmra.mrb[0].mxu0 %v2146
    %v2219 = vpop.f32.mrb[0].mxu0
    %v2220 = vadd.f32 0.0, %v2219
    %v2221 = vpop.f32.mrb[0].mxu0
    %2222 = vdwg.mxu0
    %v2223 = vld [vmem:[#allocation17] sm:$0xff]
    %v2224 = vld [vmem:[#allocation17 + $0x8] sm:$0xff]
    %v2225 = vld [vmem:[#allocation17 + $0x10] sm:$0xff]
    %v2226 = vld [vmem:[#allocation17 + $0x18] sm:$0xff]
    %v2227 = vld [vmem:[#allocation17 + $0x20] sm:$0xff]
    %v2228 = vld [vmem:[#allocation17 + $0x28] sm:$0xff]
    %v2229 = vld [vmem:[#allocation17 + $0x30] sm:$0xff]
    %v2230 = vld [vmem:[#allocation17 + $0x38] sm:$0xff]
    %v2231 = vld [vmem:[#allocation17 + $0x40] sm:$0xff]
    %v2232 = vld [vmem:[#allocation17 + $0x48] sm:$0xff]
    %v2233 = vld [vmem:[#allocation17 + $0x50] sm:$0xff]
    %v2234 = vld [vmem:[#allocation17 + $0x58] sm:$0xff]
    %v2235 = vld [vmem:[#allocation17 + $0x60] sm:$0xff]
    %v2236 = vld [vmem:[#allocation17 + $0x68] sm:$0xff]
    %v2237 = vld [vmem:[#allocation17 + $0x70] sm:$0xff]
    %v2238 = vld [vmem:[#allocation17 + $0x78] sm:$0xff]
    %v2239 = vld [vmem:[#allocation19] sm:$0x1]
    %v2241 = vlaneseq
    %v2242 = vshrl.u32 %v2241, 7
    %v2243 = vsub.s32 0, %v2242
    %v2244 = vrot.slane %v2239, %v2243
    %2246 = vmatprep.subr.mxu0 0.0
    %2247 = vmatpush1.msra.mxu0 %v2223
    %2248 = vmatprep.subr.mxu0 0.0
    %2249 = vmatpush1.msra.mxu0 %v2224
    %2250 = vmatprep.subr.mxu0 0.0
    %2251 = vmatpush1.msra.mxu0 %v2225
    %2252 = vmatprep.subr.mxu0 0.0
    %2253 = vmatpush1.msra.mxu0 %v2226
    %2254 = vmatprep.subr.mxu0 0.0
    %2255 = vmatpush1.msra.mxu0 %v2227
    %2256 = vmatprep.subr.mxu0 0.0
    %2257 = vmatpush1.msra.mxu0 %v2228
    %2258 = vmatprep.subr.mxu0 0.0
    %2259 = vmatpush1.msra.mxu0 %v2229
    %2260 = vmatprep.subr.mxu0 0.0
    %2261 = vmatpush1.msra.mxu0 %v2230
    %2262 = vmatprep.subr.mxu0 0.0
    %2263 = vmatpush1.msra.mxu0 %v2231
    %2264 = vmatprep.subr.mxu0 0.0
    %2265 = vmatpush1.msra.mxu0 %v2232
    %2266 = vmatprep.subr.mxu0 0.0
    %2267 = vmatpush1.msra.mxu0 %v2233
    %2268 = vmatprep.subr.mxu0 0.0
    %2269 = vmatpush1.msra.mxu0 %v2234
    %2270 = vmatprep.subr.mxu0 0.0
    %2271 = vmatpush1.msra.mxu0 %v2235
    %2272 = vmatprep.subr.mxu0 0.0
    %2273 = vmatpush1.msra.mxu0 %v2236
    %2274 = vmatprep.subr.mxu0 0.0
    %2275 = vmatpush1.msra.mxu0 %v2237
    %2276 = vmatprep.subr.mxu0 0.0
    %2277 = vmatpush1.msra.mxu0 %v2238
    %2278 = vmatprep.subr.mxu0 0.0
    %2279 = vmatpush1.msra.mxu0 0.0
    %2280 = vmatprep.subr.mxu0 0.0
    %2281 = vmatpush1.msra.mxu0 0.0
    %2282 = vmatprep.subr.mxu0 0.0
    %2283 = vmatpush1.msra.mxu0 0.0
    %2284 = vmatprep.subr.mxu0 0.0
    %2285 = vmatpush1.msra.mxu0 0.0
    %2286 = vmatprep.subr.mxu0 0.0
    %2287 = vmatpush1.msra.mxu0 0.0
    %2288 = vmatprep.subr.mxu0 0.0
    %2289 = vmatpush1.msra.mxu0 0.0
    %2290 = vmatprep.subr.mxu0 0.0
    %2291 = vmatpush1.msra.mxu0 0.0
    %2292 = vmatprep.subr.mxu0 0.0
    %2293 = vmatpush1.msra.mxu0 0.0
    %2294 = vmatprep.subr.mxu0 0.0
    %2295 = vmatpush1.msra.mxu0 0.0
    %2296 = vmatprep.subr.mxu0 0.0
    %2297 = vmatpush1.msra.mxu0 0.0
    %2298 = vmatprep.subr.mxu0 0.0
    %2299 = vmatpush1.msra.mxu0 0.0
    %2300 = vmatprep.subr.mxu0 0.0
    %2301 = vmatpush1.msra.mxu0 0.0
    %2302 = vmatprep.subr.mxu0 0.0
    %2303 = vmatpush1.msra.mxu0 0.0
    %2304 = vmatprep.subr.mxu0 0.0
    %2305 = vmatpush1.msra.mxu0 0.0
    %2306 = vmatprep.subr.mxu0 0.0
    %2307 = vmatpush1.msra.mxu0 0.0
    %2308 = vmatprep.subr.mxu0 0.0
    %2309 = vmatpush1.msra.mxu0 0.0
    %2310 = vmatprep.mubr.f32.mxu0 0.0
    %2311 = vmatmul.mubr.f32.gmra.mrb[0].mxu0 %v2215
    %v2312 = vpop.f32.mrb[0].mxu0
    %v2313 = vadd.f32 %v2244, %v2312
    %v2314 = vpop.f32.mrb[0].mxu0
    %2315 = vmatprep.mubr.f32.mxu0 0.0
    %2316 = vmatmul.mubr.f32.gmra.mrb[0].mxu0 %v2220
    %v2317 = vpop.f32.mrb[0].mxu0
    %v2318 = vadd.f32 %v2244, %v2317
    %v2319 = vpop.f32.mrb[0].mxu0
    %2320 = vdwg.mxu0
    %v2321 = vadd.f32 %v2313, %v2138
    %v2322 = vadd.f32 %v2318, %v2139
    %v2323 = vmin.f32 %v2321, 0.0
    %v2324 = vmin.f32 %v2322, 0.0
    %v2325 = vmul.f32 %v2323, 1.442695
    %v2326 = vpow.pop %v2325
    %v2327 = vmul.f32 %v2324, 1.442695
    %v2328 = vpow.pop %v2327
    %v2329 = vsub.f32 %v2326, 1.0
    %v2330 = vsub.f32 %v2328, 1.0
    %v2331 = vmul.f32 %v2329, 1.6732632
    %v2332 = vmul.f32 %v2330, 1.6732632
    %vm2333 = vcmp.gt.f32.partialorder %v2321, 0.0
    %vm2334 = vcmp.gt.f32.partialorder %v2322, 0.0
    %v2335 = vsel %vm2333, %v2321, %v2331
    %v2336 = vsel %vm2334, %v2322, %v2332
    %v2337 = vmul.f32 %v2335, 1.050701
    %v2338 = vmul.f32 %v2336, 1.050701
    %v2339 = vld [vmem:[#allocation20] sm:$0xff]
    %v2341 = vsel %vm1588, %v2339, 0
    %2343 = vmatprep.subr.mxu0 0.0
    %2344 = vmatpush1.msra.mxu0 %v2337
    %2345 = vmatprep.subr.mxu0 0.0
    %2346 = vmatpush1.msra.mxu0 %v2338
    %2347 = vmatprep.subr.mxu0 0.0
    %2348 = vmatpush1.msra.mxu0 0.0
    %2349 = vmatprep.subr.mxu0 0.0
    %2350 = vmatpush1.msra.mxu0 0.0
    %2351 = vmatprep.subr.mxu0 0.0
    %2352 = vmatpush1.msra.mxu0 0.0
    %2353 = vmatprep.subr.mxu0 0.0
    %2354 = vmatpush1.msra.mxu0 0.0
    %2355 = vmatprep.subr.mxu0 0.0
    %2356 = vmatpush1.msra.mxu0 0.0
    %2357 = vmatprep.subr.mxu0 0.0
    %2358 = vmatpush1.msra.mxu0 0.0
    %2359 = vmatprep.subr.mxu0 0.0
    %2360 = vmatpush1.msra.mxu0 0.0
    %2361 = vmatprep.subr.mxu0 0.0
    %2362 = vmatpush1.msra.mxu0 0.0
    %2363 = vmatprep.subr.mxu0 0.0
    %2364 = vmatpush1.msra.mxu0 0.0
    %2365 = vmatprep.subr.mxu0 0.0
    %2366 = vmatpush1.msra.mxu0 0.0
    %2367 = vmatprep.subr.mxu0 0.0
    %2368 = vmatpush1.msra.mxu0 0.0
    %2369 = vmatprep.subr.mxu0 0.0
    %2370 = vmatpush1.msra.mxu0 0.0
    %2371 = vmatprep.subr.mxu0 0.0
    %2372 = vmatpush1.msra.mxu0 0.0
    %2373 = vmatprep.subr.mxu0 0.0
    %2374 = vmatpush1.msra.mxu0 0.0
    %2375 = vmatprep.subr.mxu0 0.0
    %2376 = vmatpush1.msra.mxu0 0.0
    %2377 = vmatprep.subr.mxu0 0.0
    %2378 = vmatpush1.msra.mxu0 0.0
    %2379 = vmatprep.subr.mxu0 0.0
    %2380 = vmatpush1.msra.mxu0 0.0
    %2381 = vmatprep.subr.mxu0 0.0
    %2382 = vmatpush1.msra.mxu0 0.0
    %2383 = vmatprep.subr.mxu0 0.0
    %2384 = vmatpush1.msra.mxu0 0.0
    %2385 = vmatprep.subr.mxu0 0.0
    %2386 = vmatpush1.msra.mxu0 0.0
    %2387 = vmatprep.subr.mxu0 0.0
    %2388 = vmatpush1.msra.mxu0 0.0
    %2389 = vmatprep.subr.mxu0 0.0
    %2390 = vmatpush1.msra.mxu0 0.0
    %2391 = vmatprep.subr.mxu0 0.0
    %2392 = vmatpush1.msra.mxu0 0.0
    %2393 = vmatprep.subr.mxu0 0.0
    %2394 = vmatpush1.msra.mxu0 0.0
    %2395 = vmatprep.subr.mxu0 0.0
    %2396 = vmatpush1.msra.mxu0 0.0
    %2397 = vmatprep.subr.mxu0 0.0
    %2398 = vmatpush1.msra.mxu0 0.0
    %2399 = vmatprep.subr.mxu0 0.0
    %2400 = vmatpush1.msra.mxu0 0.0
    %2401 = vmatprep.subr.mxu0 0.0
    %2402 = vmatpush1.msra.mxu0 0.0
    %2403 = vmatprep.subr.mxu0 0.0
    %2404 = vmatpush1.msra.mxu0 0.0
    %2405 = vmatprep.subr.mxu0 0.0
    %2406 = vmatpush1.msra.mxu0 0.0
    %2407 = vmatprep.mubr.f32.mxu0 0.0
    %2408 = vmatmul.mubr.f32.gmra.mrb[0].mxu0 %v2341
    %v2409 = vpop.f32.mrb[0].mxu0
    %v2410 = vadd.f32 0.0, %v2409
    %v2411 = vpop.f32.mrb[0].mxu0
    %2412 = vdwg.mxu0
    %v2413 = vld [vmem:[#allocation22] sm:$0xff]
    %v2414 = vld [vmem:[#allocation22 + $0x8] sm:$0xff]
    %v2415 = vld [vmem:[#allocation22 + $0x10] sm:$0xff]
    %v2416 = vld [vmem:[#allocation22 + $0x18] sm:$0xff]
    %v2417 = vld [vmem:[#allocation22 + $0x20] sm:$0xff]
    %v2418 = vld [vmem:[#allocation22 + $0x28] sm:$0xff]
    %v2419 = vld [vmem:[#allocation22 + $0x30] sm:$0xff]
    %v2420 = vld [vmem:[#allocation22 + $0x38] sm:$0xff]
    %v2421 = vld [vmem:[#allocation22 + $0x40] sm:$0xff]
    %v2422 = vld [vmem:[#allocation22 + $0x48] sm:$0xff]
    %v2423 = vld [vmem:[#allocation22 + $0x50] sm:$0xff]
    %v2424 = vld [vmem:[#allocation22 + $0x58] sm:$0xff]
    %v2425 = vld [vmem:[#allocation22 + $0x60] sm:$0xff]
    %v2426 = vld [vmem:[#allocation22 + $0x68] sm:$0xff]
    %v2427 = vld [vmem:[#allocation22 + $0x70] sm:$0xff]
    %v2428 = vld [vmem:[#allocation22 + $0x78] sm:$0xff]
    %s2429 = scalar_lea.vmem [#allocation20], 8
    %v2430 = vld [vmem:[%s2429] sm:$0xff]
    %v2432 = vsel %vm1588, %v2430, 0
    %2434 = vmatprep.subr.mxu0 0.0
    %2435 = vmatpush1.msra.mxu0 %v2337
    %2436 = vmatprep.subr.mxu0 0.0
    %2437 = vmatpush1.msra.mxu0 %v2338
    %2438 = vmatprep.subr.mxu0 0.0
    %2439 = vmatpush1.msra.mxu0 0.0
    %2440 = vmatprep.subr.mxu0 0.0
    %2441 = vmatpush1.msra.mxu0 0.0
    %2442 = vmatprep.subr.mxu0 0.0
    %2443 = vmatpush1.msra.mxu0 0.0
    %2444 = vmatprep.subr.mxu0 0.0
    %2445 = vmatpush1.msra.mxu0 0.0
    %2446 = vmatprep.subr.mxu0 0.0
    %2447 = vmatpush1.msra.mxu0 0.0
    %2448 = vmatprep.subr.mxu0 0.0
    %2449 = vmatpush1.msra.mxu0 0.0
    %2450 = vmatprep.subr.mxu0 0.0
    %2451 = vmatpush1.msra.mxu0 0.0
    %2452 = vmatprep.subr.mxu0 0.0
    %2453 = vmatpush1.msra.mxu0 0.0
    %2454 = vmatprep.subr.mxu0 0.0
    %2455 = vmatpush1.msra.mxu0 0.0
    %2456 = vmatprep.subr.mxu0 0.0
    %2457 = vmatpush1.msra.mxu0 0.0
    %2458 = vmatprep.subr.mxu0 0.0
    %2459 = vmatpush1.msra.mxu0 0.0
    %2460 = vmatprep.subr.mxu0 0.0
    %2461 = vmatpush1.msra.mxu0 0.0
    %2462 = vmatprep.subr.mxu0 0.0
    %2463 = vmatpush1.msra.mxu0 0.0
    %2464 = vmatprep.subr.mxu0 0.0
    %2465 = vmatpush1.msra.mxu0 0.0
    %2466 = vmatprep.subr.mxu0 0.0
    %2467 = vmatpush1.msra.mxu0 0.0
    %2468 = vmatprep.subr.mxu0 0.0
    %2469 = vmatpush1.msra.mxu0 0.0
    %2470 = vmatprep.subr.mxu0 0.0
    %2471 = vmatpush1.msra.mxu0 0.0
    %2472 = vmatprep.subr.mxu0 0.0
    %2473 = vmatpush1.msra.mxu0 0.0
    %2474 = vmatprep.subr.mxu0 0.0
    %2475 = vmatpush1.msra.mxu0 0.0
    %2476 = vmatprep.subr.mxu0 0.0
    %2477 = vmatpush1.msra.mxu0 0.0
    %2478 = vmatprep.subr.mxu0 0.0
    %2479 = vmatpush1.msra.mxu0 0.0
    %2480 = vmatprep.subr.mxu0 0.0
    %2481 = vmatpush1.msra.mxu0 0.0
    %2482 = vmatprep.subr.mxu0 0.0
    %2483 = vmatpush1.msra.mxu0 0.0
    %2484 = vmatprep.subr.mxu0 0.0
    %2485 = vmatpush1.msra.mxu0 0.0
    %2486 = vmatprep.subr.mxu0 0.0
    %2487 = vmatpush1.msra.mxu0 0.0
    %2488 = vmatprep.subr.mxu0 0.0
    %2489 = vmatpush1.msra.mxu0 0.0
    %2490 = vmatprep.subr.mxu0 0.0
    %2491 = vmatpush1.msra.mxu0 0.0
    %2492 = vmatprep.subr.mxu0 0.0
    %2493 = vmatpush1.msra.mxu0 0.0
    %2494 = vmatprep.subr.mxu0 0.0
    %2495 = vmatpush1.msra.mxu0 0.0
    %2496 = vmatprep.subr.mxu0 0.0
    %2497 = vmatpush1.msra.mxu0 0.0
    %2498 = vmatprep.mubr.f32.mxu0 0.0
    %2499 = vmatmul.mubr.f32.gmra.mrb[0].mxu0 %v2432
    %v2500 = vpop.f32.mrb[0].mxu0
    %v2501 = vadd.f32 0.0, %v2500
    %v2502 = vpop.f32.mrb[0].mxu0
    %2503 = vdwg.mxu0
    %s2504 = scalar_lea.vmem [#allocation22], 128
    %v2505 = vld [vmem:[%s2504] sm:$0xff]
    %v2506 = vld [vmem:[%s2504 + $0x8] sm:$0xff]
    %v2507 = vld [vmem:[%s2504 + $0x10] sm:$0xff]
    %v2508 = vld [vmem:[%s2504 + $0x18] sm:$0xff]
    %v2509 = vld [vmem:[%s2504 + $0x20] sm:$0xff]
    %v2510 = vld [vmem:[%s2504 + $0x28] sm:$0xff]
    %v2511 = vld [vmem:[%s2504 + $0x30] sm:$0xff]
    %v2512 = vld [vmem:[%s2504 + $0x38] sm:$0xff]
    %v2513 = vld [vmem:[%s2504 + $0x40] sm:$0xff]
    %v2514 = vld [vmem:[%s2504 + $0x48] sm:$0xff]
    %v2515 = vld [vmem:[%s2504 + $0x50] sm:$0xff]
    %v2516 = vld [vmem:[%s2504 + $0x58] sm:$0xff]
    %v2517 = vld [vmem:[%s2504 + $0x60] sm:$0xff]
    %v2518 = vld [vmem:[%s2504 + $0x68] sm:$0xff]
    %v2519 = vld [vmem:[%s2504 + $0x70] sm:$0xff]
    %v2520 = vld [vmem:[%s2504 + $0x78] sm:$0xff]
    %2521 = vmatprep.subr.mxu0 0.0
    %2522 = vmatpush1.msra.mxu0 %v2505
    %2523 = vmatprep.subr.mxu0 0.0
    %2524 = vmatpush1.msra.mxu0 %v2506
    %2525 = vmatprep.subr.mxu0 0.0
    %2526 = vmatpush1.msra.mxu0 %v2507
    %2527 = vmatprep.subr.mxu0 0.0
    %2528 = vmatpush1.msra.mxu0 %v2508
    %2529 = vmatprep.subr.mxu0 0.0
    %2530 = vmatpush1.msra.mxu0 %v2509
    %2531 = vmatprep.subr.mxu0 0.0
    %2532 = vmatpush1.msra.mxu0 %v2510
    %2533 = vmatprep.subr.mxu0 0.0
    %2534 = vmatpush1.msra.mxu0 %v2511
    %2535 = vmatprep.subr.mxu0 0.0
    %2536 = vmatpush1.msra.mxu0 %v2512
    %2537 = vmatprep.subr.mxu0 0.0
    %2538 = vmatpush1.msra.mxu0 %v2513
    %2539 = vmatprep.subr.mxu0 0.0
    %2540 = vmatpush1.msra.mxu0 %v2514
    %2541 = vmatprep.subr.mxu0 0.0
    %2542 = vmatpush1.msra.mxu0 %v2515
    %2543 = vmatprep.subr.mxu0 0.0
    %2544 = vmatpush1.msra.mxu0 %v2516
    %2545 = vmatprep.subr.mxu0 0.0
    %2546 = vmatpush1.msra.mxu0 %v2517
    %2547 = vmatprep.subr.mxu0 0.0
    %2548 = vmatpush1.msra.mxu0 %v2518
    %2549 = vmatprep.subr.mxu0 0.0
    %2550 = vmatpush1.msra.mxu0 %v2519
    %2551 = vmatprep.subr.mxu0 0.0
    %2552 = vmatpush1.msra.mxu0 %v2520
    %2553 = vmatprep.subr.mxu0 0.0
    %2554 = vmatpush1.msra.mxu0 0.0
    %2555 = vmatprep.subr.mxu0 0.0
    %2556 = vmatpush1.msra.mxu0 0.0
    %2557 = vmatprep.subr.mxu0 0.0
    %2558 = vmatpush1.msra.mxu0 0.0
    %2559 = vmatprep.subr.mxu0 0.0
    %2560 = vmatpush1.msra.mxu0 0.0
    %2561 = vmatprep.subr.mxu0 0.0
    %2562 = vmatpush1.msra.mxu0 0.0
    %2563 = vmatprep.subr.mxu0 0.0
    %2564 = vmatpush1.msra.mxu0 0.0
    %2565 = vmatprep.subr.mxu0 0.0
    %2566 = vmatpush1.msra.mxu0 0.0
    %2567 = vmatprep.subr.mxu0 0.0
    %2568 = vmatpush1.msra.mxu0 0.0
    %2569 = vmatprep.subr.mxu0 0.0
    %2570 = vmatpush1.msra.mxu0 0.0
    %2571 = vmatprep.subr.mxu0 0.0
    %2572 = vmatpush1.msra.mxu0 0.0
    %2573 = vmatprep.subr.mxu0 0.0
    %2574 = vmatpush1.msra.mxu0 0.0
    %2575 = vmatprep.subr.mxu0 0.0
    %2576 = vmatpush1.msra.mxu0 0.0
    %2577 = vmatprep.subr.mxu0 0.0
    %2578 = vmatpush1.msra.mxu0 0.0
    %2579 = vmatprep.subr.mxu0 0.0
    %2580 = vmatpush1.msra.mxu0 0.0
    %2581 = vmatprep.subr.mxu0 0.0
    %2582 = vmatpush1.msra.mxu0 0.0
    %2583 = vmatprep.subr.mxu0 0.0
    %2584 = vmatpush1.msra.mxu0 0.0
    %2585 = vmatprep.mubr.f32.mxu0 0.0
    %2586 = vmatmul.mubr.f32.gmra.mrb[0].mxu0 %v2501
    %v2587 = vpop.f32.mrb[0].mxu0
    %v2588 = vadd.f32 0.0, %v2587
    %v2589 = vpop.f32.mrb[0].mxu0
    %2590 = vdwg.mxu0
    %2591 = vmatprep.subr.mxu0 0.0
    %2592 = vmatpush1.msra.mxu0 %v2413
    %2593 = vmatprep.subr.mxu0 0.0
    %2594 = vmatpush1.msra.mxu0 %v2414
    %2595 = vmatprep.subr.mxu0 0.0
    %2596 = vmatpush1.msra.mxu0 %v2415
    %2597 = vmatprep.subr.mxu0 0.0
    %2598 = vmatpush1.msra.mxu0 %v2416
    %2599 = vmatprep.subr.mxu0 0.0
    %2600 = vmatpush1.msra.mxu0 %v2417
    %2601 = vmatprep.subr.mxu0 0.0
    %2602 = vmatpush1.msra.mxu0 %v2418
    %2603 = vmatprep.subr.mxu0 0.0
    %2604 = vmatpush1.msra.mxu0 %v2419
    %2605 = vmatprep.subr.mxu0 0.0
    %2606 = vmatpush1.msra.mxu0 %v2420
    %2607 = vmatprep.subr.mxu0 0.0
    %2608 = vmatpush1.msra.mxu0 %v2421
    %2609 = vmatprep.subr.mxu0 0.0
    %2610 = vmatpush1.msra.mxu0 %v2422
    %2611 = vmatprep.subr.mxu0 0.0
    %2612 = vmatpush1.msra.mxu0 %v2423
    %2613 = vmatprep.subr.mxu0 0.0
    %2614 = vmatpush1.msra.mxu0 %v2424
    %2615 = vmatprep.subr.mxu0 0.0
    %2616 = vmatpush1.msra.mxu0 %v2425
    %2617 = vmatprep.subr.mxu0 0.0
    %2618 = vmatpush1.msra.mxu0 %v2426
    %2619 = vmatprep.subr.mxu0 0.0
    %2620 = vmatpush1.msra.mxu0 %v2427
    %2621 = vmatprep.subr.mxu0 0.0
    %2622 = vmatpush1.msra.mxu0 %v2428
    %2623 = vmatprep.subr.mxu0 0.0
    %2624 = vmatpush1.msra.mxu0 0.0
    %2625 = vmatprep.subr.mxu0 0.0
    %2626 = vmatpush1.msra.mxu0 0.0
    %2627 = vmatprep.subr.mxu0 0.0
    %2628 = vmatpush1.msra.mxu0 0.0
    %2629 = vmatprep.subr.mxu0 0.0
    %2630 = vmatpush1.msra.mxu0 0.0
    %2631 = vmatprep.subr.mxu0 0.0
    %2632 = vmatpush1.msra.mxu0 0.0
    %2633 = vmatprep.subr.mxu0 0.0
    %2634 = vmatpush1.msra.mxu0 0.0
    %2635 = vmatprep.subr.mxu0 0.0
    %2636 = vmatpush1.msra.mxu0 0.0
    %2637 = vmatprep.subr.mxu0 0.0
    %2638 = vmatpush1.msra.mxu0 0.0
    %2639 = vmatprep.subr.mxu0 0.0
    %2640 = vmatpush1.msra.mxu0 0.0
    %2641 = vmatprep.subr.mxu0 0.0
    %2642 = vmatpush1.msra.mxu0 0.0
    %2643 = vmatprep.subr.mxu0 0.0
    %2644 = vmatpush1.msra.mxu0 0.0
    %2645 = vmatprep.subr.mxu0 0.0
    %2646 = vmatpush1.msra.mxu0 0.0
    %2647 = vmatprep.subr.mxu0 0.0
    %2648 = vmatpush1.msra.mxu0 0.0
    %2649 = vmatprep.subr.mxu0 0.0
    %2650 = vmatpush1.msra.mxu0 0.0
    %2651 = vmatprep.subr.mxu0 0.0
    %2652 = vmatpush1.msra.mxu0 0.0
    %2653 = vmatprep.subr.mxu0 0.0
    %2654 = vmatpush1.msra.mxu0 0.0
    %2655 = vmatprep.mubr.f32.mxu0 0.0
    %2656 = vmatmul.mubr.f32.gmra.mrb[0].mxu0 %v2410
    %v2657 = vpop.f32.mrb[0].mxu0
    %v2658 = vadd.f32 %v2588, %v2657
    %v2659 = vpop.f32.mrb[0].mxu0
    %2660 = vdwg.mxu0
    %s2661 = scalar_lea.vmem [#allocation20], 16
    %v2662 = vld [vmem:[%s2661] sm:$0xff]
    %v2664 = vsel %vm1588, %v2662, 0
    %2666 = vmatprep.subr.mxu0 0.0
    %2667 = vmatpush1.msra.mxu0 %v2337
    %2668 = vmatprep.subr.mxu0 0.0
    %2669 = vmatpush1.msra.mxu0 %v2338
    %2670 = vmatprep.subr.mxu0 0.0
    %2671 = vmatpush1.msra.mxu0 0.0
    %2672 = vmatprep.subr.mxu0 0.0
    %2673 = vmatpush1.msra.mxu0 0.0
    %2674 = vmatprep.subr.mxu0 0.0
    %2675 = vmatpush1.msra.mxu0 0.0
    %2676 = vmatprep.subr.mxu0 0.0
    %2677 = vmatpush1.msra.mxu0 0.0
    %2678 = vmatprep.subr.mxu0 0.0
    %2679 = vmatpush1.msra.mxu0 0.0
    %2680 = vmatprep.subr.mxu0 0.0
    %2681 = vmatpush1.msra.mxu0 0.0
    %2682 = vmatprep.subr.mxu0 0.0
    %2683 = vmatpush1.msra.mxu0 0.0
    %2684 = vmatprep.subr.mxu0 0.0
    %2685 = vmatpush1.msra.mxu0 0.0
    %2686 = vmatprep.subr.mxu0 0.0
    %2687 = vmatpush1.msra.mxu0 0.0
    %2688 = vmatprep.subr.mxu0 0.0
    %2689 = vmatpush1.msra.mxu0 0.0
    %2690 = vmatprep.subr.mxu0 0.0
    %2691 = vmatpush1.msra.mxu0 0.0
    %2692 = vmatprep.subr.mxu0 0.0
    %2693 = vmatpush1.msra.mxu0 0.0
    %2694 = vmatprep.subr.mxu0 0.0
    %2695 = vmatpush1.msra.mxu0 0.0
    %2696 = vmatprep.subr.mxu0 0.0
    %2697 = vmatpush1.msra.mxu0 0.0
    %2698 = vmatprep.subr.mxu0 0.0
    %2699 = vmatpush1.msra.mxu0 0.0
    %2700 = vmatprep.subr.mxu0 0.0
    %2701 = vmatpush1.msra.mxu0 0.0
    %2702 = vmatprep.subr.mxu0 0.0
    %2703 = vmatpush1.msra.mxu0 0.0
    %2704 = vmatprep.subr.mxu0 0.0
    %2705 = vmatpush1.msra.mxu0 0.0
    %2706 = vmatprep.subr.mxu0 0.0
    %2707 = vmatpush1.msra.mxu0 0.0
    %2708 = vmatprep.subr.mxu0 0.0
    %2709 = vmatpush1.msra.mxu0 0.0
    %2710 = vmatprep.subr.mxu0 0.0
    %2711 = vmatpush1.msra.mxu0 0.0
    %2712 = vmatprep.subr.mxu0 0.0
    %2713 = vmatpush1.msra.mxu0 0.0
    %2714 = vmatprep.subr.mxu0 0.0
    %2715 = vmatpush1.msra.mxu0 0.0
    %2716 = vmatprep.subr.mxu0 0.0
    %2717 = vmatpush1.msra.mxu0 0.0
    %2718 = vmatprep.subr.mxu0 0.0
    %2719 = vmatpush1.msra.mxu0 0.0
    %2720 = vmatprep.subr.mxu0 0.0
    %2721 = vmatpush1.msra.mxu0 0.0
    %2722 = vmatprep.subr.mxu0 0.0
    %2723 = vmatpush1.msra.mxu0 0.0
    %2724 = vmatprep.subr.mxu0 0.0
    %2725 = vmatpush1.msra.mxu0 0.0
    %2726 = vmatprep.subr.mxu0 0.0
    %2727 = vmatpush1.msra.mxu0 0.0
    %2728 = vmatprep.subr.mxu0 0.0
    %2729 = vmatpush1.msra.mxu0 0.0
    %2730 = vmatprep.mubr.f32.mxu0 0.0
    %2731 = vmatmul.mubr.f32.gmra.mrb[0].mxu0 %v2664
    %v2732 = vpop.f32.mrb[0].mxu0
    %v2733 = vadd.f32 0.0, %v2732
    %v2734 = vpop.f32.mrb[0].mxu0
    %2735 = vdwg.mxu0
    %s2736 = scalar_lea.vmem [#allocation22], 256
    %v2737 = vld [vmem:[%s2736] sm:$0xff]
    %v2738 = vld [vmem:[%s2736 + $0x8] sm:$0xff]
    %v2739 = vld [vmem:[%s2736 + $0x10] sm:$0xff]
    %v2740 = vld [vmem:[%s2736 + $0x18] sm:$0xff]
    %v2741 = vld [vmem:[%s2736 + $0x20] sm:$0xff]
    %v2742 = vld [vmem:[%s2736 + $0x28] sm:$0xff]
    %v2743 = vld [vmem:[%s2736 + $0x30] sm:$0xff]
    %v2744 = vld [vmem:[%s2736 + $0x38] sm:$0xff]
    %v2745 = vld [vmem:[%s2736 + $0x40] sm:$0xff]
    %v2746 = vld [vmem:[%s2736 + $0x48] sm:$0xff]
    %v2747 = vld [vmem:[%s2736 + $0x50] sm:$0xff]
    %v2748 = vld [vmem:[%s2736 + $0x58] sm:$0xff]
    %v2749 = vld [vmem:[%s2736 + $0x60] sm:$0xff]
    %v2750 = vld [vmem:[%s2736 + $0x68] sm:$0xff]
    %v2751 = vld [vmem:[%s2736 + $0x70] sm:$0xff]
    %v2752 = vld [vmem:[%s2736 + $0x78] sm:$0xff]
    %2753 = vmatprep.subr.mxu0 0.0
    %2754 = vmatpush1.msra.mxu0 %v2737
    %2755 = vmatprep.subr.mxu0 0.0
    %2756 = vmatpush1.msra.mxu0 %v2738
    %2757 = vmatprep.subr.mxu0 0.0
    %2758 = vmatpush1.msra.mxu0 %v2739
    %2759 = vmatprep.subr.mxu0 0.0
    %2760 = vmatpush1.msra.mxu0 %v2740
    %2761 = vmatprep.subr.mxu0 0.0
    %2762 = vmatpush1.msra.mxu0 %v2741
    %2763 = vmatprep.subr.mxu0 0.0
    %2764 = vmatpush1.msra.mxu0 %v2742
    %2765 = vmatprep.subr.mxu0 0.0
    %2766 = vmatpush1.msra.mxu0 %v2743
    %2767 = vmatprep.subr.mxu0 0.0
    %2768 = vmatpush1.msra.mxu0 %v2744
    %2769 = vmatprep.subr.mxu0 0.0
    %2770 = vmatpush1.msra.mxu0 %v2745
    %2771 = vmatprep.subr.mxu0 0.0
    %2772 = vmatpush1.msra.mxu0 %v2746
    %2773 = vmatprep.subr.mxu0 0.0
    %2774 = vmatpush1.msra.mxu0 %v2747
    %2775 = vmatprep.subr.mxu0 0.0
    %2776 = vmatpush1.msra.mxu0 %v2748
    %2777 = vmatprep.subr.mxu0 0.0
    %2778 = vmatpush1.msra.mxu0 %v2749
    %2779 = vmatprep.subr.mxu0 0.0
    %2780 = vmatpush1.msra.mxu0 %v2750
    %2781 = vmatprep.subr.mxu0 0.0
    %2782 = vmatpush1.msra.mxu0 %v2751
    %2783 = vmatprep.subr.mxu0 0.0
    %2784 = vmatpush1.msra.mxu0 %v2752
    %2785 = vmatprep.subr.mxu0 0.0
    %2786 = vmatpush1.msra.mxu0 0.0
    %2787 = vmatprep.subr.mxu0 0.0
    %2788 = vmatpush1.msra.mxu0 0.0
    %2789 = vmatprep.subr.mxu0 0.0
    %2790 = vmatpush1.msra.mxu0 0.0
    %2791 = vmatprep.subr.mxu0 0.0
    %2792 = vmatpush1.msra.mxu0 0.0
    %2793 = vmatprep.subr.mxu0 0.0
    %2794 = vmatpush1.msra.mxu0 0.0
    %2795 = vmatprep.subr.mxu0 0.0
    %2796 = vmatpush1.msra.mxu0 0.0
    %2797 = vmatprep.subr.mxu0 0.0
    %2798 = vmatpush1.msra.mxu0 0.0
    %2799 = vmatprep.subr.mxu0 0.0
    %2800 = vmatpush1.msra.mxu0 0.0
    %2801 = vmatprep.subr.mxu0 0.0
    %2802 = vmatpush1.msra.mxu0 0.0
    %2803 = vmatprep.subr.mxu0 0.0
    %2804 = vmatpush1.msra.mxu0 0.0
    %2805 = vmatprep.subr.mxu0 0.0
    %2806 = vmatpush1.msra.mxu0 0.0
    %2807 = vmatprep.subr.mxu0 0.0
    %2808 = vmatpush1.msra.mxu0 0.0
    %2809 = vmatprep.subr.mxu0 0.0
    %2810 = vmatpush1.msra.mxu0 0.0
    %2811 = vmatprep.subr.mxu0 0.0
    %2812 = vmatpush1.msra.mxu0 0.0
    %2813 = vmatprep.subr.mxu0 0.0
    %2814 = vmatpush1.msra.mxu0 0.0
    %2815 = vmatprep.subr.mxu0 0.0
    %2816 = vmatpush1.msra.mxu0 0.0
    %2817 = vmatprep.mubr.f32.mxu0 0.0
    %2818 = vmatmul.mubr.f32.gmra.mrb[0].mxu0 %v2733
    %v2819 = vpop.f32.mrb[0].mxu0
    %v2820 = vadd.f32 0.0, %v2819
    %v2821 = vpop.f32.mrb[0].mxu0
    %2822 = vdwg.mxu0
    %v2823 = vadd.f32 %v2658, %v2820
    %v2824 = vld [vmem:[#allocation23] sm:$0x1]
    %v2826 = vlaneseq
    %v2827 = vshrl.u32 %v2826, 7
    %v2828 = vsub.s32 0, %v2827
    %v2829 = vrot.slane %v2824, %v2828
    %v2831 = vadd.f32 %v2823, %v2829
    %v2832 = vmin.f32 %v2831, 0.0
    %v2833 = vmul.f32 %v2832, 1.442695
    %v2834 = vpow.pop %v2833
    %v2835 = vsub.f32 %v2834, 1.0
    %v2836 = vmul.f32 %v2835, 1.6732632
    %vm2837 = vcmp.gt.f32.partialorder %v2831, 0.0
    %v2838 = vsel %vm2837, %v2831, %v2836
    %v2839 = vmul.f32 %v2838, 1.050701
    %v2840 = vld [vmem:[#allocation25] sm:$0xff]
    %vm2841 = vcmask 64512
    %v2843 = vsel %vm2841, %v2840, 0
    %2845 = vmatprep.subr.mxu0 0.0
    %2846 = vmatpush1.msra.mxu0 %v2839
    %2847 = vmatprep.subr.mxu0 0.0
    %2848 = vmatpush1.msra.mxu0 0.0
    %2849 = vmatprep.subr.mxu0 0.0
    %2850 = vmatpush1.msra.mxu0 0.0
    %2851 = vmatprep.subr.mxu0 0.0
    %2852 = vmatpush1.msra.mxu0 0.0
    %2853 = vmatprep.subr.mxu0 0.0
    %2854 = vmatpush1.msra.mxu0 0.0
    %2855 = vmatprep.subr.mxu0 0.0
    %2856 = vmatpush1.msra.mxu0 0.0
    %2857 = vmatprep.subr.mxu0 0.0
    %2858 = vmatpush1.msra.mxu0 0.0
    %2859 = vmatprep.subr.mxu0 0.0
    %2860 = vmatpush1.msra.mxu0 0.0
    %2861 = vmatprep.subr.mxu0 0.0
    %2862 = vmatpush1.msra.mxu0 0.0
    %2863 = vmatprep.subr.mxu0 0.0
    %2864 = vmatpush1.msra.mxu0 0.0
    %2865 = vmatprep.subr.mxu0 0.0
    %2866 = vmatpush1.msra.mxu0 0.0
    %2867 = vmatprep.subr.mxu0 0.0
    %2868 = vmatpush1.msra.mxu0 0.0
    %2869 = vmatprep.subr.mxu0 0.0
    %2870 = vmatpush1.msra.mxu0 0.0
    %2871 = vmatprep.subr.mxu0 0.0
    %2872 = vmatpush1.msra.mxu0 0.0
    %2873 = vmatprep.subr.mxu0 0.0
    %2874 = vmatpush1.msra.mxu0 0.0
    %2875 = vmatprep.subr.mxu0 0.0
    %2876 = vmatpush1.msra.mxu0 0.0
    %2877 = vmatprep.subr.mxu0 0.0
    %2878 = vmatpush1.msra.mxu0 0.0
    %2879 = vmatprep.subr.mxu0 0.0
    %2880 = vmatpush1.msra.mxu0 0.0
    %2881 = vmatprep.subr.mxu0 0.0
    %2882 = vmatpush1.msra.mxu0 0.0
    %2883 = vmatprep.subr.mxu0 0.0
    %2884 = vmatpush1.msra.mxu0 0.0
    %2885 = vmatprep.subr.mxu0 0.0
    %2886 = vmatpush1.msra.mxu0 0.0
    %2887 = vmatprep.subr.mxu0 0.0
    %2888 = vmatpush1.msra.mxu0 0.0
    %2889 = vmatprep.subr.mxu0 0.0
    %2890 = vmatpush1.msra.mxu0 0.0
    %2891 = vmatprep.subr.mxu0 0.0
    %2892 = vmatpush1.msra.mxu0 0.0
    %2893 = vmatprep.subr.mxu0 0.0
    %2894 = vmatpush1.msra.mxu0 0.0
    %2895 = vmatprep.subr.mxu0 0.0
    %2896 = vmatpush1.msra.mxu0 0.0
    %2897 = vmatprep.subr.mxu0 0.0
    %2898 = vmatpush1.msra.mxu0 0.0
    %2899 = vmatprep.subr.mxu0 0.0
    %2900 = vmatpush1.msra.mxu0 0.0
    %2901 = vmatprep.subr.mxu0 0.0
    %2902 = vmatpush1.msra.mxu0 0.0
    %2903 = vmatprep.subr.mxu0 0.0
    %2904 = vmatpush1.msra.mxu0 0.0
    %2905 = vmatprep.subr.mxu0 0.0
    %2906 = vmatpush1.msra.mxu0 0.0
    %2907 = vmatprep.subr.mxu0 0.0
    %2908 = vmatpush1.msra.mxu0 0.0
    %2909 = vmatprep.mubr.f32.mxu0 0.0
    %2910 = vmatmul.mubr.f32.gmra.mrb[0].mxu0 %v2843
    %v2911 = vpop.f32.mrb[0].mxu0
    %v2912 = vadd.f32 0.0, %v2911
    %v2913 = vpop.f32.mrb[0].mxu0
    %2914 = vdwg.mxu0
    %v2915 = vld [vmem:[#allocation26] sm:$0xff]
    %v2916 = vld [vmem:[#allocation26 + $0x8] sm:$0xff]
    %v2917 = vld [vmem:[#allocation26 + $0x10] sm:$0xff]
    %v2918 = vld [vmem:[#allocation26 + $0x18] sm:$0xff]
    %v2919 = vld [vmem:[#allocation26 + $0x20] sm:$0xff]
    %v2920 = vld [vmem:[#allocation26 + $0x28] sm:$0xff]
    %v2921 = vld [vmem:[#allocation26 + $0x30] sm:$0xff]
    %v2922 = vld [vmem:[#allocation26 + $0x38] sm:$0xff]
    %v2923 = vld [vmem:[#allocation26 + $0x40] sm:$0xff]
    %v2924 = vld [vmem:[#allocation26 + $0x48] sm:$0xff]
    %v2925 = vld [vmem:[#allocation26 + $0x50] sm:$0xff]
    %v2926 = vld [vmem:[#allocation26 + $0x58] sm:$0xff]
    %v2927 = vld [vmem:[#allocation26 + $0x60] sm:$0xff]
    %v2928 = vld [vmem:[#allocation26 + $0x68] sm:$0xff]
    %v2929 = vld [vmem:[#allocation26 + $0x70] sm:$0xff]
    %v2930 = vld [vmem:[#allocation26 + $0x78] sm:$0xff]
    %s2931 = scalar_lea.vmem [#allocation25], 8
    %v2932 = vld [vmem:[%s2931] sm:$0xff]
    %v2934 = vsel %vm2841, %v2932, 0
    %2936 = vmatprep.subr.mxu0 0.0
    %2937 = vmatpush1.msra.mxu0 %v2839
    %2938 = vmatprep.subr.mxu0 0.0
    %2939 = vmatpush1.msra.mxu0 0.0
    %2940 = vmatprep.subr.mxu0 0.0
    %2941 = vmatpush1.msra.mxu0 0.0
    %2942 = vmatprep.subr.mxu0 0.0
    %2943 = vmatpush1.msra.mxu0 0.0
    %2944 = vmatprep.subr.mxu0 0.0
    %2945 = vmatpush1.msra.mxu0 0.0
    %2946 = vmatprep.subr.mxu0 0.0
    %2947 = vmatpush1.msra.mxu0 0.0
    %2948 = vmatprep.subr.mxu0 0.0
    %2949 = vmatpush1.msra.mxu0 0.0
    %2950 = vmatprep.subr.mxu0 0.0
    %2951 = vmatpush1.msra.mxu0 0.0
    %2952 = vmatprep.subr.mxu0 0.0
    %2953 = vmatpush1.msra.mxu0 0.0
    %2954 = vmatprep.subr.mxu0 0.0
    %2955 = vmatpush1.msra.mxu0 0.0
    %2956 = vmatprep.subr.mxu0 0.0
    %2957 = vmatpush1.msra.mxu0 0.0
    %2958 = vmatprep.subr.mxu0 0.0
    %2959 = vmatpush1.msra.mxu0 0.0
    %2960 = vmatprep.subr.mxu0 0.0
    %2961 = vmatpush1.msra.mxu0 0.0
    %2962 = vmatprep.subr.mxu0 0.0
    %2963 = vmatpush1.msra.mxu0 0.0
    %2964 = vmatprep.subr.mxu0 0.0
    %2965 = vmatpush1.msra.mxu0 0.0
    %2966 = vmatprep.subr.mxu0 0.0
    %2967 = vmatpush1.msra.mxu0 0.0
    %2968 = vmatprep.subr.mxu0 0.0
    %2969 = vmatpush1.msra.mxu0 0.0
    %2970 = vmatprep.subr.mxu0 0.0
    %2971 = vmatpush1.msra.mxu0 0.0
    %2972 = vmatprep.subr.mxu0 0.0
    %2973 = vmatpush1.msra.mxu0 0.0
    %2974 = vmatprep.subr.mxu0 0.0
    %2975 = vmatpush1.msra.mxu0 0.0
    %2976 = vmatprep.subr.mxu0 0.0
    %2977 = vmatpush1.msra.mxu0 0.0
    %2978 = vmatprep.subr.mxu0 0.0
    %2979 = vmatpush1.msra.mxu0 0.0
    %2980 = vmatprep.subr.mxu0 0.0
    %2981 = vmatpush1.msra.mxu0 0.0
    %2982 = vmatprep.subr.mxu0 0.0
    %2983 = vmatpush1.msra.mxu0 0.0
    %2984 = vmatprep.subr.mxu0 0.0
    %2985 = vmatpush1.msra.mxu0 0.0
    %2986 = vmatprep.subr.mxu0 0.0
    %2987 = vmatpush1.msra.mxu0 0.0
    %2988 = vmatprep.subr.mxu0 0.0
    %2989 = vmatpush1.msra.mxu0 0.0
    %2990 = vmatprep.subr.mxu0 0.0
    %2991 = vmatpush1.msra.mxu0 0.0
    %2992 = vmatprep.subr.mxu0 0.0
    %2993 = vmatpush1.msra.mxu0 0.0
    %2994 = vmatprep.subr.mxu0 0.0
    %2995 = vmatpush1.msra.mxu0 0.0
    %2996 = vmatprep.subr.mxu0 0.0
    %2997 = vmatpush1.msra.mxu0 0.0
    %2998 = vmatprep.subr.mxu0 0.0
    %2999 = vmatpush1.msra.mxu0 0.0
    %3000 = vmatprep.mubr.f32.mxu0 0.0
    %3001 = vmatmul.mubr.f32.gmra.mrb[0].mxu0 %v2934
    %v3002 = vpop.f32.mrb[0].mxu0
    %v3003 = vadd.f32 0.0, %v3002
    %v3004 = vpop.f32.mrb[0].mxu0
    %3005 = vdwg.mxu0
    %s3006 = scalar_lea.vmem [#allocation26], 128
    %v3007 = vld [vmem:[%s3006] sm:$0xff]
    %v3008 = vld [vmem:[%s3006 + $0x8] sm:$0xff]
    %v3009 = vld [vmem:[%s3006 + $0x10] sm:$0xff]
    %v3010 = vld [vmem:[%s3006 + $0x18] sm:$0xff]
    %v3011 = vld [vmem:[%s3006 + $0x20] sm:$0xff]
    %v3012 = vld [vmem:[%s3006 + $0x28] sm:$0xff]
    %v3013 = vld [vmem:[%s3006 + $0x30] sm:$0xff]
    %v3014 = vld [vmem:[%s3006 + $0x38] sm:$0xff]
    %v3015 = vld [vmem:[%s3006 + $0x40] sm:$0xff]
    %v3016 = vld [vmem:[%s3006 + $0x48] sm:$0xff]
    %v3017 = vld [vmem:[%s3006 + $0x50] sm:$0xff]
    %v3018 = vld [vmem:[%s3006 + $0x58] sm:$0xff]
    %v3019 = vld [vmem:[%s3006 + $0x60] sm:$0xff]
    %v3020 = vld [vmem:[%s3006 + $0x68] sm:$0xff]
    %v3021 = vld [vmem:[%s3006 + $0x70] sm:$0xff]
    %v3022 = vld [vmem:[%s3006 + $0x78] sm:$0xff]
    %3023 = vmatprep.subr.mxu0 0.0
    %3024 = vmatpush1.msra.mxu0 %v3007
    %3025 = vmatprep.subr.mxu0 0.0
    %3026 = vmatpush1.msra.mxu0 %v3008
    %3027 = vmatprep.subr.mxu0 0.0
    %3028 = vmatpush1.msra.mxu0 %v3009
    %3029 = vmatprep.subr.mxu0 0.0
    %3030 = vmatpush1.msra.mxu0 %v3010
    %3031 = vmatprep.subr.mxu0 0.0
    %3032 = vmatpush1.msra.mxu0 %v3011
    %3033 = vmatprep.subr.mxu0 0.0
    %3034 = vmatpush1.msra.mxu0 %v3012
    %3035 = vmatprep.subr.mxu0 0.0
    %3036 = vmatpush1.msra.mxu0 %v3013
    %3037 = vmatprep.subr.mxu0 0.0
    %3038 = vmatpush1.msra.mxu0 %v3014
    %3039 = vmatprep.subr.mxu0 0.0
    %3040 = vmatpush1.msra.mxu0 %v3015
    %3041 = vmatprep.subr.mxu0 0.0
    %3042 = vmatpush1.msra.mxu0 %v3016
    %3043 = vmatprep.subr.mxu0 0.0
    %3044 = vmatpush1.msra.mxu0 %v3017
    %3045 = vmatprep.subr.mxu0 0.0
    %3046 = vmatpush1.msra.mxu0 %v3018
    %3047 = vmatprep.subr.mxu0 0.0
    %3048 = vmatpush1.msra.mxu0 %v3019
    %3049 = vmatprep.subr.mxu0 0.0
    %3050 = vmatpush1.msra.mxu0 %v3020
    %3051 = vmatprep.subr.mxu0 0.0
    %3052 = vmatpush1.msra.mxu0 %v3021
    %3053 = vmatprep.subr.mxu0 0.0
    %3054 = vmatpush1.msra.mxu0 %v3022
    %3055 = vmatprep.subr.mxu0 0.0
    %3056 = vmatpush1.msra.mxu0 0.0
    %3057 = vmatprep.subr.mxu0 0.0
    %3058 = vmatpush1.msra.mxu0 0.0
    %3059 = vmatprep.subr.mxu0 0.0
    %3060 = vmatpush1.msra.mxu0 0.0
    %3061 = vmatprep.subr.mxu0 0.0
    %3062 = vmatpush1.msra.mxu0 0.0
    %3063 = vmatprep.subr.mxu0 0.0
    %3064 = vmatpush1.msra.mxu0 0.0
    %3065 = vmatprep.subr.mxu0 0.0
    %3066 = vmatpush1.msra.mxu0 0.0
    %3067 = vmatprep.subr.mxu0 0.0
    %3068 = vmatpush1.msra.mxu0 0.0
    %3069 = vmatprep.subr.mxu0 0.0
    %3070 = vmatpush1.msra.mxu0 0.0
    %3071 = vmatprep.subr.mxu0 0.0
    %3072 = vmatpush1.msra.mxu0 0.0
    %3073 = vmatprep.subr.mxu0 0.0
    %3074 = vmatpush1.msra.mxu0 0.0
    %3075 = vmatprep.subr.mxu0 0.0
    %3076 = vmatpush1.msra.mxu0 0.0
    %3077 = vmatprep.subr.mxu0 0.0
    %3078 = vmatpush1.msra.mxu0 0.0
    %3079 = vmatprep.subr.mxu0 0.0
    %3080 = vmatpush1.msra.mxu0 0.0
    %3081 = vmatprep.subr.mxu0 0.0
    %3082 = vmatpush1.msra.mxu0 0.0
    %3083 = vmatprep.subr.mxu0 0.0
    %3084 = vmatpush1.msra.mxu0 0.0
    %3085 = vmatprep.subr.mxu0 0.0
    %3086 = vmatpush1.msra.mxu0 0.0
    %3087 = vmatprep.mubr.f32.mxu0 0.0
    %3088 = vmatmul.mubr.f32.gmra.mrb[0].mxu0 %v3003
    %v3089 = vpop.f32.mrb[0].mxu0
    %v3090 = vadd.f32 0.0, %v3089
    %v3091 = vpop.f32.mrb[0].mxu0
    %3092 = vdwg.mxu0
    %3093 = vmatprep.subr.mxu0 0.0
    %3094 = vmatpush1.msra.mxu0 %v2915
    %3095 = vmatprep.subr.mxu0 0.0
    %3096 = vmatpush1.msra.mxu0 %v2916
    %3097 = vmatprep.subr.mxu0 0.0
    %3098 = vmatpush1.msra.mxu0 %v2917
    %3099 = vmatprep.subr.mxu0 0.0
    %3100 = vmatpush1.msra.mxu0 %v2918
    %3101 = vmatprep.subr.mxu0 0.0
    %3102 = vmatpush1.msra.mxu0 %v2919
    %3103 = vmatprep.subr.mxu0 0.0
    %3104 = vmatpush1.msra.mxu0 %v2920
    %3105 = vmatprep.subr.mxu0 0.0
    %3106 = vmatpush1.msra.mxu0 %v2921
    %3107 = vmatprep.subr.mxu0 0.0
    %3108 = vmatpush1.msra.mxu0 %v2922
    %3109 = vmatprep.subr.mxu0 0.0
    %3110 = vmatpush1.msra.mxu0 %v2923
    %3111 = vmatprep.subr.mxu0 0.0
    %3112 = vmatpush1.msra.mxu0 %v2924
    %3113 = vmatprep.subr.mxu0 0.0
    %3114 = vmatpush1.msra.mxu0 %v2925
    %3115 = vmatprep.subr.mxu0 0.0
    %3116 = vmatpush1.msra.mxu0 %v2926
    %3117 = vmatprep.subr.mxu0 0.0
    %3118 = vmatpush1.msra.mxu0 %v2927
    %3119 = vmatprep.subr.mxu0 0.0
    %3120 = vmatpush1.msra.mxu0 %v2928
    %3121 = vmatprep.subr.mxu0 0.0
    %3122 = vmatpush1.msra.mxu0 %v2929
    %3123 = vmatprep.subr.mxu0 0.0
    %3124 = vmatpush1.msra.mxu0 %v2930
    %3125 = vmatprep.subr.mxu0 0.0
    %3126 = vmatpush1.msra.mxu0 0.0
    %3127 = vmatprep.subr.mxu0 0.0
    %3128 = vmatpush1.msra.mxu0 0.0
    %3129 = vmatprep.subr.mxu0 0.0
    %3130 = vmatpush1.msra.mxu0 0.0
    %3131 = vmatprep.subr.mxu0 0.0
    %3132 = vmatpush1.msra.mxu0 0.0
    %3133 = vmatprep.subr.mxu0 0.0
    %3134 = vmatpush1.msra.mxu0 0.0
    %3135 = vmatprep.subr.mxu0 0.0
    %3136 = vmatpush1.msra.mxu0 0.0
    %3137 = vmatprep.subr.mxu0 0.0
    %3138 = vmatpush1.msra.mxu0 0.0
    %3139 = vmatprep.subr.mxu0 0.0
    %3140 = vmatpush1.msra.mxu0 0.0
    %3141 = vmatprep.subr.mxu0 0.0
    %3142 = vmatpush1.msra.mxu0 0.0
    %3143 = vmatprep.subr.mxu0 0.0
    %3144 = vmatpush1.msra.mxu0 0.0
    %3145 = vmatprep.subr.mxu0 0.0
    %3146 = vmatpush1.msra.mxu0 0.0
    %3147 = vmatprep.subr.mxu0 0.0
    %3148 = vmatpush1.msra.mxu0 0.0
    %3149 = vmatprep.subr.mxu0 0.0
    %3150 = vmatpush1.msra.mxu0 0.0
    %3151 = vmatprep.subr.mxu0 0.0
    %3152 = vmatpush1.msra.mxu0 0.0
    %3153 = vmatprep.subr.mxu0 0.0
    %3154 = vmatpush1.msra.mxu0 0.0
    %3155 = vmatprep.subr.mxu0 0.0
    %3156 = vmatpush1.msra.mxu0 0.0
    %3157 = vmatprep.mubr.f32.mxu0 0.0
    %3158 = vmatmul.mubr.f32.gmra.mrb[0].mxu0 %v2912
    %v3159 = vpop.f32.mrb[0].mxu0
    %v3160 = vadd.f32 %v3090, %v3159
    %v3161 = vpop.f32.mrb[0].mxu0
    %3162 = vdwg.mxu0
    %s3163 = scalar_lea.vmem [#allocation25], 16
    %v3164 = vld [vmem:[%s3163] sm:$0xff]
    %v3166 = vsel %vm2841, %v3164, 0
    %3168 = vmatprep.subr.mxu0 0.0
    %3169 = vmatpush1.msra.mxu0 %v2839
    %3170 = vmatprep.subr.mxu0 0.0
    %3171 = vmatpush1.msra.mxu0 0.0
    %3172 = vmatprep.subr.mxu0 0.0
    %3173 = vmatpush1.msra.mxu0 0.0
    %3174 = vmatprep.subr.mxu0 0.0
    %3175 = vmatpush1.msra.mxu0 0.0
    %3176 = vmatprep.subr.mxu0 0.0
    %3177 = vmatpush1.msra.mxu0 0.0
    %3178 = vmatprep.subr.mxu0 0.0
    %3179 = vmatpush1.msra.mxu0 0.0
    %3180 = vmatprep.subr.mxu0 0.0
    %3181 = vmatpush1.msra.mxu0 0.0
    %3182 = vmatprep.subr.mxu0 0.0
    %3183 = vmatpush1.msra.mxu0 0.0
    %3184 = vmatprep.subr.mxu0 0.0
    %3185 = vmatpush1.msra.mxu0 0.0
    %3186 = vmatprep.subr.mxu0 0.0
    %3187 = vmatpush1.msra.mxu0 0.0
    %3188 = vmatprep.subr.mxu0 0.0
    %3189 = vmatpush1.msra.mxu0 0.0
    %3190 = vmatprep.subr.mxu0 0.0
    %3191 = vmatpush1.msra.mxu0 0.0
    %3192 = vmatprep.subr.mxu0 0.0
    %3193 = vmatpush1.msra.mxu0 0.0
    %3194 = vmatprep.subr.mxu0 0.0
    %3195 = vmatpush1.msra.mxu0 0.0
    %3196 = vmatprep.subr.mxu0 0.0
    %3197 = vmatpush1.msra.mxu0 0.0
    %3198 = vmatprep.subr.mxu0 0.0
    %3199 = vmatpush1.msra.mxu0 0.0
    %3200 = vmatprep.subr.mxu0 0.0
    %3201 = vmatpush1.msra.mxu0 0.0
    %3202 = vmatprep.subr.mxu0 0.0
    %3203 = vmatpush1.msra.mxu0 0.0
    %3204 = vmatprep.subr.mxu0 0.0
    %3205 = vmatpush1.msra.mxu0 0.0
    %3206 = vmatprep.subr.mxu0 0.0
    %3207 = vmatpush1.msra.mxu0 0.0
    %3208 = vmatprep.subr.mxu0 0.0
    %3209 = vmatpush1.msra.mxu0 0.0
    %3210 = vmatprep.subr.mxu0 0.0
    %3211 = vmatpush1.msra.mxu0 0.0
    %3212 = vmatprep.subr.mxu0 0.0
    %3213 = vmatpush1.msra.mxu0 0.0
    %3214 = vmatprep.subr.mxu0 0.0
    %3215 = vmatpush1.msra.mxu0 0.0
    %3216 = vmatprep.subr.mxu0 0.0
    %3217 = vmatpush1.msra.mxu0 0.0
    %3218 = vmatprep.subr.mxu0 0.0
    %3219 = vmatpush1.msra.mxu0 0.0
    %3220 = vmatprep.subr.mxu0 0.0
    %3221 = vmatpush1.msra.mxu0 0.0
    %3222 = vmatprep.subr.mxu0 0.0
    %3223 = vmatpush1.msra.mxu0 0.0
    %3224 = vmatprep.subr.mxu0 0.0
    %3225 = vmatpush1.msra.mxu0 0.0
    %3226 = vmatprep.subr.mxu0 0.0
    %3227 = vmatpush1.msra.mxu0 0.0
    %3228 = vmatprep.subr.mxu0 0.0
    %3229 = vmatpush1.msra.mxu0 0.0
    %3230 = vmatprep.subr.mxu0 0.0
    %3231 = vmatpush1.msra.mxu0 0.0
    %3232 = vmatprep.mubr.f32.mxu0 0.0
    %3233 = vmatmul.mubr.f32.gmra.mrb[0].mxu0 %v3166
    %v3234 = vpop.f32.mrb[0].mxu0
    %v3235 = vadd.f32 0.0, %v3234
    %v3236 = vpop.f32.mrb[0].mxu0
    %3237 = vdwg.mxu0
    %s3238 = scalar_lea.vmem [#allocation26], 256
    %v3239 = vld [vmem:[%s3238] sm:$0xff]
    %v3240 = vld [vmem:[%s3238 + $0x8] sm:$0xff]
    %v3241 = vld [vmem:[%s3238 + $0x10] sm:$0xff]
    %v3242 = vld [vmem:[%s3238 + $0x18] sm:$0xff]
    %v3243 = vld [vmem:[%s3238 + $0x20] sm:$0xff]
    %v3244 = vld [vmem:[%s3238 + $0x28] sm:$0xff]
    %v3245 = vld [vmem:[%s3238 + $0x30] sm:$0xff]
    %v3246 = vld [vmem:[%s3238 + $0x38] sm:$0xff]
    %v3247 = vld [vmem:[%s3238 + $0x40] sm:$0xff]
    %v3248 = vld [vmem:[%s3238 + $0x48] sm:$0xff]
    %v3249 = vld [vmem:[%s3238 + $0x50] sm:$0xff]
    %v3250 = vld [vmem:[%s3238 + $0x58] sm:$0xff]
    %v3251 = vld [vmem:[%s3238 + $0x60] sm:$0xff]
    %v3252 = vld [vmem:[%s3238 + $0x68] sm:$0xff]
    %v3253 = vld [vmem:[%s3238 + $0x70] sm:$0xff]
    %v3254 = vld [vmem:[%s3238 + $0x78] sm:$0xff]
    %3255 = vmatprep.subr.mxu0 0.0
    %3256 = vmatpush1.msra.mxu0 %v3239
    %3257 = vmatprep.subr.mxu0 0.0
    %3258 = vmatpush1.msra.mxu0 %v3240
    %3259 = vmatprep.subr.mxu0 0.0
    %3260 = vmatpush1.msra.mxu0 %v3241
    %3261 = vmatprep.subr.mxu0 0.0
    %3262 = vmatpush1.msra.mxu0 %v3242
    %3263 = vmatprep.subr.mxu0 0.0
    %3264 = vmatpush1.msra.mxu0 %v3243
    %3265 = vmatprep.subr.mxu0 0.0
    %3266 = vmatpush1.msra.mxu0 %v3244
    %3267 = vmatprep.subr.mxu0 0.0
    %3268 = vmatpush1.msra.mxu0 %v3245
    %3269 = vmatprep.subr.mxu0 0.0
    %3270 = vmatpush1.msra.mxu0 %v3246
    %3271 = vmatprep.subr.mxu0 0.0
    %3272 = vmatpush1.msra.mxu0 %v3247
    %3273 = vmatprep.subr.mxu0 0.0
    %3274 = vmatpush1.msra.mxu0 %v3248
    %3275 = vmatprep.subr.mxu0 0.0
    %3276 = vmatpush1.msra.mxu0 %v3249
    %3277 = vmatprep.subr.mxu0 0.0
    %3278 = vmatpush1.msra.mxu0 %v3250
    %3279 = vmatprep.subr.mxu0 0.0
    %3280 = vmatpush1.msra.mxu0 %v3251
    %3281 = vmatprep.subr.mxu0 0.0
    %3282 = vmatpush1.msra.mxu0 %v3252
    %3283 = vmatprep.subr.mxu0 0.0
    %3284 = vmatpush1.msra.mxu0 %v3253
    %3285 = vmatprep.subr.mxu0 0.0
    %3286 = vmatpush1.msra.mxu0 %v3254
    %3287 = vmatprep.subr.mxu0 0.0
    %3288 = vmatpush1.msra.mxu0 0.0
    %3289 = vmatprep.subr.mxu0 0.0
    %3290 = vmatpush1.msra.mxu0 0.0
    %3291 = vmatprep.subr.mxu0 0.0
    %3292 = vmatpush1.msra.mxu0 0.0
    %3293 = vmatprep.subr.mxu0 0.0
    %3294 = vmatpush1.msra.mxu0 0.0
    %3295 = vmatprep.subr.mxu0 0.0
    %3296 = vmatpush1.msra.mxu0 0.0
    %3297 = vmatprep.subr.mxu0 0.0
    %3298 = vmatpush1.msra.mxu0 0.0
    %3299 = vmatprep.subr.mxu0 0.0
    %3300 = vmatpush1.msra.mxu0 0.0
    %3301 = vmatprep.subr.mxu0 0.0
    %3302 = vmatpush1.msra.mxu0 0.0
    %3303 = vmatprep.subr.mxu0 0.0
    %3304 = vmatpush1.msra.mxu0 0.0
    %3305 = vmatprep.subr.mxu0 0.0
    %3306 = vmatpush1.msra.mxu0 0.0
    %3307 = vmatprep.subr.mxu0 0.0
    %3308 = vmatpush1.msra.mxu0 0.0
    %3309 = vmatprep.subr.mxu0 0.0
    %3310 = vmatpush1.msra.mxu0 0.0
    %3311 = vmatprep.subr.mxu0 0.0
    %3312 = vmatpush1.msra.mxu0 0.0
    %3313 = vmatprep.subr.mxu0 0.0
    %3314 = vmatpush1.msra.mxu0 0.0
    %3315 = vmatprep.subr.mxu0 0.0
    %3316 = vmatpush1.msra.mxu0 0.0
    %3317 = vmatprep.subr.mxu0 0.0
    %3318 = vmatpush1.msra.mxu0 0.0
    %3319 = vmatprep.mubr.f32.mxu0 0.0
    %3320 = vmatmul.mubr.f32.gmra.mrb[0].mxu0 %v3235
    %v3321 = vpop.f32.mrb[0].mxu0
    %v3322 = vadd.f32 0.0, %v3321
    %v3323 = vpop.f32.mrb[0].mxu0
    %3324 = vdwg.mxu0
    %v3325 = vadd.f32 %v3160, %v3322
    %v3326 = vld [vmem:[#allocation28] sm:$0x1]
    %v3328 = vlaneseq
    %v3329 = vshrl.u32 %v3328, 7
    %v3330 = vsub.s32 0, %v3329
    %v3331 = vrot.slane %v3326, %v3330
    %v3333 = vadd.f32 %v3325, %v3331
    %v3334 = vmin.f32 %v3333, 0.0
    %v3335 = vmul.f32 %v3334, 1.442695
    %v3336 = vpow.pop %v3335
    %v3337 = vsub.f32 %v3336, 1.0
    %v3338 = vmul.f32 %v3337, 1.6732632
    %vm3339 = vcmp.gt.f32.partialorder %v3333, 0.0
    %v3340 = vsel %vm3339, %v3333, %v3338
    %v3341 = vmul.f32 %v3340, 1.050701
    %v3342 = vld [vmem:[#allocation29] sm:$0xff]
    %v3344 = vsel %vm1588, %v3342, 0
    %3346 = vmatprep.subr.mxu0 0.0
    %3347 = vmatpush1.msra.mxu0 %v2337
    %3348 = vmatprep.subr.mxu0 0.0
    %3349 = vmatpush1.msra.mxu0 %v2338
    %3350 = vmatprep.subr.mxu0 0.0
    %3351 = vmatpush1.msra.mxu0 0.0
    %3352 = vmatprep.subr.mxu0 0.0
    %3353 = vmatpush1.msra.mxu0 0.0
    %3354 = vmatprep.subr.mxu0 0.0
    %3355 = vmatpush1.msra.mxu0 0.0
    %3356 = vmatprep.subr.mxu0 0.0
    %3357 = vmatpush1.msra.mxu0 0.0
    %3358 = vmatprep.subr.mxu0 0.0
    %3359 = vmatpush1.msra.mxu0 0.0
    %3360 = vmatprep.subr.mxu0 0.0
    %3361 = vmatpush1.msra.mxu0 0.0
    %3362 = vmatprep.subr.mxu0 0.0
    %3363 = vmatpush1.msra.mxu0 0.0
    %3364 = vmatprep.subr.mxu0 0.0
    %3365 = vmatpush1.msra.mxu0 0.0
    %3366 = vmatprep.subr.mxu0 0.0
    %3367 = vmatpush1.msra.mxu0 0.0
    %3368 = vmatprep.subr.mxu0 0.0
    %3369 = vmatpush1.msra.mxu0 0.0
    %3370 = vmatprep.subr.mxu0 0.0
    %3371 = vmatpush1.msra.mxu0 0.0
    %3372 = vmatprep.subr.mxu0 0.0
    %3373 = vmatpush1.msra.mxu0 0.0
    %3374 = vmatprep.subr.mxu0 0.0
    %3375 = vmatpush1.msra.mxu0 0.0
    %3376 = vmatprep.subr.mxu0 0.0
    %3377 = vmatpush1.msra.mxu0 0.0
    %3378 = vmatprep.subr.mxu0 0.0
    %3379 = vmatpush1.msra.mxu0 0.0
    %3380 = vmatprep.subr.mxu0 0.0
    %3381 = vmatpush1.msra.mxu0 0.0
    %3382 = vmatprep.subr.mxu0 0.0
    %3383 = vmatpush1.msra.mxu0 0.0
    %3384 = vmatprep.subr.mxu0 0.0
    %3385 = vmatpush1.msra.mxu0 0.0
    %3386 = vmatprep.subr.mxu0 0.0
    %3387 = vmatpush1.msra.mxu0 0.0
    %3388 = vmatprep.subr.mxu0 0.0
    %3389 = vmatpush1.msra.mxu0 0.0
    %3390 = vmatprep.subr.mxu0 0.0
    %3391 = vmatpush1.msra.mxu0 0.0
    %3392 = vmatprep.subr.mxu0 0.0
    %3393 = vmatpush1.msra.mxu0 0.0
    %3394 = vmatprep.subr.mxu0 0.0
    %3395 = vmatpush1.msra.mxu0 0.0
    %3396 = vmatprep.subr.mxu0 0.0
    %3397 = vmatpush1.msra.mxu0 0.0
    %3398 = vmatprep.subr.mxu0 0.0
    %3399 = vmatpush1.msra.mxu0 0.0
    %3400 = vmatprep.subr.mxu0 0.0
    %3401 = vmatpush1.msra.mxu0 0.0
    %3402 = vmatprep.subr.mxu0 0.0
    %3403 = vmatpush1.msra.mxu0 0.0
    %3404 = vmatprep.subr.mxu0 0.0
    %3405 = vmatpush1.msra.mxu0 0.0
    %3406 = vmatprep.subr.mxu0 0.0
    %3407 = vmatpush1.msra.mxu0 0.0
    %3408 = vmatprep.subr.mxu0 0.0
    %3409 = vmatpush1.msra.mxu0 0.0
    %3410 = vmatprep.mubr.f32.mxu0 0.0
    %3411 = vmatmul.mubr.f32.gmra.mrb[0].mxu0 %v3344
    %v3412 = vpop.f32.mrb[0].mxu0
    %v3413 = vadd.f32 0.0, %v3412
    %v3414 = vpop.f32.mrb[0].mxu0
    %3415 = vdwg.mxu0
    %v3416 = vld [vmem:[#allocation31] sm:$0xff]
    %v3417 = vld [vmem:[#allocation31 + $0x8] sm:$0xff]
    %v3418 = vld [vmem:[#allocation31 + $0x10] sm:$0xff]
    %v3419 = vld [vmem:[#allocation31 + $0x18] sm:$0xff]
    %v3420 = vld [vmem:[#allocation31 + $0x20] sm:$0xff]
    %v3421 = vld [vmem:[#allocation31 + $0x28] sm:$0xff]
    %v3422 = vld [vmem:[#allocation31 + $0x30] sm:$0xff]
    %v3423 = vld [vmem:[#allocation31 + $0x38] sm:$0xff]
    %v3424 = vld [vmem:[#allocation31 + $0x40] sm:$0xff]
    %v3425 = vld [vmem:[#allocation31 + $0x48] sm:$0xff]
    %v3426 = vld [vmem:[#allocation31 + $0x50] sm:$0xff]
    %v3427 = vld [vmem:[#allocation31 + $0x58] sm:$0xff]
    %v3428 = vld [vmem:[#allocation31 + $0x60] sm:$0xff]
    %v3429 = vld [vmem:[#allocation31 + $0x68] sm:$0xff]
    %v3430 = vld [vmem:[#allocation31 + $0x70] sm:$0xff]
    %v3431 = vld [vmem:[#allocation31 + $0x78] sm:$0xff]
    %v3432 = vld [vmem:[#allocation32] sm:$0x1]
    %v3434 = vlaneseq
    %v3435 = vshrl.u32 %v3434, 7
    %v3436 = vsub.s32 0, %v3435
    %v3437 = vrot.slane %v3432, %v3436
    %3439 = vmatprep.subr.mxu0 0.0
    %3440 = vmatpush1.msra.mxu0 %v3416
    %3441 = vmatprep.subr.mxu0 0.0
    %3442 = vmatpush1.msra.mxu0 %v3417
    %3443 = vmatprep.subr.mxu0 0.0
    %3444 = vmatpush1.msra.mxu0 %v3418
    %3445 = vmatprep.subr.mxu0 0.0
    %3446 = vmatpush1.msra.mxu0 %v3419
    %3447 = vmatprep.subr.mxu0 0.0
    %3448 = vmatpush1.msra.mxu0 %v3420
    %3449 = vmatprep.subr.mxu0 0.0
    %3450 = vmatpush1.msra.mxu0 %v3421
    %3451 = vmatprep.subr.mxu0 0.0
    %3452 = vmatpush1.msra.mxu0 %v3422
    %3453 = vmatprep.subr.mxu0 0.0
    %3454 = vmatpush1.msra.mxu0 %v3423
    %3455 = vmatprep.subr.mxu0 0.0
    %3456 = vmatpush1.msra.mxu0 %v3424
    %3457 = vmatprep.subr.mxu0 0.0
    %3458 = vmatpush1.msra.mxu0 %v3425
    %3459 = vmatprep.subr.mxu0 0.0
    %3460 = vmatpush1.msra.mxu0 %v3426
    %3461 = vmatprep.subr.mxu0 0.0
    %3462 = vmatpush1.msra.mxu0 %v3427
    %3463 = vmatprep.subr.mxu0 0.0
    %3464 = vmatpush1.msra.mxu0 %v3428
    %3465 = vmatprep.subr.mxu0 0.0
    %3466 = vmatpush1.msra.mxu0 %v3429
    %3467 = vmatprep.subr.mxu0 0.0
    %3468 = vmatpush1.msra.mxu0 %v3430
    %3469 = vmatprep.subr.mxu0 0.0
    %3470 = vmatpush1.msra.mxu0 %v3431
    %3471 = vmatprep.subr.mxu0 0.0
    %3472 = vmatpush1.msra.mxu0 0.0
    %3473 = vmatprep.subr.mxu0 0.0
    %3474 = vmatpush1.msra.mxu0 0.0
    %3475 = vmatprep.subr.mxu0 0.0
    %3476 = vmatpush1.msra.mxu0 0.0
    %3477 = vmatprep.subr.mxu0 0.0
    %3478 = vmatpush1.msra.mxu0 0.0
    %3479 = vmatprep.subr.mxu0 0.0
    %3480 = vmatpush1.msra.mxu0 0.0
    %3481 = vmatprep.subr.mxu0 0.0
    %3482 = vmatpush1.msra.mxu0 0.0
    %3483 = vmatprep.subr.mxu0 0.0
    %3484 = vmatpush1.msra.mxu0 0.0
    %3485 = vmatprep.subr.mxu0 0.0
    %3486 = vmatpush1.msra.mxu0 0.0
    %3487 = vmatprep.subr.mxu0 0.0
    %3488 = vmatpush1.msra.mxu0 0.0
    %3489 = vmatprep.subr.mxu0 0.0
    %3490 = vmatpush1.msra.mxu0 0.0
    %3491 = vmatprep.subr.mxu0 0.0
    %3492 = vmatpush1.msra.mxu0 0.0
    %3493 = vmatprep.subr.mxu0 0.0
    %3494 = vmatpush1.msra.mxu0 0.0
    %3495 = vmatprep.subr.mxu0 0.0
    %3496 = vmatpush1.msra.mxu0 0.0
    %3497 = vmatprep.subr.mxu0 0.0
    %3498 = vmatpush1.msra.mxu0 0.0
    %3499 = vmatprep.subr.mxu0 0.0
    %3500 = vmatpush1.msra.mxu0 0.0
    %3501 = vmatprep.subr.mxu0 0.0
    %3502 = vmatpush1.msra.mxu0 0.0
    %3503 = vmatprep.mubr.f32.mxu0 0.0
    %3504 = vmatmul.mubr.f32.gmra.mrb[0].mxu0 %v3413
    %v3505 = vpop.f32.mrb[0].mxu0
    %v3506 = vadd.f32 %v3437, %v3505
    %v3507 = vpop.f32.mrb[0].mxu0
    %3508 = vdwg.mxu0
    %v3509 = vadd.f32 %v3506, %v3341
    %v3510 = vmin.f32 %v3509, 0.0
    %v3511 = vmul.f32 %v3510, 1.442695
    %v3512 = vpow.pop %v3511
    %v3513 = vsub.f32 %v3512, 1.0
    %v3514 = vmul.f32 %v3513, 1.6732632
    %vm3515 = vcmp.gt.f32.partialorder %v3509, 0.0
    %v3516 = vsel %vm3515, %v3509, %v3514
    %v3517 = vmul.f32 %v3516, 1.050701
    %v3518 = vld [vmem:[#allocation34] sm:$0x3]
    %v3520 = vsel %vm2841, %v3518, 0
    %3522 = vmatprep.subr.mxu0 0.0
    %3523 = vmatpush1.msra.mxu0 %v3517
    %3524 = vmatprep.subr.mxu0 0.0
    %3525 = vmatpush1.msra.mxu0 0.0
    %3526 = vmatprep.subr.mxu0 0.0
    %3527 = vmatpush1.msra.mxu0 0.0
    %3528 = vmatprep.subr.mxu0 0.0
    %3529 = vmatpush1.msra.mxu0 0.0
    %3530 = vmatprep.subr.mxu0 0.0
    %3531 = vmatpush1.msra.mxu0 0.0
    %3532 = vmatprep.subr.mxu0 0.0
    %3533 = vmatpush1.msra.mxu0 0.0
    %3534 = vmatprep.subr.mxu0 0.0
    %3535 = vmatpush1.msra.mxu0 0.0
    %3536 = vmatprep.subr.mxu0 0.0
    %3537 = vmatpush1.msra.mxu0 0.0
    %3538 = vmatprep.subr.mxu0 0.0
    %3539 = vmatpush1.msra.mxu0 0.0
    %3540 = vmatprep.subr.mxu0 0.0
    %3541 = vmatpush1.msra.mxu0 0.0
    %3542 = vmatprep.subr.mxu0 0.0
    %3543 = vmatpush1.msra.mxu0 0.0
    %3544 = vmatprep.subr.mxu0 0.0
    %3545 = vmatpush1.msra.mxu0 0.0
    %3546 = vmatprep.subr.mxu0 0.0
    %3547 = vmatpush1.msra.mxu0 0.0
    %3548 = vmatprep.subr.mxu0 0.0
    %3549 = vmatpush1.msra.mxu0 0.0
    %3550 = vmatprep.subr.mxu0 0.0
    %3551 = vmatpush1.msra.mxu0 0.0
    %3552 = vmatprep.subr.mxu0 0.0
    %3553 = vmatpush1.msra.mxu0 0.0
    %3554 = vmatprep.subr.mxu0 0.0
    %3555 = vmatpush1.msra.mxu0 0.0
    %3556 = vmatprep.subr.mxu0 0.0
    %3557 = vmatpush1.msra.mxu0 0.0
    %3558 = vmatprep.subr.mxu0 0.0
    %3559 = vmatpush1.msra.mxu0 0.0
    %3560 = vmatprep.subr.mxu0 0.0
    %3561 = vmatpush1.msra.mxu0 0.0
    %3562 = vmatprep.subr.mxu0 0.0
    %3563 = vmatpush1.msra.mxu0 0.0
    %3564 = vmatprep.subr.mxu0 0.0
    %3565 = vmatpush1.msra.mxu0 0.0
    %3566 = vmatprep.subr.mxu0 0.0
    %3567 = vmatpush1.msra.mxu0 0.0
    %3568 = vmatprep.subr.mxu0 0.0
    %3569 = vmatpush1.msra.mxu0 0.0
    %3570 = vmatprep.subr.mxu0 0.0
    %3571 = vmatpush1.msra.mxu0 0.0
    %3572 = vmatprep.subr.mxu0 0.0
    %3573 = vmatpush1.msra.mxu0 0.0
    %3574 = vmatprep.subr.mxu0 0.0
    %3575 = vmatpush1.msra.mxu0 0.0
    %3576 = vmatprep.subr.mxu0 0.0
    %3577 = vmatpush1.msra.mxu0 0.0
    %3578 = vmatprep.subr.mxu0 0.0
    %3579 = vmatpush1.msra.mxu0 0.0
    %3580 = vmatprep.subr.mxu0 0.0
    %3581 = vmatpush1.msra.mxu0 0.0
    %3582 = vmatprep.subr.mxu0 0.0
    %3583 = vmatpush1.msra.mxu0 0.0
    %3584 = vmatprep.subr.mxu0 0.0
    %3585 = vmatpush1.msra.mxu0 0.0
    %3586 = vmatprep.mubr.f32.mxu0 0.0
    %3587 = vmatmul.mubr.f32.gmra.mrb[0].mxu0 %v3520
    %v3588 = vpop.f32.mrb[0].mxu0
    %v3589 = vadd.f32 0.0, %v3588
    %v3590 = vpop.f32.mrb[0].mxu0
    %3591 = vdwg.mxu0
    %v3592 = vld [vmem:[%s23] sm:$0xff]
    %v3593 = vld [vmem:[%s23 + $0x8] sm:$0xff]
    %v3594 = vld [vmem:[%s23 + $0x10] sm:$0xff]
    %v3595 = vld [vmem:[%s23 + $0x18] sm:$0xff]
    %v3596 = vld [vmem:[%s23 + $0x20] sm:$0xff]
    %v3597 = vld [vmem:[%s23 + $0x28] sm:$0xff]
    %v3598 = vld [vmem:[%s23 + $0x30] sm:$0xff]
    %v3599 = vld [vmem:[%s23 + $0x38] sm:$0xff]
    %v3600 = vld [vmem:[%s23 + $0x40] sm:$0xff]
    %v3601 = vld [vmem:[%s23 + $0x48] sm:$0xff]
    %v3602 = vld [vmem:[%s23 + $0x50] sm:$0xff]
    %v3603 = vld [vmem:[%s23 + $0x58] sm:$0xff]
    %v3604 = vld [vmem:[%s23 + $0x60] sm:$0xff]
    %v3605 = vld [vmem:[%s23 + $0x68] sm:$0xff]
    %v3606 = vld [vmem:[%s23 + $0x70] sm:$0xff]
    %v3607 = vld [vmem:[%s23 + $0x78] sm:$0xff]
    %s3608 = scalar_lea.vmem [#allocation34], 2
    %v3609 = vld [vmem:[%s3608] sm:$0x3]
    %v3611 = vsel %vm2841, %v3609, 0
    %3613 = vmatprep.subr.mxu0 0.0
    %3614 = vmatpush1.msra.mxu0 %v3517
    %3615 = vmatprep.subr.mxu0 0.0
    %3616 = vmatpush1.msra.mxu0 0.0
    %3617 = vmatprep.subr.mxu0 0.0
    %3618 = vmatpush1.msra.mxu0 0.0
    %3619 = vmatprep.subr.mxu0 0.0
    %3620 = vmatpush1.msra.mxu0 0.0
    %3621 = vmatprep.subr.mxu0 0.0
    %3622 = vmatpush1.msra.mxu0 0.0
    %3623 = vmatprep.subr.mxu0 0.0
    %3624 = vmatpush1.msra.mxu0 0.0
    %3625 = vmatprep.subr.mxu0 0.0
    %3626 = vmatpush1.msra.mxu0 0.0
    %3627 = vmatprep.subr.mxu0 0.0
    %3628 = vmatpush1.msra.mxu0 0.0
    %3629 = vmatprep.subr.mxu0 0.0
    %3630 = vmatpush1.msra.mxu0 0.0
    %3631 = vmatprep.subr.mxu0 0.0
    %3632 = vmatpush1.msra.mxu0 0.0
    %3633 = vmatprep.subr.mxu0 0.0
    %3634 = vmatpush1.msra.mxu0 0.0
    %3635 = vmatprep.subr.mxu0 0.0
    %3636 = vmatpush1.msra.mxu0 0.0
    %3637 = vmatprep.subr.mxu0 0.0
    %3638 = vmatpush1.msra.mxu0 0.0
    %3639 = vmatprep.subr.mxu0 0.0
    %3640 = vmatpush1.msra.mxu0 0.0
    %3641 = vmatprep.subr.mxu0 0.0
    %3642 = vmatpush1.msra.mxu0 0.0
    %3643 = vmatprep.subr.mxu0 0.0
    %3644 = vmatpush1.msra.mxu0 0.0
    %3645 = vmatprep.subr.mxu0 0.0
    %3646 = vmatpush1.msra.mxu0 0.0
    %3647 = vmatprep.subr.mxu0 0.0
    %3648 = vmatpush1.msra.mxu0 0.0
    %3649 = vmatprep.subr.mxu0 0.0
    %3650 = vmatpush1.msra.mxu0 0.0
    %3651 = vmatprep.subr.mxu0 0.0
    %3652 = vmatpush1.msra.mxu0 0.0
    %3653 = vmatprep.subr.mxu0 0.0
    %3654 = vmatpush1.msra.mxu0 0.0
    %3655 = vmatprep.subr.mxu0 0.0
    %3656 = vmatpush1.msra.mxu0 0.0
    %3657 = vmatprep.subr.mxu0 0.0
    %3658 = vmatpush1.msra.mxu0 0.0
    %3659 = vmatprep.subr.mxu0 0.0
    %3660 = vmatpush1.msra.mxu0 0.0
    %3661 = vmatprep.subr.mxu0 0.0
    %3662 = vmatpush1.msra.mxu0 0.0
    %3663 = vmatprep.subr.mxu0 0.0
    %3664 = vmatpush1.msra.mxu0 0.0
    %3665 = vmatprep.subr.mxu0 0.0
    %3666 = vmatpush1.msra.mxu0 0.0
    %3667 = vmatprep.subr.mxu0 0.0
    %3668 = vmatpush1.msra.mxu0 0.0
    %3669 = vmatprep.subr.mxu0 0.0
    %3670 = vmatpush1.msra.mxu0 0.0
    %3671 = vmatprep.subr.mxu0 0.0
    %3672 = vmatpush1.msra.mxu0 0.0
    %3673 = vmatprep.subr.mxu0 0.0
    %3674 = vmatpush1.msra.mxu0 0.0
    %3675 = vmatprep.subr.mxu0 0.0
    %3676 = vmatpush1.msra.mxu0 0.0
    %3677 = vmatprep.mubr.f32.mxu0 0.0
    %3678 = vmatmul.mubr.f32.gmra.mrb[0].mxu0 %v3611
    %v3679 = vpop.f32.mrb[0].mxu0
    %v3680 = vadd.f32 0.0, %v3679
    %v3681 = vpop.f32.mrb[0].mxu0
    %3682 = vdwg.mxu0
    %s3683 = scalar_lea.vmem %s23, 128
    %v3684 = vld [vmem:[%s3683] sm:$0xff]
    %v3685 = vld [vmem:[%s3683 + $0x8] sm:$0xff]
    %v3686 = vld [vmem:[%s3683 + $0x10] sm:$0xff]
    %v3687 = vld [vmem:[%s3683 + $0x18] sm:$0xff]
    %v3688 = vld [vmem:[%s3683 + $0x20] sm:$0xff]
    %v3689 = vld [vmem:[%s3683 + $0x28] sm:$0xff]
    %v3690 = vld [vmem:[%s3683 + $0x30] sm:$0xff]
    %v3691 = vld [vmem:[%s3683 + $0x38] sm:$0xff]
    %v3692 = vld [vmem:[%s3683 + $0x40] sm:$0xff]
    %v3693 = vld [vmem:[%s3683 + $0x48] sm:$0xff]
    %v3694 = vld [vmem:[%s3683 + $0x50] sm:$0xff]
    %v3695 = vld [vmem:[%s3683 + $0x58] sm:$0xff]
    %v3696 = vld [vmem:[%s3683 + $0x60] sm:$0xff]
    %v3697 = vld [vmem:[%s3683 + $0x68] sm:$0xff]
    %v3698 = vld [vmem:[%s3683 + $0x70] sm:$0xff]
    %v3699 = vld [vmem:[%s3683 + $0x78] sm:$0xff]
    %3700 = vmatprep.subr.mxu0 0.0
    %3701 = vmatpush1.msra.mxu0 %v3684
    %3702 = vmatprep.subr.mxu0 0.0
    %3703 = vmatpush1.msra.mxu0 %v3685
    %3704 = vmatprep.subr.mxu0 0.0
    %3705 = vmatpush1.msra.mxu0 %v3686
    %3706 = vmatprep.subr.mxu0 0.0
    %3707 = vmatpush1.msra.mxu0 %v3687
    %3708 = vmatprep.subr.mxu0 0.0
    %3709 = vmatpush1.msra.mxu0 %v3688
    %3710 = vmatprep.subr.mxu0 0.0
    %3711 = vmatpush1.msra.mxu0 %v3689
    %3712 = vmatprep.subr.mxu0 0.0
    %3713 = vmatpush1.msra.mxu0 %v3690
    %3714 = vmatprep.subr.mxu0 0.0
    %3715 = vmatpush1.msra.mxu0 %v3691
    %3716 = vmatprep.subr.mxu0 0.0
    %3717 = vmatpush1.msra.mxu0 %v3692
    %3718 = vmatprep.subr.mxu0 0.0
    %3719 = vmatpush1.msra.mxu0 %v3693
    %3720 = vmatprep.subr.mxu0 0.0
    %3721 = vmatpush1.msra.mxu0 %v3694
    %3722 = vmatprep.subr.mxu0 0.0
    %3723 = vmatpush1.msra.mxu0 %v3695
    %3724 = vmatprep.subr.mxu0 0.0
    %3725 = vmatpush1.msra.mxu0 %v3696
    %3726 = vmatprep.subr.mxu0 0.0
    %3727 = vmatpush1.msra.mxu0 %v3697
    %3728 = vmatprep.subr.mxu0 0.0
    %3729 = vmatpush1.msra.mxu0 %v3698
    %3730 = vmatprep.subr.mxu0 0.0
    %3731 = vmatpush1.msra.mxu0 %v3699
    %3732 = vmatprep.subr.mxu0 0.0
    %3733 = vmatpush1.msra.mxu0 0.0
    %3734 = vmatprep.subr.mxu0 0.0
    %3735 = vmatpush1.msra.mxu0 0.0
    %3736 = vmatprep.subr.mxu0 0.0
    %3737 = vmatpush1.msra.mxu0 0.0
    %3738 = vmatprep.subr.mxu0 0.0
    %3739 = vmatpush1.msra.mxu0 0.0
    %3740 = vmatprep.subr.mxu0 0.0
    %3741 = vmatpush1.msra.mxu0 0.0
    %3742 = vmatprep.subr.mxu0 0.0
    %3743 = vmatpush1.msra.mxu0 0.0
    %3744 = vmatprep.subr.mxu0 0.0
    %3745 = vmatpush1.msra.mxu0 0.0
    %3746 = vmatprep.subr.mxu0 0.0
    %3747 = vmatpush1.msra.mxu0 0.0
    %3748 = vmatprep.subr.mxu0 0.0
    %3749 = vmatpush1.msra.mxu0 0.0
    %3750 = vmatprep.subr.mxu0 0.0
    %3751 = vmatpush1.msra.mxu0 0.0
    %3752 = vmatprep.subr.mxu0 0.0
    %3753 = vmatpush1.msra.mxu0 0.0
    %3754 = vmatprep.subr.mxu0 0.0
    %3755 = vmatpush1.msra.mxu0 0.0
    %3756 = vmatprep.subr.mxu0 0.0
    %3757 = vmatpush1.msra.mxu0 0.0
    %3758 = vmatprep.subr.mxu0 0.0
    %3759 = vmatpush1.msra.mxu0 0.0
    %3760 = vmatprep.subr.mxu0 0.0
    %3761 = vmatpush1.msra.mxu0 0.0
    %3762 = vmatprep.subr.mxu0 0.0
    %3763 = vmatpush1.msra.mxu0 0.0
    %3764 = vmatprep.mubr.f32.mxu0 0.0
    %3765 = vmatmul.mubr.f32.gmra.mrb[0].mxu0 %v3680
    %v3766 = vpop.f32.mrb[0].mxu0
    %v3767 = vadd.f32 0.0, %v3766
    %v3768 = vpop.f32.mrb[0].mxu0
    %3769 = vdwg.mxu0
    %3770 = vmatprep.subr.mxu0 0.0
    %3771 = vmatpush1.msra.mxu0 %v3592
    %3772 = vmatprep.subr.mxu0 0.0
    %3773 = vmatpush1.msra.mxu0 %v3593
    %3774 = vmatprep.subr.mxu0 0.0
    %3775 = vmatpush1.msra.mxu0 %v3594
    %3776 = vmatprep.subr.mxu0 0.0
    %3777 = vmatpush1.msra.mxu0 %v3595
    %3778 = vmatprep.subr.mxu0 0.0
    %3779 = vmatpush1.msra.mxu0 %v3596
    %3780 = vmatprep.subr.mxu0 0.0
    %3781 = vmatpush1.msra.mxu0 %v3597
    %3782 = vmatprep.subr.mxu0 0.0
    %3783 = vmatpush1.msra.mxu0 %v3598
    %3784 = vmatprep.subr.mxu0 0.0
    %3785 = vmatpush1.msra.mxu0 %v3599
    %3786 = vmatprep.subr.mxu0 0.0
    %3787 = vmatpush1.msra.mxu0 %v3600
    %3788 = vmatprep.subr.mxu0 0.0
    %3789 = vmatpush1.msra.mxu0 %v3601
    %3790 = vmatprep.subr.mxu0 0.0
    %3791 = vmatpush1.msra.mxu0 %v3602
    %3792 = vmatprep.subr.mxu0 0.0
    %3793 = vmatpush1.msra.mxu0 %v3603
    %3794 = vmatprep.subr.mxu0 0.0
    %3795 = vmatpush1.msra.mxu0 %v3604
    %3796 = vmatprep.subr.mxu0 0.0
    %3797 = vmatpush1.msra.mxu0 %v3605
    %3798 = vmatprep.subr.mxu0 0.0
    %3799 = vmatpush1.msra.mxu0 %v3606
    %3800 = vmatprep.subr.mxu0 0.0
    %3801 = vmatpush1.msra.mxu0 %v3607
    %3802 = vmatprep.subr.mxu0 0.0
    %3803 = vmatpush1.msra.mxu0 0.0
    %3804 = vmatprep.subr.mxu0 0.0
    %3805 = vmatpush1.msra.mxu0 0.0
    %3806 = vmatprep.subr.mxu0 0.0
    %3807 = vmatpush1.msra.mxu0 0.0
    %3808 = vmatprep.subr.mxu0 0.0
    %3809 = vmatpush1.msra.mxu0 0.0
    %3810 = vmatprep.subr.mxu0 0.0
    %3811 = vmatpush1.msra.mxu0 0.0
    %3812 = vmatprep.subr.mxu0 0.0
    %3813 = vmatpush1.msra.mxu0 0.0
    %3814 = vmatprep.subr.mxu0 0.0
    %3815 = vmatpush1.msra.mxu0 0.0
    %3816 = vmatprep.subr.mxu0 0.0
    %3817 = vmatpush1.msra.mxu0 0.0
    %3818 = vmatprep.subr.mxu0 0.0
    %3819 = vmatpush1.msra.mxu0 0.0
    %3820 = vmatprep.subr.mxu0 0.0
    %3821 = vmatpush1.msra.mxu0 0.0
    %3822 = vmatprep.subr.mxu0 0.0
    %3823 = vmatpush1.msra.mxu0 0.0
    %3824 = vmatprep.subr.mxu0 0.0
    %3825 = vmatpush1.msra.mxu0 0.0
    %3826 = vmatprep.subr.mxu0 0.0
    %3827 = vmatpush1.msra.mxu0 0.0
    %3828 = vmatprep.subr.mxu0 0.0
    %3829 = vmatpush1.msra.mxu0 0.0
    %3830 = vmatprep.subr.mxu0 0.0
    %3831 = vmatpush1.msra.mxu0 0.0
    %3832 = vmatprep.subr.mxu0 0.0
    %3833 = vmatpush1.msra.mxu0 0.0
    %3834 = vmatprep.mubr.f32.mxu0 0.0
    %3835 = vmatmul.mubr.f32.gmra.mrb[0].mxu0 %v3589
    %v3836 = vpop.f32.mrb[0].mxu0
    %v3837 = vadd.f32 %v3767, %v3836
    %v3838 = vpop.f32.mrb[0].mxu0
    %3839 = vdwg.mxu0
    %s3840 = scalar_lea.vmem [#allocation34], 4
    %v3841 = vld [vmem:[%s3840] sm:$0x3]
    %v3843 = vsel %vm2841, %v3841, 0
    %3845 = vmatprep.subr.mxu0 0.0
    %3846 = vmatpush1.msra.mxu0 %v3517
    %3847 = vmatprep.subr.mxu0 0.0
    %3848 = vmatpush1.msra.mxu0 0.0
    %3849 = vmatprep.subr.mxu0 0.0
    %3850 = vmatpush1.msra.mxu0 0.0
    %3851 = vmatprep.subr.mxu0 0.0
    %3852 = vmatpush1.msra.mxu0 0.0
    %3853 = vmatprep.subr.mxu0 0.0
    %3854 = vmatpush1.msra.mxu0 0.0
    %3855 = vmatprep.subr.mxu0 0.0
    %3856 = vmatpush1.msra.mxu0 0.0
    %3857 = vmatprep.subr.mxu0 0.0
    %3858 = vmatpush1.msra.mxu0 0.0
    %3859 = vmatprep.subr.mxu0 0.0
    %3860 = vmatpush1.msra.mxu0 0.0
    %3861 = vmatprep.subr.mxu0 0.0
    %3862 = vmatpush1.msra.mxu0 0.0
    %3863 = vmatprep.subr.mxu0 0.0
    %3864 = vmatpush1.msra.mxu0 0.0
    %3865 = vmatprep.subr.mxu0 0.0
    %3866 = vmatpush1.msra.mxu0 0.0
    %3867 = vmatprep.subr.mxu0 0.0
    %3868 = vmatpush1.msra.mxu0 0.0
    %3869 = vmatprep.subr.mxu0 0.0
    %3870 = vmatpush1.msra.mxu0 0.0
    %3871 = vmatprep.subr.mxu0 0.0
    %3872 = vmatpush1.msra.mxu0 0.0
    %3873 = vmatprep.subr.mxu0 0.0
    %3874 = vmatpush1.msra.mxu0 0.0
    %3875 = vmatprep.subr.mxu0 0.0
    %3876 = vmatpush1.msra.mxu0 0.0
    %3877 = vmatprep.subr.mxu0 0.0
    %3878 = vmatpush1.msra.mxu0 0.0
    %3879 = vmatprep.subr.mxu0 0.0
    %3880 = vmatpush1.msra.mxu0 0.0
    %3881 = vmatprep.subr.mxu0 0.0
    %3882 = vmatpush1.msra.mxu0 0.0
    %3883 = vmatprep.subr.mxu0 0.0
    %3884 = vmatpush1.msra.mxu0 0.0
    %3885 = vmatprep.subr.mxu0 0.0
    %3886 = vmatpush1.msra.mxu0 0.0
    %3887 = vmatprep.subr.mxu0 0.0
    %3888 = vmatpush1.msra.mxu0 0.0
    %3889 = vmatprep.subr.mxu0 0.0
    %3890 = vmatpush1.msra.mxu0 0.0
    %3891 = vmatprep.subr.mxu0 0.0
    %3892 = vmatpush1.msra.mxu0 0.0
    %3893 = vmatprep.subr.mxu0 0.0
    %3894 = vmatpush1.msra.mxu0 0.0
    %3895 = vmatprep.subr.mxu0 0.0
    %3896 = vmatpush1.msra.mxu0 0.0
    %3897 = vmatprep.subr.mxu0 0.0
    %3898 = vmatpush1.msra.mxu0 0.0
    %3899 = vmatprep.subr.mxu0 0.0
    %3900 = vmatpush1.msra.mxu0 0.0
    %3901 = vmatprep.subr.mxu0 0.0
    %3902 = vmatpush1.msra.mxu0 0.0
    %3903 = vmatprep.subr.mxu0 0.0
    %3904 = vmatpush1.msra.mxu0 0.0
    %3905 = vmatprep.subr.mxu0 0.0
    %3906 = vmatpush1.msra.mxu0 0.0
    %3907 = vmatprep.subr.mxu0 0.0
    %3908 = vmatpush1.msra.mxu0 0.0
    %3909 = vmatprep.mubr.f32.mxu0 0.0
    %3910 = vmatmul.mubr.f32.gmra.mrb[0].mxu0 %v3843
    %v3911 = vpop.f32.mrb[0].mxu0
    %v3912 = vadd.f32 0.0, %v3911
    %v3913 = vpop.f32.mrb[0].mxu0
    %3914 = vdwg.mxu0
    %s3915 = scalar_lea.vmem %s23, 256
    %v3916 = vld [vmem:[%s3915] sm:$0xff]
    %v3917 = vld [vmem:[%s3915 + $0x8] sm:$0xff]
    %v3918 = vld [vmem:[%s3915 + $0x10] sm:$0xff]
    %v3919 = vld [vmem:[%s3915 + $0x18] sm:$0xff]
    %v3920 = vld [vmem:[%s3915 + $0x20] sm:$0xff]
    %v3921 = vld [vmem:[%s3915 + $0x28] sm:$0xff]
    %v3922 = vld [vmem:[%s3915 + $0x30] sm:$0xff]
    %v3923 = vld [vmem:[%s3915 + $0x38] sm:$0xff]
    %v3924 = vld [vmem:[%s3915 + $0x40] sm:$0xff]
    %v3925 = vld [vmem:[%s3915 + $0x48] sm:$0xff]
    %v3926 = vld [vmem:[%s3915 + $0x50] sm:$0xff]
    %v3927 = vld [vmem:[%s3915 + $0x58] sm:$0xff]
    %v3928 = vld [vmem:[%s3915 + $0x60] sm:$0xff]
    %v3929 = vld [vmem:[%s3915 + $0x68] sm:$0xff]
    %v3930 = vld [vmem:[%s3915 + $0x70] sm:$0xff]
    %v3931 = vld [vmem:[%s3915 + $0x78] sm:$0xff]
    %3932 = vmatprep.subr.mxu0 0.0
    %3933 = vmatpush1.msra.mxu0 %v3916
    %3934 = vmatprep.subr.mxu0 0.0
    %3935 = vmatpush1.msra.mxu0 %v3917
    %3936 = vmatprep.subr.mxu0 0.0
    %3937 = vmatpush1.msra.mxu0 %v3918
    %3938 = vmatprep.subr.mxu0 0.0
    %3939 = vmatpush1.msra.mxu0 %v3919
    %3940 = vmatprep.subr.mxu0 0.0
    %3941 = vmatpush1.msra.mxu0 %v3920
    %3942 = vmatprep.subr.mxu0 0.0
    %3943 = vmatpush1.msra.mxu0 %v3921
    %3944 = vmatprep.subr.mxu0 0.0
    %3945 = vmatpush1.msra.mxu0 %v3922
    %3946 = vmatprep.subr.mxu0 0.0
    %3947 = vmatpush1.msra.mxu0 %v3923
    %3948 = vmatprep.subr.mxu0 0.0
    %3949 = vmatpush1.msra.mxu0 %v3924
    %3950 = vmatprep.subr.mxu0 0.0
    %3951 = vmatpush1.msra.mxu0 %v3925
    %3952 = vmatprep.subr.mxu0 0.0
    %3953 = vmatpush1.msra.mxu0 %v3926
    %3954 = vmatprep.subr.mxu0 0.0
    %3955 = vmatpush1.msra.mxu0 %v3927
    %3956 = vmatprep.subr.mxu0 0.0
    %3957 = vmatpush1.msra.mxu0 %v3928
    %3958 = vmatprep.subr.mxu0 0.0
    %3959 = vmatpush1.msra.mxu0 %v3929
    %3960 = vmatprep.subr.mxu0 0.0
    %3961 = vmatpush1.msra.mxu0 %v3930
    %3962 = vmatprep.subr.mxu0 0.0
    %3963 = vmatpush1.msra.mxu0 %v3931
    %3964 = vmatprep.subr.mxu0 0.0
    %3965 = vmatpush1.msra.mxu0 0.0
    %3966 = vmatprep.subr.mxu0 0.0
    %3967 = vmatpush1.msra.mxu0 0.0
    %3968 = vmatprep.subr.mxu0 0.0
    %3969 = vmatpush1.msra.mxu0 0.0
    %3970 = vmatprep.subr.mxu0 0.0
    %3971 = vmatpush1.msra.mxu0 0.0
    %3972 = vmatprep.subr.mxu0 0.0
    %3973 = vmatpush1.msra.mxu0 0.0
    %3974 = vmatprep.subr.mxu0 0.0
    %3975 = vmatpush1.msra.mxu0 0.0
    %3976 = vmatprep.subr.mxu0 0.0
    %3977 = vmatpush1.msra.mxu0 0.0
    %3978 = vmatprep.subr.mxu0 0.0
    %3979 = vmatpush1.msra.mxu0 0.0
    %3980 = vmatprep.subr.mxu0 0.0
    %3981 = vmatpush1.msra.mxu0 0.0
    %3982 = vmatprep.subr.mxu0 0.0
    %3983 = vmatpush1.msra.mxu0 0.0
    %3984 = vmatprep.subr.mxu0 0.0
    %3985 = vmatpush1.msra.mxu0 0.0
    %3986 = vmatprep.subr.mxu0 0.0
    %3987 = vmatpush1.msra.mxu0 0.0
    %3988 = vmatprep.subr.mxu0 0.0
    %3989 = vmatpush1.msra.mxu0 0.0
    %3990 = vmatprep.subr.mxu0 0.0
    %3991 = vmatpush1.msra.mxu0 0.0
    %3992 = vmatprep.subr.mxu0 0.0
    %3993 = vmatpush1.msra.mxu0 0.0
    %3994 = vmatprep.subr.mxu0 0.0
    %3995 = vmatpush1.msra.mxu0 0.0
    %3996 = vmatprep.mubr.f32.mxu0 0.0
    %3997 = vmatmul.mubr.f32.gmra.mrb[0].mxu0 %v3912
    %v3998 = vpop.f32.mrb[0].mxu0
    %v3999 = vadd.f32 0.0, %v3998
    %v4000 = vpop.f32.mrb[0].mxu0
    %4001 = vdwg.mxu0
    %v4002 = vadd.f32 %v3837, %v3999
    %s4003 = scalar_lea.vmem [#allocation34], 6
    %v4004 = vld [vmem:[%s4003] sm:$0x3]
    %v4006 = vsel %vm2841, %v4004, 0
    %4008 = vmatprep.subr.mxu0 0.0
    %4009 = vmatpush1.msra.mxu0 %v3517
    %4010 = vmatprep.subr.mxu0 0.0
    %4011 = vmatpush1.msra.mxu0 0.0
    %4012 = vmatprep.subr.mxu0 0.0
    %4013 = vmatpush1.msra.mxu0 0.0
    %4014 = vmatprep.subr.mxu0 0.0
    %4015 = vmatpush1.msra.mxu0 0.0
    %4016 = vmatprep.subr.mxu0 0.0
    %4017 = vmatpush1.msra.mxu0 0.0
    %4018 = vmatprep.subr.mxu0 0.0
    %4019 = vmatpush1.msra.mxu0 0.0
    %4020 = vmatprep.subr.mxu0 0.0
    %4021 = vmatpush1.msra.mxu0 0.0
    %4022 = vmatprep.subr.mxu0 0.0
    %4023 = vmatpush1.msra.mxu0 0.0
    %4024 = vmatprep.subr.mxu0 0.0
    %4025 = vmatpush1.msra.mxu0 0.0
    %4026 = vmatprep.subr.mxu0 0.0
    %4027 = vmatpush1.msra.mxu0 0.0
    %4028 = vmatprep.subr.mxu0 0.0
    %4029 = vmatpush1.msra.mxu0 0.0
    %4030 = vmatprep.subr.mxu0 0.0
    %4031 = vmatpush1.msra.mxu0 0.0
    %4032 = vmatprep.subr.mxu0 0.0
    %4033 = vmatpush1.msra.mxu0 0.0
    %4034 = vmatprep.subr.mxu0 0.0
    %4035 = vmatpush1.msra.mxu0 0.0
    %4036 = vmatprep.subr.mxu0 0.0
    %4037 = vmatpush1.msra.mxu0 0.0
    %4038 = vmatprep.subr.mxu0 0.0
    %4039 = vmatpush1.msra.mxu0 0.0
    %4040 = vmatprep.subr.mxu0 0.0
    %4041 = vmatpush1.msra.mxu0 0.0
    %4042 = vmatprep.subr.mxu0 0.0
    %4043 = vmatpush1.msra.mxu0 0.0
    %4044 = vmatprep.subr.mxu0 0.0
    %4045 = vmatpush1.msra.mxu0 0.0
    %4046 = vmatprep.subr.mxu0 0.0
    %4047 = vmatpush1.msra.mxu0 0.0
    %4048 = vmatprep.subr.mxu0 0.0
    %4049 = vmatpush1.msra.mxu0 0.0
    %4050 = vmatprep.subr.mxu0 0.0
    %4051 = vmatpush1.msra.mxu0 0.0
    %4052 = vmatprep.subr.mxu0 0.0
    %4053 = vmatpush1.msra.mxu0 0.0
    %4054 = vmatprep.subr.mxu0 0.0
    %4055 = vmatpush1.msra.mxu0 0.0
    %4056 = vmatprep.subr.mxu0 0.0
    %4057 = vmatpush1.msra.mxu0 0.0
    %4058 = vmatprep.subr.mxu0 0.0
    %4059 = vmatpush1.msra.mxu0 0.0
    %4060 = vmatprep.subr.mxu0 0.0
    %4061 = vmatpush1.msra.mxu0 0.0
    %4062 = vmatprep.subr.mxu0 0.0
    %4063 = vmatpush1.msra.mxu0 0.0
    %4064 = vmatprep.subr.mxu0 0.0
    %4065 = vmatpush1.msra.mxu0 0.0
    %4066 = vmatprep.subr.mxu0 0.0
    %4067 = vmatpush1.msra.mxu0 0.0
    %4068 = vmatprep.subr.mxu0 0.0
    %4069 = vmatpush1.msra.mxu0 0.0
    %4070 = vmatprep.subr.mxu0 0.0
    %4071 = vmatpush1.msra.mxu0 0.0
    %4072 = vmatprep.mubr.f32.mxu0 0.0
    %4073 = vmatmul.mubr.f32.gmra.mrb[0].mxu0 %v4006
    %v4074 = vpop.f32.mrb[0].mxu0
    %v4075 = vadd.f32 0.0, %v4074
    %v4076 = vpop.f32.mrb[0].mxu0
    %4077 = vdwg.mxu0
    %s4078 = scalar_lea.vmem %s23, 384
    %v4079 = vld [vmem:[%s4078] sm:$0xff]
    %v4080 = vld [vmem:[%s4078 + $0x8] sm:$0xff]
    %v4081 = vld [vmem:[%s4078 + $0x10] sm:$0xff]
    %v4082 = vld [vmem:[%s4078 + $0x18] sm:$0xff]
    %v4083 = vld [vmem:[%s4078 + $0x20] sm:$0xff]
    %v4084 = vld [vmem:[%s4078 + $0x28] sm:$0xff]
    %v4085 = vld [vmem:[%s4078 + $0x30] sm:$0xff]
    %v4086 = vld [vmem:[%s4078 + $0x38] sm:$0xff]
    %v4087 = vld [vmem:[%s4078 + $0x40] sm:$0xff]
    %v4088 = vld [vmem:[%s4078 + $0x48] sm:$0xff]
    %v4089 = vld [vmem:[%s4078 + $0x50] sm:$0xff]
    %v4090 = vld [vmem:[%s4078 + $0x58] sm:$0xff]
    %v4091 = vld [vmem:[%s4078 + $0x60] sm:$0xff]
    %v4092 = vld [vmem:[%s4078 + $0x68] sm:$0xff]
    %v4093 = vld [vmem:[%s4078 + $0x70] sm:$0xff]
    %v4094 = vld [vmem:[%s4078 + $0x78] sm:$0xff]
    %4095 = vmatprep.subr.mxu0 0.0
    %4096 = vmatpush1.msra.mxu0 %v4079
    %4097 = vmatprep.subr.mxu0 0.0
    %4098 = vmatpush1.msra.mxu0 %v4080
    %4099 = vmatprep.subr.mxu0 0.0
    %4100 = vmatpush1.msra.mxu0 %v4081
    %4101 = vmatprep.subr.mxu0 0.0
    %4102 = vmatpush1.msra.mxu0 %v4082
    %4103 = vmatprep.subr.mxu0 0.0
    %4104 = vmatpush1.msra.mxu0 %v4083
    %4105 = vmatprep.subr.mxu0 0.0
    %4106 = vmatpush1.msra.mxu0 %v4084
    %4107 = vmatprep.subr.mxu0 0.0
    %4108 = vmatpush1.msra.mxu0 %v4085
    %4109 = vmatprep.subr.mxu0 0.0
    %4110 = vmatpush1.msra.mxu0 %v4086
    %4111 = vmatprep.subr.mxu0 0.0
    %4112 = vmatpush1.msra.mxu0 %v4087
    %4113 = vmatprep.subr.mxu0 0.0
    %4114 = vmatpush1.msra.mxu0 %v4088
    %4115 = vmatprep.subr.mxu0 0.0
    %4116 = vmatpush1.msra.mxu0 %v4089
    %4117 = vmatprep.subr.mxu0 0.0
    %4118 = vmatpush1.msra.mxu0 %v4090
    %4119 = vmatprep.subr.mxu0 0.0
    %4120 = vmatpush1.msra.mxu0 %v4091
    %4121 = vmatprep.subr.mxu0 0.0
    %4122 = vmatpush1.msra.mxu0 %v4092
    %4123 = vmatprep.subr.mxu0 0.0
    %4124 = vmatpush1.msra.mxu0 %v4093
    %4125 = vmatprep.subr.mxu0 0.0
    %4126 = vmatpush1.msra.mxu0 %v4094
    %4127 = vmatprep.subr.mxu0 0.0
    %4128 = vmatpush1.msra.mxu0 0.0
    %4129 = vmatprep.subr.mxu0 0.0
    %4130 = vmatpush1.msra.mxu0 0.0
    %4131 = vmatprep.subr.mxu0 0.0
    %4132 = vmatpush1.msra.mxu0 0.0
    %4133 = vmatprep.subr.mxu0 0.0
    %4134 = vmatpush1.msra.mxu0 0.0
    %4135 = vmatprep.subr.mxu0 0.0
    %4136 = vmatpush1.msra.mxu0 0.0
    %4137 = vmatprep.subr.mxu0 0.0
    %4138 = vmatpush1.msra.mxu0 0.0
    %4139 = vmatprep.subr.mxu0 0.0
    %4140 = vmatpush1.msra.mxu0 0.0
    %4141 = vmatprep.subr.mxu0 0.0
    %4142 = vmatpush1.msra.mxu0 0.0
    %4143 = vmatprep.subr.mxu0 0.0
    %4144 = vmatpush1.msra.mxu0 0.0
    %4145 = vmatprep.subr.mxu0 0.0
    %4146 = vmatpush1.msra.mxu0 0.0
    %4147 = vmatprep.subr.mxu0 0.0
    %4148 = vmatpush1.msra.mxu0 0.0
    %4149 = vmatprep.subr.mxu0 0.0
    %4150 = vmatpush1.msra.mxu0 0.0
    %4151 = vmatprep.subr.mxu0 0.0
    %4152 = vmatpush1.msra.mxu0 0.0
    %4153 = vmatprep.subr.mxu0 0.0
    %4154 = vmatpush1.msra.mxu0 0.0
    %4155 = vmatprep.subr.mxu0 0.0
    %4156 = vmatpush1.msra.mxu0 0.0
    %4157 = vmatprep.subr.mxu0 0.0
    %4158 = vmatpush1.msra.mxu0 0.0
    %4159 = vmatprep.mubr.f32.mxu0 0.0
    %4160 = vmatmul.mubr.f32.gmra.mrb[0].mxu0 %v4075
    %v4161 = vpop.f32.mrb[0].mxu0
    %v4162 = vadd.f32 0.0, %v4161
    %v4163 = vpop.f32.mrb[0].mxu0
    %4164 = vdwg.mxu0
    %v4165 = vadd.f32 %v4002, %v4162
    %v4166 = vld [vmem:[%s24] sm:$0x1]
    %v4168 = vlaneseq
    %v4169 = vshrl.u32 %v4168, 7
    %v4170 = vsub.s32 0, %v4169
    %v4171 = vrot.slane %v4166, %v4170
    %v4173 = vadd.f32 %v4165, %v4171
    %v4174 = vld [vmem:[%s25] sm:$0xff]
    %v4175 = vld [vmem:[%s25 + $0x8] sm:$0xff]
    %v4176 = vld [vmem:[%s25 + $0x10] sm:$0xff]
    %v4177 = vld [vmem:[%s25 + $0x18] sm:$0xff]
    %v4178 = vld [vmem:[%s26] sm:$0x1]
    %v4180 = vlaneseq
    %v4181 = vshrl.u32 %v4180, 7
    %v4182 = vsub.s32 0, %v4181
    %v4183 = vrot.slane %v4178, %v4182
    %v4186 = vsel %vm366, %v4173, 0
    %4188 = vmatprep.subr.mxu0 0.0
    %4189 = vmatpush1.msra.mxu0 %v4174
    %4190 = vmatprep.subr.mxu0 0.0
    %4191 = vmatpush1.msra.mxu0 %v4175
    %4192 = vmatprep.subr.mxu0 0.0
    %4193 = vmatpush1.msra.mxu0 %v4176
    %4194 = vmatprep.subr.mxu0 0.0
    %4195 = vmatpush1.msra.mxu0 %v4177
    %4196 = vmatprep.subr.mxu0 0.0
    %4197 = vmatpush1.msra.mxu0 0.0
    %4198 = vmatprep.subr.mxu0 0.0
    %4199 = vmatpush1.msra.mxu0 0.0
    %4200 = vmatprep.subr.mxu0 0.0
    %4201 = vmatpush1.msra.mxu0 0.0
    %4202 = vmatprep.subr.mxu0 0.0
    %4203 = vmatpush1.msra.mxu0 0.0
    %4204 = vmatprep.subr.mxu0 0.0
    %4205 = vmatpush1.msra.mxu0 0.0
    %4206 = vmatprep.subr.mxu0 0.0
    %4207 = vmatpush1.msra.mxu0 0.0
    %4208 = vmatprep.subr.mxu0 0.0
    %4209 = vmatpush1.msra.mxu0 0.0
    %4210 = vmatprep.subr.mxu0 0.0
    %4211 = vmatpush1.msra.mxu0 0.0
    %4212 = vmatprep.subr.mxu0 0.0
    %4213 = vmatpush1.msra.mxu0 0.0
    %4214 = vmatprep.subr.mxu0 0.0
    %4215 = vmatpush1.msra.mxu0 0.0
    %4216 = vmatprep.subr.mxu0 0.0
    %4217 = vmatpush1.msra.mxu0 0.0
    %4218 = vmatprep.subr.mxu0 0.0
    %4219 = vmatpush1.msra.mxu0 0.0
    %4220 = vmatprep.subr.mxu0 0.0
    %4221 = vmatpush1.msra.mxu0 0.0
    %4222 = vmatprep.subr.mxu0 0.0
    %4223 = vmatpush1.msra.mxu0 0.0
    %4224 = vmatprep.subr.mxu0 0.0
    %4225 = vmatpush1.msra.mxu0 0.0
    %4226 = vmatprep.subr.mxu0 0.0
    %4227 = vmatpush1.msra.mxu0 0.0
    %4228 = vmatprep.subr.mxu0 0.0
    %4229 = vmatpush1.msra.mxu0 0.0
    %4230 = vmatprep.subr.mxu0 0.0
    %4231 = vmatpush1.msra.mxu0 0.0
    %4232 = vmatprep.subr.mxu0 0.0
    %4233 = vmatpush1.msra.mxu0 0.0
    %4234 = vmatprep.subr.mxu0 0.0
    %4235 = vmatpush1.msra.mxu0 0.0
    %4236 = vmatprep.subr.mxu0 0.0
    %4237 = vmatpush1.msra.mxu0 0.0
    %4238 = vmatprep.subr.mxu0 0.0
    %4239 = vmatpush1.msra.mxu0 0.0
    %4240 = vmatprep.subr.mxu0 0.0
    %4241 = vmatpush1.msra.mxu0 0.0
    %4242 = vmatprep.subr.mxu0 0.0
    %4243 = vmatpush1.msra.mxu0 0.0
    %4244 = vmatprep.subr.mxu0 0.0
    %4245 = vmatpush1.msra.mxu0 0.0
    %4246 = vmatprep.subr.mxu0 0.0
    %4247 = vmatpush1.msra.mxu0 0.0
    %4248 = vmatprep.subr.mxu0 0.0
    %4249 = vmatpush1.msra.mxu0 0.0
    %4250 = vmatprep.subr.mxu0 0.0
    %4251 = vmatpush1.msra.mxu0 0.0
    %4252 = vmatprep.mubr.f32.mxu0 0.0
    %4253 = vmatmul.mubr.f32.gmra.mrb[0].mxu0 %v4186
    %v4254 = vpop.f32.mrb[0].mxu0
    %v4255 = vadd.f32 %v4183, %v4254
    %v4256 = vpop.f32.mrb[0].mxu0
    %4257 = vdwg.mxu0
    %vm4258 = vcmask 41984
    %v4259 = vsel %vm4258, %v4255, -inf
    %4260 = vmax.xlane.f32.xlu0 %v4259
    %v4261 = vpop.xlane.xlu0 %4260
    %v4262 = vsub.f32 %v4255, %v4261
    %v4263 = vmul.f32 %v4262, 1.442695
    %v4264 = vpow.pop %v4263
    %v4265 = vsel %vm4258, %v4264, 0.0
    %4266 = vadd.xlane.f32.xlu0 %v4265
    %v4267 = vpop.xlane.xlu0 %4266
    %v4268 = vlog2.pop %v4267
    %v4269 = vmul.f32 %v4268, 0.6931472
    %v4270 = vadd.f32 %v4269, %v4261
    %v4271 = vsub.f32 %v4255, %v4270
    %4272 = vst.msk [vmem:[#allocation35] sm:$0x3] %vm4258, %v4271
    %vm4273 = vcmask 254976
    %4274 = vst.msk [vmem:[#allocation36] sm:$0x3] %vm4273, %v4173
    // Predicated region
    $region194: #{fwd.1} parent=1 // pred_check
      _
    $region195: #{fwd.1} parent=1 // pred_check_branch
      %4276 = sbr.rel (0) target = $region197
    $region196: #{fwd.1} parent=1 // pred_region
      %s4278 = ssub.s32 32, 32
      %4279 = vsyncadd [#allocation4], %s4278
      %s4281 = sshll.u32 [#allocation35], 4
      %s4282 = int_to_ptr.vmem [resolvable:$true] %s4281
      %4284 = dma.vmem_to_hbm [thread:$0]  %s4282, 32, %s27, [#allocation4]
    $region197: #{fwd.1} parent=1 // pred_fallthru
      _
    // Predicated region
    $region198: #{fwd.1} parent=1 // pred_check
      _
    $region199: #{fwd.1} parent=1 // pred_check_branch
      %4286 = sbr.rel (0) target = $region201
    $region200: #{fwd.1} parent=1 // pred_region
      %s4288 = ssub.s32 32, 32
      %4289 = vsyncadd [#allocation37], %s4288
      %s4291 = sshll.u32 [#allocation36], 4
      %s4292 = int_to_ptr.vmem [resolvable:$true] %s4291
      %4294 = dma.vmem_to_hbm [thread:$0]  %s4292, 32, %s28, [#allocation37]
    $region201: #{fwd.1} parent=1 // pred_fallthru
      _
    // Predicated region
    $region202: #{fwd.1} parent=1 // pred_check
      _
    $region203: #{fwd.1} parent=1 // pred_check_branch
      %4296 = sbr.rel (0) target = $region205
    $region204: #{fwd.1} parent=1 // pred_region
      %4297 = dma.done [#allocation4], 32
    $region205: #{fwd.1} parent=1 // pred_fallthru
      _
    // Predicated region
    $region206: #{fwd.1} parent=1 // pred_check
      _
    $region207: #{fwd.1} parent=1 // pred_check_branch
      %4299 = sbr.rel (0) target = $region209
    $region208: #{fwd.1} parent=1 // pred_region
      %4300 = dma.done [#allocation37], 32
    $region209: #{fwd.1} parent=1 // pred_fallthru
      _
    %4301 = vsyncpa [#allocation3], 1
    %4302 = vsyncpa [#allocation6], 1
    %4303 = vsyncpa [#allocation9], 1
    %4304 = vsyncpa [#allocation12], 1
    %4305 = vsyncpa [#allocation15], 1
    %4306 = vsyncpa [#allocation18], 1
    %4307 = vsyncpa [#allocation21], 1
    %4308 = vsyncpa [#allocation24], 1
    %4309 = vsyncpa [#allocation27], 1
    %4310 = vsyncpa [#allocation30], 1
    %4311 = vsyncpa [#allocation33], 1
    %4312 = vsyncpa [#allocation4], 1
    %4313 = vsyncpa [#allocation37], 1

</llo_original>
